<compile_context>
chip_gen: v5e
topology: v5e:2x2
jax: 0.10.0
libtpu: 0.0.40
codegen_flags: <defaults>
</compile_context>

<pallas_src>
import functools

import jax
import jax.numpy as jnp
from jax.experimental import pallas as pl
from jax.experimental.pallas import tpu as pltpu

_LANE = 128
_SUBLANE = 8


def _round_up(n, m):
    return ((n + m - 1) // m) * m


def _pad_gate_cols(w, hid, hid_pad):
    """(K, 4*hid) -> (K, 4*hid_pad): zero-pad each of the 4 gate blocks."""
    k = w.shape[0]
    w4 = w.reshape(k, 4, hid)
    w4 = jnp.pad(w4, ((0, 0), (0, 0), (0, hid_pad - hid)))
    return w4.reshape(k, 4 * hid_pad)


def _sigmoid(x):
    # sigmoid(x) == 0.5*tanh(0.5*x) + 0.5 : single EUP push per gate.
    return 0.5 * jnp.tanh(0.5 * x) + 0.5


def _stacked_lstm_kernel(*refs, num_layers, hid_pad, unroll):
    """Full stacked-LSTM forward: all layers, whole sequence, one call."""
    L = num_layers
    x_ref = refs[0]
    wih_refs = refs[1:1 + L]            # per-layer (D_in_p, 4Hp) bf16
    whh_refs = refs[1 + L:1 + 2 * L]    # per-layer (Hp, 4Hp)     bf16
    b_refs = refs[1 + 2 * L:1 + 3 * L]  # per-layer (1, 4Hp)      f32
    h0_ref = refs[1 + 3 * L]
    c0_ref = refs[2 + 3 * L]
    out_ref = refs[3 + 3 * L]           # also serves as inter-layer buffer
    hN_ref = refs[4 + 3 * L]
    cN_ref = refs[5 + 3 * L]
    gx_scr = refs[6 + 3 * L]            # (S, B, 4Hp) f32 hoisted gates

    S, B, _ = x_ref.shape
    H = hid_pad

    for layer in range(num_layers):
        # ---- phase 0: hoisted input projection for the whole sequence ------
        # Layer l's input activations are dead after this, so layer l can
        # overwrite out_ref with its own h outputs during the recurrence.
        inp = x_ref[...] if layer == 0 else out_ref[...]
        d_in = inp.shape[-1]
        inp2 = inp.reshape(S * B, d_in).astype(jnp.bfloat16)
        gx = jnp.dot(inp2, wih_refs[layer][...],
                     preferred_element_type=jnp.float32)
        gx = gx + b_refs[layer][...]            # bias folded in once, in f32
        gx_scr[...] = gx.reshape(S, B, 4 * H)

        # ---- phase 1: serial recurrence over time ---------------------------
        def step(t, carry, layer=layer):
            h, c = carry                        # f32 (B, Hp)
            gates = gx_scr[t] + jnp.dot(
                h.astype(jnp.bfloat16), whh_refs[layer][...],
                preferred_element_type=jnp.float32)
            i_g = _sigmoid(gates[:, 0 * H:1 * H])
            f_g = _sigmoid(gates[:, 1 * H:2 * H])
            g_g = jnp.tanh(gates[:, 2 * H:3 * H])
            o_g = _sigmoid(gates[:, 3 * H:4 * H])
            c = f_g * c + i_g * g_g
            h = o_g * jnp.tanh(c)
            out_ref[t] = h.astype(out_ref.dtype)
            return h, c

        h_fin, c_fin = jax.lax.fori_loop(
            0, S, step,
            (h0_ref[layer].astype(jnp.float32),
             c0_ref[layer].astype(jnp.float32)),
            unroll=unroll)
        hN_ref[layer] = h_fin.astype(hN_ref.dtype)
        cN_ref[layer] = c_fin.astype(cN_ref.dtype)


def rnn_wrapper_forward(inp, hidden, params):
    """RNNWrapper.forward (ffw=True, LSTM). inp: (S,B,D) or (B,D).

    params: list of (w_ih (D_in,4H), w_hh (H,4H), b (1,4H)) per layer,
            already transposed from PyTorch layout, with b = b_ih + b_hh.
    """
    reshape = False
    if inp.ndim == 2:
        reshape = True
        inp = inp[None]                              # unsqueeze(0)

    h0, c0 = hidden                                  # (L, B, H) each
    L, B, H = h0.shape
    S, _, D = inp.shape
    Hp = _round_up(H, _LANE)
    Dp = _round_up(D, _LANE)
    Bp = _round_up(B, _SUBLANE)

    # ---- zero-pad parameters (zero padding keeps the recurrence exact) ------
    # Weights are cast to bf16 (MXU operands); biases stay f32 (added post-dot).
    wih_list, whh_list, b_list = [], [], []
    for l in range(L):
        w_ih, w_hh, b = params[l]
        d_in = D if l == 0 else H
        d_in_p = Dp if l == 0 else Hp
        wih_list.append(jnp.pad(_pad_gate_cols(w_ih, H, Hp),
                                ((0, d_in_p - d_in), (0, 0)))
                        .astype(jnp.bfloat16))
        whh_list.append(jnp.pad(_pad_gate_cols(w_hh, H, Hp),
                                ((0, Hp - H), (0, 0)))
                        .astype(jnp.bfloat16))
        b_list.append(_pad_gate_cols(b, H, Hp).astype(jnp.float32))

    x_p = jnp.pad(inp, ((0, 0), (0, Bp - B), (0, Dp - D)))
    h0_p = jnp.pad(h0, ((0, 0), (0, Bp - B), (0, Hp - H)))
    c0_p = jnp.pad(c0, ((0, 0), (0, Bp - B), (0, Hp - H)))

    unroll = int(min(max(S, 1), 8))
    kernel = functools.partial(_stacked_lstm_kernel,
                               num_layers=L, hid_pad=Hp, unroll=unroll)

    # ---- explicit VMEM limit sized from the real footprint ------------------
    in_tensors = [x_p, h0_p, c0_p] + wih_list + whh_list + b_list
    in_bytes = sum(int(t.size) * t.dtype.itemsize for t in in_tensors)
    out_bytes = (S + 2 * L) * Bp * Hp * 4
    scr_bytes = S * Bp * 4 * Hp * 4
    vmem_limit = int(min(max(2 * (in_bytes + out_bytes) + scr_bytes
                             + (4 << 20), 16 << 20), 64 << 20))

    out_p, hN_p, cN_p = pl.pallas_call(
        kernel,
        out_shape=(
            jax.ShapeDtypeStruct((S, Bp, Hp), inp.dtype),
            jax.ShapeDtypeStruct((L, Bp, Hp), inp.dtype),
            jax.ShapeDtypeStruct((L, Bp, Hp), inp.dtype),
        ),
        scratch_shapes=[
            pltpu.VMEM((S, Bp, 4 * Hp), jnp.float32),  # hoisted x@W_ih + b
        ],
        compiler_params=pltpu.CompilerParams(vmem_limit_bytes=vmem_limit),
    )(x_p, *wih_list, *whh_list, *b_list, h0_p, c0_p)

    out = out_p[:, :B, :H]
    h_n = hN_p[:, :B, :H]
    c_n = cN_p[:, :B, :H]
    if reshape:
        out = out[0]                                 # squeeze(0)
    return out, (h_n, c_n)


def _reference_lstm(inp, hidden, params, matmul_dtype=jnp.float32):
    """Pure-JAX reference (lax.scan). matmul_dtype lets us match the kernel's
    bf16-operand / f32-accumulate MXU precision for a tight comparison."""
    h0, c0 = hidden
    num_layers = h0.shape[0]
    layer_in = inp
    h_fin, c_fin = [], []
    for layer in range(num_layers):
        w_ih, w_hh, b = params[layer]
        H = w_hh.shape[0]
        w_ih_m = w_ih.astype(matmul_dtype)
        w_hh_m = w_hh.astype(matmul_dtype)

        def step(carry, x_t, w_ih_m=w_ih_m, w_hh_m=w_hh_m, b=b, H=H):
            h, c = carry
            gates = (jnp.dot(x_t.astype(matmul_dtype), w_ih_m,
                             preferred_element_type=jnp.float32)
                     + jnp.dot(h.astype(matmul_dtype), w_hh_m,
                               preferred_element_type=jnp.float32)
                     + b)
            i = jax.nn.sigmoid(gates[:, 0 * H:1 * H])
            f = jax.nn.sigmoid(gates[:, 1 * H:2 * H])
            g = jnp.tanh(gates[:, 2 * H:3 * H])
            o = jax.nn.sigmoid(gates[:, 3 * H:4 * H])
            c = f * c + i * g
            h = o * jnp.tanh(c)
            return (h, c), h

        (hT, cT), outs = jax.lax.scan(step, (h0[layer], c0[layer]), layer_in)
        h_fin.append(hT)
        c_fin.append(cT)
        layer_in = outs
    return layer_in, (jnp.stack(h_fin), jnp.stack(c_fin))


if __name__ == "__main__":
    num_layers = 2
    seq_len = 8
    batch = 8
    in_dim = 32
    hid_dim = 32

    key = jax.random.PRNGKey(0)
    keys = jax.random.split(key, 4 * num_layers + 3)

    # Deterministic parameter init, PyTorch-style U(-1/sqrt(H), 1/sqrt(H)).
    k_bound = 1.0 / jnp.sqrt(jnp.float32(hid_dim))
    params = []
    for layer in range(num_layers):
        d_in = in_dim if layer == 0 else hid_dim
        kw1, kw2, kb1, kb2 = keys[4 * layer:4 * layer + 4]
        w_ih = jax.random.uniform(kw1, (d_in, 4 * hid_dim), jnp.float32,
                                  -k_bound, k_bound)
        w_hh = jax.random.uniform(kw2, (hid_dim, 4 * hid_dim), jnp.float32,
                                  -k_bound, k_bound)
        b_ih = jax.random.uniform(kb1, (1, 4 * hid_dim), jnp.float32,
                                  -k_bound, k_bound)
        b_hh = jax.random.uniform(kb2, (1, 4 * hid_dim), jnp.float32,
                                  -k_bound, k_bound)
        params.append((w_ih, w_hh, b_ih + b_hh))

    x = jax.random.normal(keys[-3], (seq_len, batch, in_dim), jnp.float32)
    h0 = jax.random.normal(keys[-2], (num_layers, batch, hid_dim), jnp.float32)
    c0 = jax.random.normal(keys[-1], (num_layers, batch, hid_dim), jnp.float32)

    out, (h_n, c_n) = rnn_wrapper_forward(x, (h0, c0), params)
    jax.block_until_ready((out, h_n, c_n))

    # Verify against a pure-JAX reference using the same bf16 matmul operands
    # (f32 accumulation, f32 gate math) as the kernel.
    ref_out, (ref_h, ref_c) = _reference_lstm(x, (h0, c0), params,
                                              matmul_dtype=jnp.bfloat16)
    assert jnp.allclose(out, ref_out, atol=2e-3, rtol=2e-3)
    assert jnp.allclose(h_n, ref_h, atol=2e-3, rtol=2e-3)
    assert jnp.allclose(c_n, ref_c, atol=2e-3, rtol=2e-3)

    # 2-D input branch (unsqueeze/squeeze of the seq axis).
    out2d, _ = rnn_wrapper_forward(x[0], (h0, c0), params)
    jax.block_until_ready(out2d)
    assert out2d.shape == (batch, hid_dim)
    assert jnp.allclose(out2d, ref_out[0], atol=2e-3, rtol=2e-3)

    print("KERNEL_OK")
</pallas_src>

<mosaic_0001>
module attributes {stable_mosaic.version = 11 : i64} {
  func.func @_stacked_lstm_kernel(%arg0: memref<8x8x128xf32, #tpu.memory_space<vmem>>, %arg1: memref<128x512xbf16, #tpu.memory_space<vmem>>, %arg2: memref<128x512xbf16, #tpu.memory_space<vmem>>, %arg3: memref<128x512xbf16, #tpu.memory_space<vmem>>, %arg4: memref<128x512xbf16, #tpu.memory_space<vmem>>, %arg5: memref<1x512xf32, #tpu.memory_space<vmem>>, %arg6: memref<1x512xf32, #tpu.memory_space<vmem>>, %arg7: memref<2x8x128xf32, #tpu.memory_space<vmem>>, %arg8: memref<2x8x128xf32, #tpu.memory_space<vmem>>, %arg9: memref<8x8x128xf32, #tpu.memory_space<vmem>>, %arg10: memref<2x8x128xf32, #tpu.memory_space<vmem>>, %arg11: memref<2x8x128xf32, #tpu.memory_space<vmem>>, %arg12: memref<8x8x512xf32, #tpu.memory_space<vmem>>) attributes {dimension_semantics = [], scalar_prefetch = 0 : i64, scratch_operands = 1 : i64, tpu.core_type = #tpu.core_type<tc>} {
    %c0 = arith.constant 0 : index
    %c0_0 = arith.constant 0 : index
    %c0_1 = arith.constant 0 : index
    %0 = vector.load %arg0[%c0, %c0_0, %c0_1] : memref<8x8x128xf32, #tpu.memory_space<vmem>>, vector<8x8x128xf32>
    %1 = vector.shape_cast %0 : vector<8x8x128xf32> to vector<64x128xf32>
    %2 = arith.truncf %1 : vector<64x128xf32> to vector<64x128xbf16>
    %c0_2 = arith.constant 0 : index
    %c0_3 = arith.constant 0 : index
    %3 = vector.load %arg1[%c0_2, %c0_3] : memref<128x512xbf16, #tpu.memory_space<vmem>>, vector<128x512xbf16>
    %cst = arith.constant dense<0.000000e+00> : vector<64x512xf32>
    %4 = tpu.matmul %2, %3, %cst {dimension_numbers = #tpu.dot_dimension_numbers<[1], [0], [0], [1], [0, 0, 1, 1], [], []>} : vector<64x128xbf16>, vector<128x512xbf16>, vector<64x512xf32> -> vector<64x512xf32>
    %c0_4 = arith.constant 0 : index
    %c0_5 = arith.constant 0 : index
    %5 = vector.load %arg5[%c0_4, %c0_5] : memref<1x512xf32, #tpu.memory_space<vmem>>, vector<1x512xf32>
    %6 = vector.broadcast %5 : vector<1x512xf32> to vector<64x512xf32>
    %7 = arith.addf %4, %6 : vector<64x512xf32>
    %8 = vector.shape_cast %7 : vector<64x512xf32> to vector<8x8x512xf32>
    %c0_6 = arith.constant 0 : index
    %c0_7 = arith.constant 0 : index
    %c0_8 = arith.constant 0 : index
    %9 = vector.load %arg12[%c0_6, %c0_7, %c0_8] : memref<8x8x512xf32, #tpu.memory_space<vmem>>, vector<8x8x512xf32>
    tpu.vector_store %arg12[%c0_6, %c0_7, %c0_8], %8 {strides = array<i32>} : memref<8x8x512xf32, #tpu.memory_space<vmem>>, vector<8x8x512xf32>,
    %c0_9 = arith.constant 0 : index
    %c0_10 = arith.constant 0 : index
    %c0_11 = arith.constant 0 : index
    %10 = vector.load %arg7[%c0_9, %c0_10, %c0_11] : memref<2x8x128xf32, #tpu.memory_space<vmem>>, vector<1x8x128xf32>
    %11 = vector.shape_cast %10 : vector<1x8x128xf32> to vector<8x128xf32>
    %c0_12 = arith.constant 0 : index
    %c0_13 = arith.constant 0 : index
    %c0_14 = arith.constant 0 : index
    %12 = vector.load %arg8[%c0_12, %c0_13, %c0_14] : memref<2x8x128xf32, #tpu.memory_space<vmem>>, vector<1x8x128xf32>
    %13 = vector.shape_cast %12 : vector<1x8x128xf32> to vector<8x128xf32>
    %c0_i32 = arith.constant 0 : i32
    %14 = arith.index_cast %c0_i32 : i32 to index
    %c0_15 = arith.constant 0 : index
    %c0_16 = arith.constant 0 : index
    %15 = vector.load %arg12[%14, %c0_15, %c0_16] : memref<8x8x512xf32, #tpu.memory_space<vmem>>, vector<1x8x512xf32>
    %16 = vector.shape_cast %15 : vector<1x8x512xf32> to vector<8x512xf32>
    %17 = arith.truncf %11 : vector<8x128xf32> to vector<8x128xbf16>
    %c0_17 = arith.constant 0 : index
    %c0_18 = arith.constant 0 : index
    %18 = vector.load %arg3[%c0_17, %c0_18] : memref<128x512xbf16, #tpu.memory_space<vmem>>, vector<128x512xbf16>
    %cst_19 = arith.constant dense<0.000000e+00> : vector<8x512xf32>
    %19 = tpu.matmul %17, %18, %cst_19 {dimension_numbers = #tpu.dot_dimension_numbers<[1], [0], [0], [1], [0, 0, 1, 1], [], []>} : vector<8x128xbf16>, vector<128x512xbf16>, vector<8x512xf32> -> vector<8x512xf32>
    %20 = arith.addf %16, %19 : vector<8x512xf32>
    %21 = vector.extract_strided_slice %20 {offsets = [0, 0], sizes = [8, 128], strides = [1, 1]} : vector<8x512xf32> to vector<8x128xf32>
    %cst_20 = arith.constant 5.000000e-01 : f32
    %22 = vector.broadcast %cst_20 : f32 to vector<8x128xf32>
    %23 = arith.mulf %22, %21 : vector<8x128xf32>
    %24 = math.tanh %23 : vector<8x128xf32>
    %cst_21 = arith.constant 5.000000e-01 : f32
    %25 = vector.broadcast %cst_21 : f32 to vector<8x128xf32>
    %26 = arith.mulf %25, %24 : vector<8x128xf32>
    %cst_22 = arith.constant 5.000000e-01 : f32
    %27 = vector.broadcast %cst_22 : f32 to vector<8x128xf32>
    %28 = arith.addf %26, %27 : vector<8x128xf32>
    %29 = vector.extract_strided_slice %20 {offsets = [0, 128], sizes = [8, 128], strides = [1, 1]} : vector<8x512xf32> to vector<8x128xf32>
    %cst_23 = arith.constant 5.000000e-01 : f32
    %30 = vector.broadcast %cst_23 : f32 to vector<8x128xf32>
    %31 = arith.mulf %30, %29 : vector<8x128xf32>
    %32 = math.tanh %31 : vector<8x128xf32>
    %cst_24 = arith.constant 5.000000e-01 : f32
    %33 = vector.broadcast %cst_24 : f32 to vector<8x128xf32>
    %34 = arith.mulf %33, %32 : vector<8x128xf32>
    %cst_25 = arith.constant 5.000000e-01 : f32
    %35 = vector.broadcast %cst_25 : f32 to vector<8x128xf32>
    %36 = arith.addf %34, %35 : vector<8x128xf32>
    %37 = vector.extract_strided_slice %20 {offsets = [0, 256], sizes = [8, 128], strides = [1, 1]} : vector<8x512xf32> to vector<8x128xf32>
    %38 = math.tanh %37 : vector<8x128xf32>
    %39 = vector.extract_strided_slice %20 {offsets = [0, 384], sizes = [8, 128], strides = [1, 1]} : vector<8x512xf32> to vector<8x128xf32>
    %cst_26 = arith.constant 5.000000e-01 : f32
    %40 = vector.broadcast %cst_26 : f32 to vector<8x128xf32>
    %41 = arith.mulf %40, %39 : vector<8x128xf32>
    %42 = math.tanh %41 : vector<8x128xf32>
    %cst_27 = arith.constant 5.000000e-01 : f32
    %43 = vector.broadcast %cst_27 : f32 to vector<8x128xf32>
    %44 = arith.mulf %43, %42 : vector<8x128xf32>
    %cst_28 = arith.constant 5.000000e-01 : f32
    %45 = vector.broadcast %cst_28 : f32 to vector<8x128xf32>
    %46 = arith.addf %44, %45 : vector<8x128xf32>
    %47 = arith.mulf %36, %13 : vector<8x128xf32>
    %48 = arith.mulf %28, %38 : vector<8x128xf32>
    %49 = arith.addf %47, %48 : vector<8x128xf32>
    %50 = math.tanh %49 : vector<8x128xf32>
    %51 = arith.mulf %46, %50 : vector<8x128xf32>
    %52 = arith.index_cast %c0_i32 : i32 to index
    %c0_29 = arith.constant 0 : index
    %c0_30 = arith.constant 0 : index
    %53 = vector.load %arg9[%52, %c0_29, %c0_30] : memref<8x8x128xf32, #tpu.memory_space<vmem>>, vector<1x8x128xf32>
    %54 = vector.shape_cast %53 : vector<1x8x128xf32> to vector<8x128xf32>
    %55 = vector.shape_cast %51 : vector<8x128xf32> to vector<1x8x128xf32>
    tpu.vector_store %arg9[%52, %c0_29, %c0_30], %55 {strides = array<i32>} : memref<8x8x128xf32, #tpu.memory_space<vmem>>, vector<1x8x128xf32>,
    %c1_i32 = arith.constant 1 : i32
    %56 = arith.index_cast %c1_i32 : i32 to index
    %c0_31 = arith.constant 0 : index
    %c0_32 = arith.constant 0 : index
    %57 = vector.load %arg12[%56, %c0_31, %c0_32] : memref<8x8x512xf32, #tpu.memory_space<vmem>>, vector<1x8x512xf32>
    %58 = vector.shape_cast %57 : vector<1x8x512xf32> to vector<8x512xf32>
    %59 = arith.truncf %51 : vector<8x128xf32> to vector<8x128xbf16>
    %c0_33 = arith.constant 0 : index
    %c0_34 = arith.constant 0 : index
    %60 = vector.load %arg3[%c0_33, %c0_34] : memref<128x512xbf16, #tpu.memory_space<vmem>>, vector<128x512xbf16>
    %cst_35 = arith.constant dense<0.000000e+00> : vector<8x512xf32>
    %61 = tpu.matmul %59, %60, %cst_35 {dimension_numbers = #tpu.dot_dimension_numbers<[1], [0], [0], [1], [0, 0, 1, 1], [], []>} : vector<8x128xbf16>, vector<128x512xbf16>, vector<8x512xf32> -> vector<8x512xf32>
    %62 = arith.addf %58, %61 : vector<8x512xf32>
    %63 = vector.extract_strided_slice %62 {offsets = [0, 0], sizes = [8, 128], strides = [1, 1]} : vector<8x512xf32> to vector<8x128xf32>
    %cst_36 = arith.constant 5.000000e-01 : f32
    %64 = vector.broadcast %cst_36 : f32 to vector<8x128xf32>
    %65 = arith.mulf %64, %63 : vector<8x128xf32>
    %66 = math.tanh %65 : vector<8x128xf32>
    %cst_37 = arith.constant 5.000000e-01 : f32
    %67 = vector.broadcast %cst_37 : f32 to vector<8x128xf32>
    %68 = arith.mulf %67, %66 : vector<8x128xf32>
    %cst_38 = arith.constant 5.000000e-01 : f32
    %69 = vector.broadcast %cst_38 : f32 to vector<8x128xf32>
    %70 = arith.addf %68, %69 : vector<8x128xf32>
    %71 = vector.extract_strided_slice %62 {offsets = [0, 128], sizes = [8, 128], strides = [1, 1]} : vector<8x512xf32> to vector<8x128xf32>
    %cst_39 = arith.constant 5.000000e-01 : f32
    %72 = vector.broadcast %cst_39 : f32 to vector<8x128xf32>
    %73 = arith.mulf %72, %71 : vector<8x128xf32>
    %74 = math.tanh %73 : vector<8x128xf32>
    %cst_40 = arith.constant 5.000000e-01 : f32
    %75 = vector.broadcast %cst_40 : f32 to vector<8x128xf32>
    %76 = arith.mulf %75, %74 : vector<8x128xf32>
    %cst_41 = arith.constant 5.000000e-01 : f32
    %77 = vector.broadcast %cst_41 : f32 to vector<8x128xf32>
    %78 = arith.addf %76, %77 : vector<8x128xf32>
    %79 = vector.extract_strided_slice %62 {offsets = [0, 256], sizes = [8, 128], strides = [1, 1]} : vector<8x512xf32> to vector<8x128xf32>
    %80 = math.tanh %79 : vector<8x128xf32>
    %81 = vector.extract_strided_slice %62 {offsets = [0, 384], sizes = [8, 128], strides = [1, 1]} : vector<8x512xf32> to vector<8x128xf32>
    %cst_42 = arith.constant 5.000000e-01 : f32
    %82 = vector.broadcast %cst_42 : f32 to vector<8x128xf32>
    %83 = arith.mulf %82, %81 : vector<8x128xf32>
    %84 = math.tanh %83 : vector<8x128xf32>
    %cst_43 = arith.constant 5.000000e-01 : f32
    %85 = vector.broadcast %cst_43 : f32 to vector<8x128xf32>
    %86 = arith.mulf %85, %84 : vector<8x128xf32>
    %cst_44 = arith.constant 5.000000e-01 : f32
    %87 = vector.broadcast %cst_44 : f32 to vector<8x128xf32>
    %88 = arith.addf %86, %87 : vector<8x128xf32>
    %89 = arith.mulf %78, %49 : vector<8x128xf32>
    %90 = arith.mulf %70, %80 : vector<8x128xf32>
    %91 = arith.addf %89, %90 : vector<8x128xf32>
    %92 = math.tanh %91 : vector<8x128xf32>
    %93 = arith.mulf %88, %92 : vector<8x128xf32>
    %94 = arith.index_cast %c1_i32 : i32 to index
    %c0_45 = arith.constant 0 : index
    %c0_46 = arith.constant 0 : index
    %95 = vector.load %arg9[%94, %c0_45, %c0_46] : memref<8x8x128xf32, #tpu.memory_space<vmem>>, vector<1x8x128xf32>
    %96 = vector.shape_cast %95 : vector<1x8x128xf32> to vector<8x128xf32>
    %97 = vector.shape_cast %93 : vector<8x128xf32> to vector<1x8x128xf32>
    tpu.vector_store %arg9[%94, %c0_45, %c0_46], %97 {strides = array<i32>} : memref<8x8x128xf32, #tpu.memory_space<vmem>>, vector<1x8x128xf32>,
    %c2_i32 = arith.constant 2 : i32
    %98 = arith.index_cast %c2_i32 : i32 to index
    %c0_47 = arith.constant 0 : index
    %c0_48 = arith.constant 0 : index
    %99 = vector.load %arg12[%98, %c0_47, %c0_48] : memref<8x8x512xf32, #tpu.memory_space<vmem>>, vector<1x8x512xf32>
    %100 = vector.shape_cast %99 : vector<1x8x512xf32> to vector<8x512xf32>
    %101 = arith.truncf %93 : vector<8x128xf32> to vector<8x128xbf16>
    %c0_49 = arith.constant 0 : index
    %c0_50 = arith.constant 0 : index
    %102 = vector.load %arg3[%c0_49, %c0_50] : memref<128x512xbf16, #tpu.memory_space<vmem>>, vector<128x512xbf16>
    %cst_51 = arith.constant dense<0.000000e+00> : vector<8x512xf32>
    %103 = tpu.matmul %101, %102, %cst_51 {dimension_numbers = #tpu.dot_dimension_numbers<[1], [0], [0], [1], [0, 0, 1, 1], [], []>} : vector<8x128xbf16>, vector<128x512xbf16>, vector<8x512xf32> -> vector<8x512xf32>
    %104 = arith.addf %100, %103 : vector<8x512xf32>
    %105 = vector.extract_strided_slice %104 {offsets = [0, 0], sizes = [8, 128], strides = [1, 1]} : vector<8x512xf32> to vector<8x128xf32>
    %cst_52 = arith.constant 5.000000e-01 : f32
    %106 = vector.broadcast %cst_52 : f32 to vector<8x128xf32>
    %107 = arith.mulf %106, %105 : vector<8x128xf32>
    %108 = math.tanh %107 : vector<8x128xf32>
    %cst_53 = arith.constant 5.000000e-01 : f32
    %109 = vector.broadcast %cst_53 : f32 to vector<8x128xf32>
    %110 = arith.mulf %109, %108 : vector<8x128xf32>
    %cst_54 = arith.constant 5.000000e-01 : f32
    %111 = vector.broadcast %cst_54 : f32 to vector<8x128xf32>
    %112 = arith.addf %110, %111 : vector<8x128xf32>
    %113 = vector.extract_strided_slice %104 {offsets = [0, 128], sizes = [8, 128], strides = [1, 1]} : vector<8x512xf32> to vector<8x128xf32>
    %cst_55 = arith.constant 5.000000e-01 : f32
    %114 = vector.broadcast %cst_55 : f32 to vector<8x128xf32>
    %115 = arith.mulf %114, %113 : vector<8x128xf32>
    %116 = math.tanh %115 : vector<8x128xf32>
    %cst_56 = arith.constant 5.000000e-01 : f32
    %117 = vector.broadcast %cst_56 : f32 to vector<8x128xf32>
    %118 = arith.mulf %117, %116 : vector<8x128xf32>
    %cst_57 = arith.constant 5.000000e-01 : f32
    %119 = vector.broadcast %cst_57 : f32 to vector<8x128xf32>
    %120 = arith.addf %118, %119 : vector<8x128xf32>
    %121 = vector.extract_strided_slice %104 {offsets = [0, 256], sizes = [8, 128], strides = [1, 1]} : vector<8x512xf32> to vector<8x128xf32>
    %122 = math.tanh %121 : vector<8x128xf32>
    %123 = vector.extract_strided_slice %104 {offsets = [0, 384], sizes = [8, 128], strides = [1, 1]} : vector<8x512xf32> to vector<8x128xf32>
    %cst_58 = arith.constant 5.000000e-01 : f32
    %124 = vector.broadcast %cst_58 : f32 to vector<8x128xf32>
    %125 = arith.mulf %124, %123 : vector<8x128xf32>
    %126 = math.tanh %125 : vector<8x128xf32>
    %cst_59 = arith.constant 5.000000e-01 : f32
    %127 = vector.broadcast %cst_59 : f32 to vector<8x128xf32>
    %128 = arith.mulf %127, %126 : vector<8x128xf32>
    %cst_60 = arith.constant 5.000000e-01 : f32
    %129 = vector.broadcast %cst_60 : f32 to vector<8x128xf32>
    %130 = arith.addf %128, %129 : vector<8x128xf32>
    %131 = arith.mulf %120, %91 : vector<8x128xf32>
    %132 = arith.mulf %112, %122 : vector<8x128xf32>
    %133 = arith.addf %131, %132 : vector<8x128xf32>
    %134 = math.tanh %133 : vector<8x128xf32>
    %135 = arith.mulf %130, %134 : vector<8x128xf32>
    %136 = arith.index_cast %c2_i32 : i32 to index
    %c0_61 = arith.constant 0 : index
    %c0_62 = arith.constant 0 : index
    %137 = vector.load %arg9[%136, %c0_61, %c0_62] : memref<8x8x128xf32, #tpu.memory_space<vmem>>, vector<1x8x128xf32>
    %138 = vector.shape_cast %137 : vector<1x8x128xf32> to vector<8x128xf32>
    %139 = vector.shape_cast %135 : vector<8x128xf32> to vector<1x8x128xf32>
    tpu.vector_store %arg9[%136, %c0_61, %c0_62], %139 {strides = array<i32>} : memref<8x8x128xf32, #tpu.memory_space<vmem>>, vector<1x8x128xf32>,
    %c3_i32 = arith.constant 3 : i32
    %140 = arith.index_cast %c3_i32 : i32 to index
    %c0_63 = arith.constant 0 : index
    %c0_64 = arith.constant 0 : index
    %141 = vector.load %arg12[%140, %c0_63, %c0_64] : memref<8x8x512xf32, #tpu.memory_space<vmem>>, vector<1x8x512xf32>
    %142 = vector.shape_cast %141 : vector<1x8x512xf32> to vector<8x512xf32>
    %143 = arith.truncf %135 : vector<8x128xf32> to vector<8x128xbf16>
    %c0_65 = arith.constant 0 : index
    %c0_66 = arith.constant 0 : index
    %144 = vector.load %arg3[%c0_65, %c0_66] : memref<128x512xbf16, #tpu.memory_space<vmem>>, vector<128x512xbf16>
    %cst_67 = arith.constant dense<0.000000e+00> : vector<8x512xf32>
    %145 = tpu.matmul %143, %144, %cst_67 {dimension_numbers = #tpu.dot_dimension_numbers<[1], [0], [0], [1], [0, 0, 1, 1], [], []>} : vector<8x128xbf16>, vector<128x512xbf16>, vector<8x512xf32> -> vector<8x512xf32>
    %146 = arith.addf %142, %145 : vector<8x512xf32>
    %147 = vector.extract_strided_slice %146 {offsets = [0, 0], sizes = [8, 128], strides = [1, 1]} : vector<8x512xf32> to vector<8x128xf32>
    %cst_68 = arith.constant 5.000000e-01 : f32
    %148 = vector.broadcast %cst_68 : f32 to vector<8x128xf32>
    %149 = arith.mulf %148, %147 : vector<8x128xf32>
    %150 = math.tanh %149 : vector<8x128xf32>
    %cst_69 = arith.constant 5.000000e-01 : f32
    %151 = vector.broadcast %cst_69 : f32 to vector<8x128xf32>
    %152 = arith.mulf %151, %150 : vector<8x128xf32>
    %cst_70 = arith.constant 5.000000e-01 : f32
    %153 = vector.broadcast %cst_70 : f32 to vector<8x128xf32>
    %154 = arith.addf %152, %153 : vector<8x128xf32>
    %155 = vector.extract_strided_slice %146 {offsets = [0, 128], sizes = [8, 128], strides = [1, 1]} : vector<8x512xf32> to vector<8x128xf32>
    %cst_71 = arith.constant 5.000000e-01 : f32
    %156 = vector.broadcast %cst_71 : f32 to vector<8x128xf32>
    %157 = arith.mulf %156, %155 : vector<8x128xf32>
    %158 = math.tanh %157 : vector<8x128xf32>
    %cst_72 = arith.constant 5.000000e-01 : f32
    %159 = vector.broadcast %cst_72 : f32 to vector<8x128xf32>
    %160 = arith.mulf %159, %158 : vector<8x128xf32>
    %cst_73 = arith.constant 5.000000e-01 : f32
    %161 = vector.broadcast %cst_73 : f32 to vector<8x128xf32>
    %162 = arith.addf %160, %161 : vector<8x128xf32>
    %163 = vector.extract_strided_slice %146 {offsets = [0, 256], sizes = [8, 128], strides = [1, 1]} : vector<8x512xf32> to vector<8x128xf32>
    %164 = math.tanh %163 : vector<8x128xf32>
    %165 = vector.extract_strided_slice %146 {offsets = [0, 384], sizes = [8, 128], strides = [1, 1]} : vector<8x512xf32> to vector<8x128xf32>
    %cst_74 = arith.constant 5.000000e-01 : f32
    %166 = vector.broadcast %cst_74 : f32 to vector<8x128xf32>
    %167 = arith.mulf %166, %165 : vector<8x128xf32>
    %168 = math.tanh %167 : vector<8x128xf32>
    %cst_75 = arith.constant 5.000000e-01 : f32
    %169 = vector.broadcast %cst_75 : f32 to vector<8x128xf32>
    %170 = arith.mulf %169, %168 : vector<8x128xf32>
    %cst_76 = arith.constant 5.000000e-01 : f32
    %171 = vector.broadcast %cst_76 : f32 to vector<8x128xf32>
    %172 = arith.addf %170, %171 : vector<8x128xf32>
    %173 = arith.mulf %162, %133 : vector<8x128xf32>
    %174 = arith.mulf %154, %164 : vector<8x128xf32>
    %175 = arith.addf %173, %174 : vector<8x128xf32>
    %176 = math.tanh %175 : vector<8x128xf32>
    %177 = arith.mulf %172, %176 : vector<8x128xf32>
    %178 = arith.index_cast %c3_i32 : i32 to index
    %c0_77 = arith.constant 0 : index
    %c0_78 = arith.constant 0 : index
    %179 = vector.load %arg9[%178, %c0_77, %c0_78] : memref<8x8x128xf32, #tpu.memory_space<vmem>>, vector<1x8x128xf32>
    %180 = vector.shape_cast %179 : vector<1x8x128xf32> to vector<8x128xf32>
    %181 = vector.shape_cast %177 : vector<8x128xf32> to vector<1x8x128xf32>
    tpu.vector_store %arg9[%178, %c0_77, %c0_78], %181 {strides = array<i32>} : memref<8x8x128xf32, #tpu.memory_space<vmem>>, vector<1x8x128xf32>,
    %c4_i32 = arith.constant 4 : i32
    %182 = arith.index_cast %c4_i32 : i32 to index
    %c0_79 = arith.constant 0 : index
    %c0_80 = arith.constant 0 : index
    %183 = vector.load %arg12[%182, %c0_79, %c0_80] : memref<8x8x512xf32, #tpu.memory_space<vmem>>, vector<1x8x512xf32>
    %184 = vector.shape_cast %183 : vector<1x8x512xf32> to vector<8x512xf32>
    %185 = arith.truncf %177 : vector<8x128xf32> to vector<8x128xbf16>
    %c0_81 = arith.constant 0 : index
    %c0_82 = arith.constant 0 : index
    %186 = vector.load %arg3[%c0_81, %c0_82] : memref<128x512xbf16, #tpu.memory_space<vmem>>, vector<128x512xbf16>
    %cst_83 = arith.constant dense<0.000000e+00> : vector<8x512xf32>
    %187 = tpu.matmul %185, %186, %cst_83 {dimension_numbers = #tpu.dot_dimension_numbers<[1], [0], [0], [1], [0, 0, 1, 1], [], []>} : vector<8x128xbf16>, vector<128x512xbf16>, vector<8x512xf32> -> vector<8x512xf32>
    %188 = arith.addf %184, %187 : vector<8x512xf32>
    %189 = vector.extract_strided_slice %188 {offsets = [0, 0], sizes = [8, 128], strides = [1, 1]} : vector<8x512xf32> to vector<8x128xf32>
    %cst_84 = arith.constant 5.000000e-01 : f32
    %190 = vector.broadcast %cst_84 : f32 to vector<8x128xf32>
    %191 = arith.mulf %190, %189 : vector<8x128xf32>
    %192 = math.tanh %191 : vector<8x128xf32>
    %cst_85 = arith.constant 5.000000e-01 : f32
    %193 = vector.broadcast %cst_85 : f32 to vector<8x128xf32>
    %194 = arith.mulf %193, %192 : vector<8x128xf32>
    %cst_86 = arith.constant 5.000000e-01 : f32
    %195 = vector.broadcast %cst_86 : f32 to vector<8x128xf32>
    %196 = arith.addf %194, %195 : vector<8x128xf32>
    %197 = vector.extract_strided_slice %188 {offsets = [0, 128], sizes = [8, 128], strides = [1, 1]} : vector<8x512xf32> to vector<8x128xf32>
    %cst_87 = arith.constant 5.000000e-01 : f32
    %198 = vector.broadcast %cst_87 : f32 to vector<8x128xf32>
    %199 = arith.mulf %198, %197 : vector<8x128xf32>
    %200 = math.tanh %199 : vector<8x128xf32>
    %cst_88 = arith.constant 5.000000e-01 : f32
    %201 = vector.broadcast %cst_88 : f32 to vector<8x128xf32>
    %202 = arith.mulf %201, %200 : vector<8x128xf32>
    %cst_89 = arith.constant 5.000000e-01 : f32
    %203 = vector.broadcast %cst_89 : f32 to vector<8x128xf32>
    %204 = arith.addf %202, %203 : vector<8x128xf32>
    %205 = vector.extract_strided_slice %188 {offsets = [0, 256], sizes = [8, 128], strides = [1, 1]} : vector<8x512xf32> to vector<8x128xf32>
    %206 = math.tanh %205 : vector<8x128xf32>
    %207 = vector.extract_strided_slice %188 {offsets = [0, 384], sizes = [8, 128], strides = [1, 1]} : vector<8x512xf32> to vector<8x128xf32>
    %cst_90 = arith.constant 5.000000e-01 : f32
    %208 = vector.broadcast %cst_90 : f32 to vector<8x128xf32>
    %209 = arith.mulf %208, %207 : vector<8x128xf32>
    %210 = math.tanh %209 : vector<8x128xf32>
    %cst_91 = arith.constant 5.000000e-01 : f32
    %211 = vector.broadcast %cst_91 : f32 to vector<8x128xf32>
    %212 = arith.mulf %211, %210 : vector<8x128xf32>
    %cst_92 = arith.constant 5.000000e-01 : f32
    %213 = vector.broadcast %cst_92 : f32 to vector<8x128xf32>
    %214 = arith.addf %212, %213 : vector<8x128xf32>
    %215 = arith.mulf %204, %175 : vector<8x128xf32>
    %216 = arith.mulf %196, %206 : vector<8x128xf32>
    %217 = arith.addf %215, %216 : vector<8x128xf32>
    %218 = math.tanh %217 : vector<8x128xf32>
    %219 = arith.mulf %214, %218 : vector<8x128xf32>
    %220 = arith.index_cast %c4_i32 : i32 to index
    %c0_93 = arith.constant 0 : index
    %c0_94 = arith.constant 0 : index
    %221 = vector.load %arg9[%220, %c0_93, %c0_94] : memref<8x8x128xf32, #tpu.memory_space<vmem>>, vector<1x8x128xf32>
    %222 = vector.shape_cast %221 : vector<1x8x128xf32> to vector<8x128xf32>
    %223 = vector.shape_cast %219 : vector<8x128xf32> to vector<1x8x128xf32>
    tpu.vector_store %arg9[%220, %c0_93, %c0_94], %223 {strides = array<i32>} : memref<8x8x128xf32, #tpu.memory_space<vmem>>, vector<1x8x128xf32>,
    %c5_i32 = arith.constant 5 : i32
    %224 = arith.index_cast %c5_i32 : i32 to index
    %c0_95 = arith.constant 0 : index
    %c0_96 = arith.constant 0 : index
    %225 = vector.load %arg12[%224, %c0_95, %c0_96] : memref<8x8x512xf32, #tpu.memory_space<vmem>>, vector<1x8x512xf32>
    %226 = vector.shape_cast %225 : vector<1x8x512xf32> to vector<8x512xf32>
    %227 = arith.truncf %219 : vector<8x128xf32> to vector<8x128xbf16>
    %c0_97 = arith.constant 0 : index
    %c0_98 = arith.constant 0 : index
    %228 = vector.load %arg3[%c0_97, %c0_98] : memref<128x512xbf16, #tpu.memory_space<vmem>>, vector<128x512xbf16>
    %cst_99 = arith.constant dense<0.000000e+00> : vector<8x512xf32>
    %229 = tpu.matmul %227, %228, %cst_99 {dimension_numbers = #tpu.dot_dimension_numbers<[1], [0], [0], [1], [0, 0, 1, 1], [], []>} : vector<8x128xbf16>, vector<128x512xbf16>, vector<8x512xf32> -> vector<8x512xf32>
    %230 = arith.addf %226, %229 : vector<8x512xf32>
    %231 = vector.extract_strided_slice %230 {offsets = [0, 0], sizes = [8, 128], strides = [1, 1]} : vector<8x512xf32> to vector<8x128xf32>
    %cst_100 = arith.constant 5.000000e-01 : f32
    %232 = vector.broadcast %cst_100 : f32 to vector<8x128xf32>
    %233 = arith.mulf %232, %231 : vector<8x128xf32>
    %234 = math.tanh %233 : vector<8x128xf32>
    %cst_101 = arith.constant 5.000000e-01 : f32
    %235 = vector.broadcast %cst_101 : f32 to vector<8x128xf32>
    %236 = arith.mulf %235, %234 : vector<8x128xf32>
    %cst_102 = arith.constant 5.000000e-01 : f32
    %237 = vector.broadcast %cst_102 : f32 to vector<8x128xf32>
    %238 = arith.addf %236, %237 : vector<8x128xf32>
    %239 = vector.extract_strided_slice %230 {offsets = [0, 128], sizes = [8, 128], strides = [1, 1]} : vector<8x512xf32> to vector<8x128xf32>
    %cst_103 = arith.constant 5.000000e-01 : f32
    %240 = vector.broadcast %cst_103 : f32 to vector<8x128xf32>
    %241 = arith.mulf %240, %239 : vector<8x128xf32>
    %242 = math.tanh %241 : vector<8x128xf32>
    %cst_104 = arith.constant 5.000000e-01 : f32
    %243 = vector.broadcast %cst_104 : f32 to vector<8x128xf32>
    %244 = arith.mulf %243, %242 : vector<8x128xf32>
    %cst_105 = arith.constant 5.000000e-01 : f32
    %245 = vector.broadcast %cst_105 : f32 to vector<8x128xf32>
    %246 = arith.addf %244, %245 : vector<8x128xf32>
    %247 = vector.extract_strided_slice %230 {offsets = [0, 256], sizes = [8, 128], strides = [1, 1]} : vector<8x512xf32> to vector<8x128xf32>
    %248 = math.tanh %247 : vector<8x128xf32>
    %249 = vector.extract_strided_slice %230 {offsets = [0, 384], sizes = [8, 128], strides = [1, 1]} : vector<8x512xf32> to vector<8x128xf32>
    %cst_106 = arith.constant 5.000000e-01 : f32
    %250 = vector.broadcast %cst_106 : f32 to vector<8x128xf32>
    %251 = arith.mulf %250, %249 : vector<8x128xf32>
    %252 = math.tanh %251 : vector<8x128xf32>
    %cst_107 = arith.constant 5.000000e-01 : f32
    %253 = vector.broadcast %cst_107 : f32 to vector<8x128xf32>
    %254 = arith.mulf %253, %252 : vector<8x128xf32>
    %cst_108 = arith.constant 5.000000e-01 : f32
    %255 = vector.broadcast %cst_108 : f32 to vector<8x128xf32>
    %256 = arith.addf %254, %255 : vector<8x128xf32>
    %257 = arith.mulf %246, %217 : vector<8x128xf32>
    %258 = arith.mulf %238, %248 : vector<8x128xf32>
    %259 = arith.addf %257, %258 : vector<8x128xf32>
    %260 = math.tanh %259 : vector<8x128xf32>
    %261 = arith.mulf %256, %260 : vector<8x128xf32>
    %262 = arith.index_cast %c5_i32 : i32 to index
    %c0_109 = arith.constant 0 : index
    %c0_110 = arith.constant 0 : index
    %263 = vector.load %arg9[%262, %c0_109, %c0_110] : memref<8x8x128xf32, #tpu.memory_space<vmem>>, vector<1x8x128xf32>
    %264 = vector.shape_cast %263 : vector<1x8x128xf32> to vector<8x128xf32>
    %265 = vector.shape_cast %261 : vector<8x128xf32> to vector<1x8x128xf32>
    tpu.vector_store %arg9[%262, %c0_109, %c0_110], %265 {strides = array<i32>} : memref<8x8x128xf32, #tpu.memory_space<vmem>>, vector<1x8x128xf32>,
    %c6_i32 = arith.constant 6 : i32
    %266 = arith.index_cast %c6_i32 : i32 to index
    %c0_111 = arith.constant 0 : index
    %c0_112 = arith.constant 0 : index
    %267 = vector.load %arg12[%266, %c0_111, %c0_112] : memref<8x8x512xf32, #tpu.memory_space<vmem>>, vector<1x8x512xf32>
    %268 = vector.shape_cast %267 : vector<1x8x512xf32> to vector<8x512xf32>
    %269 = arith.truncf %261 : vector<8x128xf32> to vector<8x128xbf16>
    %c0_113 = arith.constant 0 : index
    %c0_114 = arith.constant 0 : index
    %270 = vector.load %arg3[%c0_113, %c0_114] : memref<128x512xbf16, #tpu.memory_space<vmem>>, vector<128x512xbf16>
    %cst_115 = arith.constant dense<0.000000e+00> : vector<8x512xf32>
    %271 = tpu.matmul %269, %270, %cst_115 {dimension_numbers = #tpu.dot_dimension_numbers<[1], [0], [0], [1], [0, 0, 1, 1], [], []>} : vector<8x128xbf16>, vector<128x512xbf16>, vector<8x512xf32> -> vector<8x512xf32>
    %272 = arith.addf %268, %271 : vector<8x512xf32>
    %273 = vector.extract_strided_slice %272 {offsets = [0, 0], sizes = [8, 128], strides = [1, 1]} : vector<8x512xf32> to vector<8x128xf32>
    %cst_116 = arith.constant 5.000000e-01 : f32
    %274 = vector.broadcast %cst_116 : f32 to vector<8x128xf32>
    %275 = arith.mulf %274, %273 : vector<8x128xf32>
    %276 = math.tanh %275 : vector<8x128xf32>
    %cst_117 = arith.constant 5.000000e-01 : f32
    %277 = vector.broadcast %cst_117 : f32 to vector<8x128xf32>
    %278 = arith.mulf %277, %276 : vector<8x128xf32>
    %cst_118 = arith.constant 5.000000e-01 : f32
    %279 = vector.broadcast %cst_118 : f32 to vector<8x128xf32>
    %280 = arith.addf %278, %279 : vector<8x128xf32>
    %281 = vector.extract_strided_slice %272 {offsets = [0, 128], sizes = [8, 128], strides = [1, 1]} : vector<8x512xf32> to vector<8x128xf32>
    %cst_119 = arith.constant 5.000000e-01 : f32
    %282 = vector.broadcast %cst_119 : f32 to vector<8x128xf32>
    %283 = arith.mulf %282, %281 : vector<8x128xf32>
    %284 = math.tanh %283 : vector<8x128xf32>
    %cst_120 = arith.constant 5.000000e-01 : f32
    %285 = vector.broadcast %cst_120 : f32 to vector<8x128xf32>
    %286 = arith.mulf %285, %284 : vector<8x128xf32>
    %cst_121 = arith.constant 5.000000e-01 : f32
    %287 = vector.broadcast %cst_121 : f32 to vector<8x128xf32>
    %288 = arith.addf %286, %287 : vector<8x128xf32>
    %289 = vector.extract_strided_slice %272 {offsets = [0, 256], sizes = [8, 128], strides = [1, 1]} : vector<8x512xf32> to vector<8x128xf32>
    %290 = math.tanh %289 : vector<8x128xf32>
    %291 = vector.extract_strided_slice %272 {offsets = [0, 384], sizes = [8, 128], strides = [1, 1]} : vector<8x512xf32> to vector<8x128xf32>
    %cst_122 = arith.constant 5.000000e-01 : f32
    %292 = vector.broadcast %cst_122 : f32 to vector<8x128xf32>
    %293 = arith.mulf %292, %291 : vector<8x128xf32>
    %294 = math.tanh %293 : vector<8x128xf32>
    %cst_123 = arith.constant 5.000000e-01 : f32
    %295 = vector.broadcast %cst_123 : f32 to vector<8x128xf32>
    %296 = arith.mulf %295, %294 : vector<8x128xf32>
    %cst_124 = arith.constant 5.000000e-01 : f32
    %297 = vector.broadcast %cst_124 : f32 to vector<8x128xf32>
    %298 = arith.addf %296, %297 : vector<8x128xf32>
    %299 = arith.mulf %288, %259 : vector<8x128xf32>
    %300 = arith.mulf %280, %290 : vector<8x128xf32>
    %301 = arith.addf %299, %300 : vector<8x128xf32>
    %302 = math.tanh %301 : vector<8x128xf32>
    %303 = arith.mulf %298, %302 : vector<8x128xf32>
    %304 = arith.index_cast %c6_i32 : i32 to index
    %c0_125 = arith.constant 0 : index
    %c0_126 = arith.constant 0 : index
    %305 = vector.load %arg9[%304, %c0_125, %c0_126] : memref<8x8x128xf32, #tpu.memory_space<vmem>>, vector<1x8x128xf32>
    %306 = vector.shape_cast %305 : vector<1x8x128xf32> to vector<8x128xf32>
    %307 = vector.shape_cast %303 : vector<8x128xf32> to vector<1x8x128xf32>
    tpu.vector_store %arg9[%304, %c0_125, %c0_126], %307 {strides = array<i32>} : memref<8x8x128xf32, #tpu.memory_space<vmem>>, vector<1x8x128xf32>,
    %c7_i32 = arith.constant 7 : i32
    %308 = arith.index_cast %c7_i32 : i32 to index
    %c0_127 = arith.constant 0 : index
    %c0_128 = arith.constant 0 : index
    %309 = vector.load %arg12[%308, %c0_127, %c0_128] : memref<8x8x512xf32, #tpu.memory_space<vmem>>, vector<1x8x512xf32>
    %310 = vector.shape_cast %309 : vector<1x8x512xf32> to vector<8x512xf32>
    %311 = arith.truncf %303 : vector<8x128xf32> to vector<8x128xbf16>
    %c0_129 = arith.constant 0 : index
    %c0_130 = arith.constant 0 : index
    %312 = vector.load %arg3[%c0_129, %c0_130] : memref<128x512xbf16, #tpu.memory_space<vmem>>, vector<128x512xbf16>
    %cst_131 = arith.constant dense<0.000000e+00> : vector<8x512xf32>
    %313 = tpu.matmul %311, %312, %cst_131 {dimension_numbers = #tpu.dot_dimension_numbers<[1], [0], [0], [1], [0, 0, 1, 1], [], []>} : vector<8x128xbf16>, vector<128x512xbf16>, vector<8x512xf32> -> vector<8x512xf32>
    %314 = arith.addf %310, %313 : vector<8x512xf32>
    %315 = vector.extract_strided_slice %314 {offsets = [0, 0], sizes = [8, 128], strides = [1, 1]} : vector<8x512xf32> to vector<8x128xf32>
    %cst_132 = arith.constant 5.000000e-01 : f32
    %316 = vector.broadcast %cst_132 : f32 to vector<8x128xf32>
    %317 = arith.mulf %316, %315 : vector<8x128xf32>
    %318 = math.tanh %317 : vector<8x128xf32>
    %cst_133 = arith.constant 5.000000e-01 : f32
    %319 = vector.broadcast %cst_133 : f32 to vector<8x128xf32>
    %320 = arith.mulf %319, %318 : vector<8x128xf32>
    %cst_134 = arith.constant 5.000000e-01 : f32
    %321 = vector.broadcast %cst_134 : f32 to vector<8x128xf32>
    %322 = arith.addf %320, %321 : vector<8x128xf32>
    %323 = vector.extract_strided_slice %314 {offsets = [0, 128], sizes = [8, 128], strides = [1, 1]} : vector<8x512xf32> to vector<8x128xf32>
    %cst_135 = arith.constant 5.000000e-01 : f32
    %324 = vector.broadcast %cst_135 : f32 to vector<8x128xf32>
    %325 = arith.mulf %324, %323 : vector<8x128xf32>
    %326 = math.tanh %325 : vector<8x128xf32>
    %cst_136 = arith.constant 5.000000e-01 : f32
    %327 = vector.broadcast %cst_136 : f32 to vector<8x128xf32>
    %328 = arith.mulf %327, %326 : vector<8x128xf32>
    %cst_137 = arith.constant 5.000000e-01 : f32
    %329 = vector.broadcast %cst_137 : f32 to vector<8x128xf32>
    %330 = arith.addf %328, %329 : vector<8x128xf32>
    %331 = vector.extract_strided_slice %314 {offsets = [0, 256], sizes = [8, 128], strides = [1, 1]} : vector<8x512xf32> to vector<8x128xf32>
    %332 = math.tanh %331 : vector<8x128xf32>
    %333 = vector.extract_strided_slice %314 {offsets = [0, 384], sizes = [8, 128], strides = [1, 1]} : vector<8x512xf32> to vector<8x128xf32>
    %cst_138 = arith.constant 5.000000e-01 : f32
    %334 = vector.broadcast %cst_138 : f32 to vector<8x128xf32>
    %335 = arith.mulf %334, %333 : vector<8x128xf32>
    %336 = math.tanh %335 : vector<8x128xf32>
    %cst_139 = arith.constant 5.000000e-01 : f32
    %337 = vector.broadcast %cst_139 : f32 to vector<8x128xf32>
    %338 = arith.mulf %337, %336 : vector<8x128xf32>
    %cst_140 = arith.constant 5.000000e-01 : f32
    %339 = vector.broadcast %cst_140 : f32 to vector<8x128xf32>
    %340 = arith.addf %338, %339 : vector<8x128xf32>
    %341 = arith.mulf %330, %301 : vector<8x128xf32>
    %342 = arith.mulf %322, %332 : vector<8x128xf32>
    %343 = arith.addf %341, %342 : vector<8x128xf32>
    %344 = math.tanh %343 : vector<8x128xf32>
    %345 = arith.mulf %340, %344 : vector<8x128xf32>
    %346 = arith.index_cast %c7_i32 : i32 to index
    %c0_141 = arith.constant 0 : index
    %c0_142 = arith.constant 0 : index
    %347 = vector.load %arg9[%346, %c0_141, %c0_142] : memref<8x8x128xf32, #tpu.memory_space<vmem>>, vector<1x8x128xf32>
    %348 = vector.shape_cast %347 : vector<1x8x128xf32> to vector<8x128xf32>
    %349 = vector.shape_cast %345 : vector<8x128xf32> to vector<1x8x128xf32>
    tpu.vector_store %arg9[%346, %c0_141, %c0_142], %349 {strides = array<i32>} : memref<8x8x128xf32, #tpu.memory_space<vmem>>, vector<1x8x128xf32>,
    %c8_i32 = arith.constant 8 : i32
    %c0_143 = arith.constant 0 : index
    %c0_144 = arith.constant 0 : index
    %c0_145 = arith.constant 0 : index
    %350 = vector.load %arg10[%c0_143, %c0_144, %c0_145] : memref<2x8x128xf32, #tpu.memory_space<vmem>>, vector<1x8x128xf32>
    %351 = vector.shape_cast %350 : vector<1x8x128xf32> to vector<8x128xf32>
    %352 = vector.shape_cast %345 : vector<8x128xf32> to vector<1x8x128xf32>
    tpu.vector_store %arg10[%c0_143, %c0_144, %c0_145], %352 {strides = array<i32>} : memref<2x8x128xf32, #tpu.memory_space<vmem>>, vector<1x8x128xf32>,
    %c0_146 = arith.constant 0 : index
    %c0_147 = arith.constant 0 : index
    %c0_148 = arith.constant 0 : index
    %353 = vector.load %arg11[%c0_146, %c0_147, %c0_148] : memref<2x8x128xf32, #tpu.memory_space<vmem>>, vector<1x8x128xf32>
    %354 = vector.shape_cast %353 : vector<1x8x128xf32> to vector<8x128xf32>
    %355 = vector.shape_cast %343 : vector<8x128xf32> to vector<1x8x128xf32>
    tpu.vector_store %arg11[%c0_146, %c0_147, %c0_148], %355 {strides = array<i32>} : memref<2x8x128xf32, #tpu.memory_space<vmem>>, vector<1x8x128xf32>,
    %c0_149 = arith.constant 0 : index
    %c0_150 = arith.constant 0 : index
    %c0_151 = arith.constant 0 : index
    %356 = vector.load %arg9[%c0_149, %c0_150, %c0_151] : memref<8x8x128xf32, #tpu.memory_space<vmem>>, vector<8x8x128xf32>
    %357 = vector.shape_cast %356 : vector<8x8x128xf32> to vector<64x128xf32>
    %358 = arith.truncf %357 : vector<64x128xf32> to vector<64x128xbf16>
    %c0_152 = arith.constant 0 : index
    %c0_153 = arith.constant 0 : index
    %359 = vector.load %arg2[%c0_152, %c0_153] : memref<128x512xbf16, #tpu.memory_space<vmem>>, vector<128x512xbf16>
    %cst_154 = arith.constant dense<0.000000e+00> : vector<64x512xf32>
    %360 = tpu.matmul %358, %359, %cst_154 {dimension_numbers = #tpu.dot_dimension_numbers<[1], [0], [0], [1], [0, 0, 1, 1], [], []>} : vector<64x128xbf16>, vector<128x512xbf16>, vector<64x512xf32> -> vector<64x512xf32>
    %c0_155 = arith.constant 0 : index
    %c0_156 = arith.constant 0 : index
    %361 = vector.load %arg6[%c0_155, %c0_156] : memref<1x512xf32, #tpu.memory_space<vmem>>, vector<1x512xf32>
    %362 = vector.broadcast %361 : vector<1x512xf32> to vector<64x512xf32>
    %363 = arith.addf %360, %362 : vector<64x512xf32>
    %364 = vector.shape_cast %363 : vector<64x512xf32> to vector<8x8x512xf32>
    %c0_157 = arith.constant 0 : index
    %c0_158 = arith.constant 0 : index
    %c0_159 = arith.constant 0 : index
    %365 = vector.load %arg12[%c0_157, %c0_158, %c0_159] : memref<8x8x512xf32, #tpu.memory_space<vmem>>, vector<8x8x512xf32>
    tpu.vector_store %arg12[%c0_157, %c0_158, %c0_159], %364 {strides = array<i32>} : memref<8x8x512xf32, #tpu.memory_space<vmem>>, vector<8x8x512xf32>,
    %c1 = arith.constant 1 : index
    %c0_160 = arith.constant 0 : index
    %c0_161 = arith.constant 0 : index
    %366 = vector.load %arg7[%c1, %c0_160, %c0_161] : memref<2x8x128xf32, #tpu.memory_space<vmem>>, vector<1x8x128xf32>
    %367 = vector.shape_cast %366 : vector<1x8x128xf32> to vector<8x128xf32>
    %c1_162 = arith.constant 1 : index
    %c0_163 = arith.constant 0 : index
    %c0_164 = arith.constant 0 : index
    %368 = vector.load %arg8[%c1_162, %c0_163, %c0_164] : memref<2x8x128xf32, #tpu.memory_space<vmem>>, vector<1x8x128xf32>
    %369 = vector.shape_cast %368 : vector<1x8x128xf32> to vector<8x128xf32>
    %c0_i32_165 = arith.constant 0 : i32
    %370 = arith.index_cast %c0_i32_165 : i32 to index
    %c0_166 = arith.constant 0 : index
    %c0_167 = arith.constant 0 : index
    %371 = vector.load %arg12[%370, %c0_166, %c0_167] : memref<8x8x512xf32, #tpu.memory_space<vmem>>, vector<1x8x512xf32>
    %372 = vector.shape_cast %371 : vector<1x8x512xf32> to vector<8x512xf32>
    %373 = arith.truncf %367 : vector<8x128xf32> to vector<8x128xbf16>
    %c0_168 = arith.constant 0 : index
    %c0_169 = arith.constant 0 : index
    %374 = vector.load %arg4[%c0_168, %c0_169] : memref<128x512xbf16, #tpu.memory_space<vmem>>, vector<128x512xbf16>
    %cst_170 = arith.constant dense<0.000000e+00> : vector<8x512xf32>
    %375 = tpu.matmul %373, %374, %cst_170 {dimension_numbers = #tpu.dot_dimension_numbers<[1], [0], [0], [1], [0, 0, 1, 1], [], []>} : vector<8x128xbf16>, vector<128x512xbf16>, vector<8x512xf32> -> vector<8x512xf32>
    %376 = arith.addf %372, %375 : vector<8x512xf32>
    %377 = vector.extract_strided_slice %376 {offsets = [0, 0], sizes = [8, 128], strides = [1, 1]} : vector<8x512xf32> to vector<8x128xf32>
    %cst_171 = arith.constant 5.000000e-01 : f32
    %378 = vector.broadcast %cst_171 : f32 to vector<8x128xf32>
    %379 = arith.mulf %378, %377 : vector<8x128xf32>
    %380 = math.tanh %379 : vector<8x128xf32>
    %cst_172 = arith.constant 5.000000e-01 : f32
    %381 = vector.broadcast %cst_172 : f32 to vector<8x128xf32>
    %382 = arith.mulf %381, %380 : vector<8x128xf32>
    %cst_173 = arith.constant 5.000000e-01 : f32
    %383 = vector.broadcast %cst_173 : f32 to vector<8x128xf32>
    %384 = arith.addf %382, %383 : vector<8x128xf32>
    %385 = vector.extract_strided_slice %376 {offsets = [0, 128], sizes = [8, 128], strides = [1, 1]} : vector<8x512xf32> to vector<8x128xf32>
    %cst_174 = arith.constant 5.000000e-01 : f32
    %386 = vector.broadcast %cst_174 : f32 to vector<8x128xf32>
    %387 = arith.mulf %386, %385 : vector<8x128xf32>
    %388 = math.tanh %387 : vector<8x128xf32>
    %cst_175 = arith.constant 5.000000e-01 : f32
    %389 = vector.broadcast %cst_175 : f32 to vector<8x128xf32>
    %390 = arith.mulf %389, %388 : vector<8x128xf32>
    %cst_176 = arith.constant 5.000000e-01 : f32
    %391 = vector.broadcast %cst_176 : f32 to vector<8x128xf32>
    %392 = arith.addf %390, %391 : vector<8x128xf32>
    %393 = vector.extract_strided_slice %376 {offsets = [0, 256], sizes = [8, 128], strides = [1, 1]} : vector<8x512xf32> to vector<8x128xf32>
    %394 = math.tanh %393 : vector<8x128xf32>
    %395 = vector.extract_strided_slice %376 {offsets = [0, 384], sizes = [8, 128], strides = [1, 1]} : vector<8x512xf32> to vector<8x128xf32>
    %cst_177 = arith.constant 5.000000e-01 : f32
    %396 = vector.broadcast %cst_177 : f32 to vector<8x128xf32>
    %397 = arith.mulf %396, %395 : vector<8x128xf32>
    %398 = math.tanh %397 : vector<8x128xf32>
    %cst_178 = arith.constant 5.000000e-01 : f32
    %399 = vector.broadcast %cst_178 : f32 to vector<8x128xf32>
    %400 = arith.mulf %399, %398 : vector<8x128xf32>
    %cst_179 = arith.constant 5.000000e-01 : f32
    %401 = vector.broadcast %cst_179 : f32 to vector<8x128xf32>
    %402 = arith.addf %400, %401 : vector<8x128xf32>
    %403 = arith.mulf %392, %369 : vector<8x128xf32>
    %404 = arith.mulf %384, %394 : vector<8x128xf32>
    %405 = arith.addf %403, %404 : vector<8x128xf32>
    %406 = math.tanh %405 : vector<8x128xf32>
    %407 = arith.mulf %402, %406 : vector<8x128xf32>
    %408 = arith.index_cast %c0_i32_165 : i32 to index
    %c0_180 = arith.constant 0 : index
    %c0_181 = arith.constant 0 : index
    %409 = vector.load %arg9[%408, %c0_180, %c0_181] : memref<8x8x128xf32, #tpu.memory_space<vmem>>, vector<1x8x128xf32>
    %410 = vector.shape_cast %409 : vector<1x8x128xf32> to vector<8x128xf32>
    %411 = vector.shape_cast %407 : vector<8x128xf32> to vector<1x8x128xf32>
    tpu.vector_store %arg9[%408, %c0_180, %c0_181], %411 {strides = array<i32>} : memref<8x8x128xf32, #tpu.memory_space<vmem>>, vector<1x8x128xf32>,
    %c1_i32_182 = arith.constant 1 : i32
    %412 = arith.index_cast %c1_i32_182 : i32 to index
    %c0_183 = arith.constant 0 : index
    %c0_184 = arith.constant 0 : index
    %413 = vector.load %arg12[%412, %c0_183, %c0_184] : memref<8x8x512xf32, #tpu.memory_space<vmem>>, vector<1x8x512xf32>
    %414 = vector.shape_cast %413 : vector<1x8x512xf32> to vector<8x512xf32>
    %415 = arith.truncf %407 : vector<8x128xf32> to vector<8x128xbf16>
    %c0_185 = arith.constant 0 : index
    %c0_186 = arith.constant 0 : index
    %416 = vector.load %arg4[%c0_185, %c0_186] : memref<128x512xbf16, #tpu.memory_space<vmem>>, vector<128x512xbf16>
    %cst_187 = arith.constant dense<0.000000e+00> : vector<8x512xf32>
    %417 = tpu.matmul %415, %416, %cst_187 {dimension_numbers = #tpu.dot_dimension_numbers<[1], [0], [0], [1], [0, 0, 1, 1], [], []>} : vector<8x128xbf16>, vector<128x512xbf16>, vector<8x512xf32> -> vector<8x512xf32>
    %418 = arith.addf %414, %417 : vector<8x512xf32>
    %419 = vector.extract_strided_slice %418 {offsets = [0, 0], sizes = [8, 128], strides = [1, 1]} : vector<8x512xf32> to vector<8x128xf32>
    %cst_188 = arith.constant 5.000000e-01 : f32
    %420 = vector.broadcast %cst_188 : f32 to vector<8x128xf32>
    %421 = arith.mulf %420, %419 : vector<8x128xf32>
    %422 = math.tanh %421 : vector<8x128xf32>
    %cst_189 = arith.constant 5.000000e-01 : f32
    %423 = vector.broadcast %cst_189 : f32 to vector<8x128xf32>
    %424 = arith.mulf %423, %422 : vector<8x128xf32>
    %cst_190 = arith.constant 5.000000e-01 : f32
    %425 = vector.broadcast %cst_190 : f32 to vector<8x128xf32>
    %426 = arith.addf %424, %425 : vector<8x128xf32>
    %427 = vector.extract_strided_slice %418 {offsets = [0, 128], sizes = [8, 128], strides = [1, 1]} : vector<8x512xf32> to vector<8x128xf32>
    %cst_191 = arith.constant 5.000000e-01 : f32
    %428 = vector.broadcast %cst_191 : f32 to vector<8x128xf32>
    %429 = arith.mulf %428, %427 : vector<8x128xf32>
    %430 = math.tanh %429 : vector<8x128xf32>
    %cst_192 = arith.constant 5.000000e-01 : f32
    %431 = vector.broadcast %cst_192 : f32 to vector<8x128xf32>
    %432 = arith.mulf %431, %430 : vector<8x128xf32>
    %cst_193 = arith.constant 5.000000e-01 : f32
    %433 = vector.broadcast %cst_193 : f32 to vector<8x128xf32>
    %434 = arith.addf %432, %433 : vector<8x128xf32>
    %435 = vector.extract_strided_slice %418 {offsets = [0, 256], sizes = [8, 128], strides = [1, 1]} : vector<8x512xf32> to vector<8x128xf32>
    %436 = math.tanh %435 : vector<8x128xf32>
    %437 = vector.extract_strided_slice %418 {offsets = [0, 384], sizes = [8, 128], strides = [1, 1]} : vector<8x512xf32> to vector<8x128xf32>
    %cst_194 = arith.constant 5.000000e-01 : f32
    %438 = vector.broadcast %cst_194 : f32 to vector<8x128xf32>
    %439 = arith.mulf %438, %437 : vector<8x128xf32>
    %440 = math.tanh %439 : vector<8x128xf32>
    %cst_195 = arith.constant 5.000000e-01 : f32
    %441 = vector.broadcast %cst_195 : f32 to vector<8x128xf32>
    %442 = arith.mulf %441, %440 : vector<8x128xf32>
    %cst_196 = arith.constant 5.000000e-01 : f32
    %443 = vector.broadcast %cst_196 : f32 to vector<8x128xf32>
    %444 = arith.addf %442, %443 : vector<8x128xf32>
    %445 = arith.mulf %434, %405 : vector<8x128xf32>
    %446 = arith.mulf %426, %436 : vector<8x128xf32>
    %447 = arith.addf %445, %446 : vector<8x128xf32>
    %448 = math.tanh %447 : vector<8x128xf32>
    %449 = arith.mulf %444, %448 : vector<8x128xf32>
    %450 = arith.index_cast %c1_i32_182 : i32 to index
    %c0_197 = arith.constant 0 : index
    %c0_198 = arith.constant 0 : index
    %451 = vector.load %arg9[%450, %c0_197, %c0_198] : memref<8x8x128xf32, #tpu.memory_space<vmem>>, vector<1x8x128xf32>
    %452 = vector.shape_cast %451 : vector<1x8x128xf32> to vector<8x128xf32>
    %453 = vector.shape_cast %449 : vector<8x128xf32> to vector<1x8x128xf32>
    tpu.vector_store %arg9[%450, %c0_197, %c0_198], %453 {strides = array<i32>} : memref<8x8x128xf32, #tpu.memory_space<vmem>>, vector<1x8x128xf32>,
    %c2_i32_199 = arith.constant 2 : i32
    %454 = arith.index_cast %c2_i32_199 : i32 to index
    %c0_200 = arith.constant 0 : index
    %c0_201 = arith.constant 0 : index
    %455 = vector.load %arg12[%454, %c0_200, %c0_201] : memref<8x8x512xf32, #tpu.memory_space<vmem>>, vector<1x8x512xf32>
    %456 = vector.shape_cast %455 : vector<1x8x512xf32> to vector<8x512xf32>
    %457 = arith.truncf %449 : vector<8x128xf32> to vector<8x128xbf16>
    %c0_202 = arith.constant 0 : index
    %c0_203 = arith.constant 0 : index
    %458 = vector.load %arg4[%c0_202, %c0_203] : memref<128x512xbf16, #tpu.memory_space<vmem>>, vector<128x512xbf16>
    %cst_204 = arith.constant dense<0.000000e+00> : vector<8x512xf32>
    %459 = tpu.matmul %457, %458, %cst_204 {dimension_numbers = #tpu.dot_dimension_numbers<[1], [0], [0], [1], [0, 0, 1, 1], [], []>} : vector<8x128xbf16>, vector<128x512xbf16>, vector<8x512xf32> -> vector<8x512xf32>
    %460 = arith.addf %456, %459 : vector<8x512xf32>
    %461 = vector.extract_strided_slice %460 {offsets = [0, 0], sizes = [8, 128], strides = [1, 1]} : vector<8x512xf32> to vector<8x128xf32>
    %cst_205 = arith.constant 5.000000e-01 : f32
    %462 = vector.broadcast %cst_205 : f32 to vector<8x128xf32>
    %463 = arith.mulf %462, %461 : vector<8x128xf32>
    %464 = math.tanh %463 : vector<8x128xf32>
    %cst_206 = arith.constant 5.000000e-01 : f32
    %465 = vector.broadcast %cst_206 : f32 to vector<8x128xf32>
    %466 = arith.mulf %465, %464 : vector<8x128xf32>
    %cst_207 = arith.constant 5.000000e-01 : f32
    %467 = vector.broadcast %cst_207 : f32 to vector<8x128xf32>
    %468 = arith.addf %466, %467 : vector<8x128xf32>
    %469 = vector.extract_strided_slice %460 {offsets = [0, 128], sizes = [8, 128], strides = [1, 1]} : vector<8x512xf32> to vector<8x128xf32>
    %cst_208 = arith.constant 5.000000e-01 : f32
    %470 = vector.broadcast %cst_208 : f32 to vector<8x128xf32>
    %471 = arith.mulf %470, %469 : vector<8x128xf32>
    %472 = math.tanh %471 : vector<8x128xf32>
    %cst_209 = arith.constant 5.000000e-01 : f32
    %473 = vector.broadcast %cst_209 : f32 to vector<8x128xf32>
    %474 = arith.mulf %473, %472 : vector<8x128xf32>
    %cst_210 = arith.constant 5.000000e-01 : f32
    %475 = vector.broadcast %cst_210 : f32 to vector<8x128xf32>
    %476 = arith.addf %474, %475 : vector<8x128xf32>
    %477 = vector.extract_strided_slice %460 {offsets = [0, 256], sizes = [8, 128], strides = [1, 1]} : vector<8x512xf32> to vector<8x128xf32>
    %478 = math.tanh %477 : vector<8x128xf32>
    %479 = vector.extract_strided_slice %460 {offsets = [0, 384], sizes = [8, 128], strides = [1, 1]} : vector<8x512xf32> to vector<8x128xf32>
    %cst_211 = arith.constant 5.000000e-01 : f32
    %480 = vector.broadcast %cst_211 : f32 to vector<8x128xf32>
    %481 = arith.mulf %480, %479 : vector<8x128xf32>
    %482 = math.tanh %481 : vector<8x128xf32>
    %cst_212 = arith.constant 5.000000e-01 : f32
    %483 = vector.broadcast %cst_212 : f32 to vector<8x128xf32>
    %484 = arith.mulf %483, %482 : vector<8x128xf32>
    %cst_213 = arith.constant 5.000000e-01 : f32
    %485 = vector.broadcast %cst_213 : f32 to vector<8x128xf32>
    %486 = arith.addf %484, %485 : vector<8x128xf32>
    %487 = arith.mulf %476, %447 : vector<8x128xf32>
    %488 = arith.mulf %468, %478 : vector<8x128xf32>
    %489 = arith.addf %487, %488 : vector<8x128xf32>
    %490 = math.tanh %489 : vector<8x128xf32>
    %491 = arith.mulf %486, %490 : vector<8x128xf32>
    %492 = arith.index_cast %c2_i32_199 : i32 to index
    %c0_214 = arith.constant 0 : index
    %c0_215 = arith.constant 0 : index
    %493 = vector.load %arg9[%492, %c0_214, %c0_215] : memref<8x8x128xf32, #tpu.memory_space<vmem>>, vector<1x8x128xf32>
    %494 = vector.shape_cast %493 : vector<1x8x128xf32> to vector<8x128xf32>
    %495 = vector.shape_cast %491 : vector<8x128xf32> to vector<1x8x128xf32>
    tpu.vector_store %arg9[%492, %c0_214, %c0_215], %495 {strides = array<i32>} : memref<8x8x128xf32, #tpu.memory_space<vmem>>, vector<1x8x128xf32>,
    %c3_i32_216 = arith.constant 3 : i32
    %496 = arith.index_cast %c3_i32_216 : i32 to index
    %c0_217 = arith.constant 0 : index
    %c0_218 = arith.constant 0 : index
    %497 = vector.load %arg12[%496, %c0_217, %c0_218] : memref<8x8x512xf32, #tpu.memory_space<vmem>>, vector<1x8x512xf32>
    %498 = vector.shape_cast %497 : vector<1x8x512xf32> to vector<8x512xf32>
    %499 = arith.truncf %491 : vector<8x128xf32> to vector<8x128xbf16>
    %c0_219 = arith.constant 0 : index
    %c0_220 = arith.constant 0 : index
    %500 = vector.load %arg4[%c0_219, %c0_220] : memref<128x512xbf16, #tpu.memory_space<vmem>>, vector<128x512xbf16>
    %cst_221 = arith.constant dense<0.000000e+00> : vector<8x512xf32>
    %501 = tpu.matmul %499, %500, %cst_221 {dimension_numbers = #tpu.dot_dimension_numbers<[1], [0], [0], [1], [0, 0, 1, 1], [], []>} : vector<8x128xbf16>, vector<128x512xbf16>, vector<8x512xf32> -> vector<8x512xf32>
    %502 = arith.addf %498, %501 : vector<8x512xf32>
    %503 = vector.extract_strided_slice %502 {offsets = [0, 0], sizes = [8, 128], strides = [1, 1]} : vector<8x512xf32> to vector<8x128xf32>
    %cst_222 = arith.constant 5.000000e-01 : f32
    %504 = vector.broadcast %cst_222 : f32 to vector<8x128xf32>
    %505 = arith.mulf %504, %503 : vector<8x128xf32>
    %506 = math.tanh %505 : vector<8x128xf32>
    %cst_223 = arith.constant 5.000000e-01 : f32
    %507 = vector.broadcast %cst_223 : f32 to vector<8x128xf32>
    %508 = arith.mulf %507, %506 : vector<8x128xf32>
    %cst_224 = arith.constant 5.000000e-01 : f32
    %509 = vector.broadcast %cst_224 : f32 to vector<8x128xf32>
    %510 = arith.addf %508, %509 : vector<8x128xf32>
    %511 = vector.extract_strided_slice %502 {offsets = [0, 128], sizes = [8, 128], strides = [1, 1]} : vector<8x512xf32> to vector<8x128xf32>
    %cst_225 = arith.constant 5.000000e-01 : f32
    %512 = vector.broadcast %cst_225 : f32 to vector<8x128xf32>
    %513 = arith.mulf %512, %511 : vector<8x128xf32>
    %514 = math.tanh %513 : vector<8x128xf32>
    %cst_226 = arith.constant 5.000000e-01 : f32
    %515 = vector.broadcast %cst_226 : f32 to vector<8x128xf32>
    %516 = arith.mulf %515, %514 : vector<8x128xf32>
    %cst_227 = arith.constant 5.000000e-01 : f32
    %517 = vector.broadcast %cst_227 : f32 to vector<8x128xf32>
    %518 = arith.addf %516, %517 : vector<8x128xf32>
    %519 = vector.extract_strided_slice %502 {offsets = [0, 256], sizes = [8, 128], strides = [1, 1]} : vector<8x512xf32> to vector<8x128xf32>
    %520 = math.tanh %519 : vector<8x128xf32>
    %521 = vector.extract_strided_slice %502 {offsets = [0, 384], sizes = [8, 128], strides = [1, 1]} : vector<8x512xf32> to vector<8x128xf32>
    %cst_228 = arith.constant 5.000000e-01 : f32
    %522 = vector.broadcast %cst_228 : f32 to vector<8x128xf32>
    %523 = arith.mulf %522, %521 : vector<8x128xf32>
    %524 = math.tanh %523 : vector<8x128xf32>
    %cst_229 = arith.constant 5.000000e-01 : f32
    %525 = vector.broadcast %cst_229 : f32 to vector<8x128xf32>
    %526 = arith.mulf %525, %524 : vector<8x128xf32>
    %cst_230 = arith.constant 5.000000e-01 : f32
    %527 = vector.broadcast %cst_230 : f32 to vector<8x128xf32>
    %528 = arith.addf %526, %527 : vector<8x128xf32>
    %529 = arith.mulf %518, %489 : vector<8x128xf32>
    %530 = arith.mulf %510, %520 : vector<8x128xf32>
    %531 = arith.addf %529, %530 : vector<8x128xf32>
    %532 = math.tanh %531 : vector<8x128xf32>
    %533 = arith.mulf %528, %532 : vector<8x128xf32>
    %534 = arith.index_cast %c3_i32_216 : i32 to index
    %c0_231 = arith.constant 0 : index
    %c0_232 = arith.constant 0 : index
    %535 = vector.load %arg9[%534, %c0_231, %c0_232] : memref<8x8x128xf32, #tpu.memory_space<vmem>>, vector<1x8x128xf32>
    %536 = vector.shape_cast %535 : vector<1x8x128xf32> to vector<8x128xf32>
    %537 = vector.shape_cast %533 : vector<8x128xf32> to vector<1x8x128xf32>
    tpu.vector_store %arg9[%534, %c0_231, %c0_232], %537 {strides = array<i32>} : memref<8x8x128xf32, #tpu.memory_space<vmem>>, vector<1x8x128xf32>,
    %c4_i32_233 = arith.constant 4 : i32
    %538 = arith.index_cast %c4_i32_233 : i32 to index
    %c0_234 = arith.constant 0 : index
    %c0_235 = arith.constant 0 : index
    %539 = vector.load %arg12[%538, %c0_234, %c0_235] : memref<8x8x512xf32, #tpu.memory_space<vmem>>, vector<1x8x512xf32>
    %540 = vector.shape_cast %539 : vector<1x8x512xf32> to vector<8x512xf32>
    %541 = arith.truncf %533 : vector<8x128xf32> to vector<8x128xbf16>
    %c0_236 = arith.constant 0 : index
    %c0_237 = arith.constant 0 : index
    %542 = vector.load %arg4[%c0_236, %c0_237] : memref<128x512xbf16, #tpu.memory_space<vmem>>, vector<128x512xbf16>
    %cst_238 = arith.constant dense<0.000000e+00> : vector<8x512xf32>
    %543 = tpu.matmul %541, %542, %cst_238 {dimension_numbers = #tpu.dot_dimension_numbers<[1], [0], [0], [1], [0, 0, 1, 1], [], []>} : vector<8x128xbf16>, vector<128x512xbf16>, vector<8x512xf32> -> vector<8x512xf32>
    %544 = arith.addf %540, %543 : vector<8x512xf32>
    %545 = vector.extract_strided_slice %544 {offsets = [0, 0], sizes = [8, 128], strides = [1, 1]} : vector<8x512xf32> to vector<8x128xf32>
    %cst_239 = arith.constant 5.000000e-01 : f32
    %546 = vector.broadcast %cst_239 : f32 to vector<8x128xf32>
    %547 = arith.mulf %546, %545 : vector<8x128xf32>
    %548 = math.tanh %547 : vector<8x128xf32>
    %cst_240 = arith.constant 5.000000e-01 : f32
    %549 = vector.broadcast %cst_240 : f32 to vector<8x128xf32>
    %550 = arith.mulf %549, %548 : vector<8x128xf32>
    %cst_241 = arith.constant 5.000000e-01 : f32
    %551 = vector.broadcast %cst_241 : f32 to vector<8x128xf32>
    %552 = arith.addf %550, %551 : vector<8x128xf32>
    %553 = vector.extract_strided_slice %544 {offsets = [0, 128], sizes = [8, 128], strides = [1, 1]} : vector<8x512xf32> to vector<8x128xf32>
    %cst_242 = arith.constant 5.000000e-01 : f32
    %554 = vector.broadcast %cst_242 : f32 to vector<8x128xf32>
    %555 = arith.mulf %554, %553 : vector<8x128xf32>
    %556 = math.tanh %555 : vector<8x128xf32>
    %cst_243 = arith.constant 5.000000e-01 : f32
    %557 = vector.broadcast %cst_243 : f32 to vector<8x128xf32>
    %558 = arith.mulf %557, %556 : vector<8x128xf32>
    %cst_244 = arith.constant 5.000000e-01 : f32
    %559 = vector.broadcast %cst_244 : f32 to vector<8x128xf32>
    %560 = arith.addf %558, %559 : vector<8x128xf32>
    %561 = vector.extract_strided_slice %544 {offsets = [0, 256], sizes = [8, 128], strides = [1, 1]} : vector<8x512xf32> to vector<8x128xf32>
    %562 = math.tanh %561 : vector<8x128xf32>
    %563 = vector.extract_strided_slice %544 {offsets = [0, 384], sizes = [8, 128], strides = [1, 1]} : vector<8x512xf32> to vector<8x128xf32>
    %cst_245 = arith.constant 5.000000e-01 : f32
    %564 = vector.broadcast %cst_245 : f32 to vector<8x128xf32>
    %565 = arith.mulf %564, %563 : vector<8x128xf32>
    %566 = math.tanh %565 : vector<8x128xf32>
    %cst_246 = arith.constant 5.000000e-01 : f32
    %567 = vector.broadcast %cst_246 : f32 to vector<8x128xf32>
    %568 = arith.mulf %567, %566 : vector<8x128xf32>
    %cst_247 = arith.constant 5.000000e-01 : f32
    %569 = vector.broadcast %cst_247 : f32 to vector<8x128xf32>
    %570 = arith.addf %568, %569 : vector<8x128xf32>
    %571 = arith.mulf %560, %531 : vector<8x128xf32>
    %572 = arith.mulf %552, %562 : vector<8x128xf32>
    %573 = arith.addf %571, %572 : vector<8x128xf32>
    %574 = math.tanh %573 : vector<8x128xf32>
    %575 = arith.mulf %570, %574 : vector<8x128xf32>
    %576 = arith.index_cast %c4_i32_233 : i32 to index
    %c0_248 = arith.constant 0 : index
    %c0_249 = arith.constant 0 : index
    %577 = vector.load %arg9[%576, %c0_248, %c0_249] : memref<8x8x128xf32, #tpu.memory_space<vmem>>, vector<1x8x128xf32>
    %578 = vector.shape_cast %577 : vector<1x8x128xf32> to vector<8x128xf32>
    %579 = vector.shape_cast %575 : vector<8x128xf32> to vector<1x8x128xf32>
    tpu.vector_store %arg9[%576, %c0_248, %c0_249], %579 {strides = array<i32>} : memref<8x8x128xf32, #tpu.memory_space<vmem>>, vector<1x8x128xf32>,
    %c5_i32_250 = arith.constant 5 : i32
    %580 = arith.index_cast %c5_i32_250 : i32 to index
    %c0_251 = arith.constant 0 : index
    %c0_252 = arith.constant 0 : index
    %581 = vector.load %arg12[%580, %c0_251, %c0_252] : memref<8x8x512xf32, #tpu.memory_space<vmem>>, vector<1x8x512xf32>
    %582 = vector.shape_cast %581 : vector<1x8x512xf32> to vector<8x512xf32>
    %583 = arith.truncf %575 : vector<8x128xf32> to vector<8x128xbf16>
    %c0_253 = arith.constant 0 : index
    %c0_254 = arith.constant 0 : index
    %584 = vector.load %arg4[%c0_253, %c0_254] : memref<128x512xbf16, #tpu.memory_space<vmem>>, vector<128x512xbf16>
    %cst_255 = arith.constant dense<0.000000e+00> : vector<8x512xf32>
    %585 = tpu.matmul %583, %584, %cst_255 {dimension_numbers = #tpu.dot_dimension_numbers<[1], [0], [0], [1], [0, 0, 1, 1], [], []>} : vector<8x128xbf16>, vector<128x512xbf16>, vector<8x512xf32> -> vector<8x512xf32>
    %586 = arith.addf %582, %585 : vector<8x512xf32>
    %587 = vector.extract_strided_slice %586 {offsets = [0, 0], sizes = [8, 128], strides = [1, 1]} : vector<8x512xf32> to vector<8x128xf32>
    %cst_256 = arith.constant 5.000000e-01 : f32
    %588 = vector.broadcast %cst_256 : f32 to vector<8x128xf32>
    %589 = arith.mulf %588, %587 : vector<8x128xf32>
    %590 = math.tanh %589 : vector<8x128xf32>
    %cst_257 = arith.constant 5.000000e-01 : f32
    %591 = vector.broadcast %cst_257 : f32 to vector<8x128xf32>
    %592 = arith.mulf %591, %590 : vector<8x128xf32>
    %cst_258 = arith.constant 5.000000e-01 : f32
    %593 = vector.broadcast %cst_258 : f32 to vector<8x128xf32>
    %594 = arith.addf %592, %593 : vector<8x128xf32>
    %595 = vector.extract_strided_slice %586 {offsets = [0, 128], sizes = [8, 128], strides = [1, 1]} : vector<8x512xf32> to vector<8x128xf32>
    %cst_259 = arith.constant 5.000000e-01 : f32
    %596 = vector.broadcast %cst_259 : f32 to vector<8x128xf32>
    %597 = arith.mulf %596, %595 : vector<8x128xf32>
    %598 = math.tanh %597 : vector<8x128xf32>
    %cst_260 = arith.constant 5.000000e-01 : f32
    %599 = vector.broadcast %cst_260 : f32 to vector<8x128xf32>
    %600 = arith.mulf %599, %598 : vector<8x128xf32>
    %cst_261 = arith.constant 5.000000e-01 : f32
    %601 = vector.broadcast %cst_261 : f32 to vector<8x128xf32>
    %602 = arith.addf %600, %601 : vector<8x128xf32>
    %603 = vector.extract_strided_slice %586 {offsets = [0, 256], sizes = [8, 128], strides = [1, 1]} : vector<8x512xf32> to vector<8x128xf32>
    %604 = math.tanh %603 : vector<8x128xf32>
    %605 = vector.extract_strided_slice %586 {offsets = [0, 384], sizes = [8, 128], strides = [1, 1]} : vector<8x512xf32> to vector<8x128xf32>
    %cst_262 = arith.constant 5.000000e-01 : f32
    %606 = vector.broadcast %cst_262 : f32 to vector<8x128xf32>
    %607 = arith.mulf %606, %605 : vector<8x128xf32>
    %608 = math.tanh %607 : vector<8x128xf32>
    %cst_263 = arith.constant 5.000000e-01 : f32
    %609 = vector.broadcast %cst_263 : f32 to vector<8x128xf32>
    %610 = arith.mulf %609, %608 : vector<8x128xf32>
    %cst_264 = arith.constant 5.000000e-01 : f32
    %611 = vector.broadcast %cst_264 : f32 to vector<8x128xf32>
    %612 = arith.addf %610, %611 : vector<8x128xf32>
    %613 = arith.mulf %602, %573 : vector<8x128xf32>
    %614 = arith.mulf %594, %604 : vector<8x128xf32>
    %615 = arith.addf %613, %614 : vector<8x128xf32>
    %616 = math.tanh %615 : vector<8x128xf32>
    %617 = arith.mulf %612, %616 : vector<8x128xf32>
    %618 = arith.index_cast %c5_i32_250 : i32 to index
    %c0_265 = arith.constant 0 : index
    %c0_266 = arith.constant 0 : index
    %619 = vector.load %arg9[%618, %c0_265, %c0_266] : memref<8x8x128xf32, #tpu.memory_space<vmem>>, vector<1x8x128xf32>
    %620 = vector.shape_cast %619 : vector<1x8x128xf32> to vector<8x128xf32>
    %621 = vector.shape_cast %617 : vector<8x128xf32> to vector<1x8x128xf32>
    tpu.vector_store %arg9[%618, %c0_265, %c0_266], %621 {strides = array<i32>} : memref<8x8x128xf32, #tpu.memory_space<vmem>>, vector<1x8x128xf32>,
    %c6_i32_267 = arith.constant 6 : i32
    %622 = arith.index_cast %c6_i32_267 : i32 to index
    %c0_268 = arith.constant 0 : index
    %c0_269 = arith.constant 0 : index
    %623 = vector.load %arg12[%622, %c0_268, %c0_269] : memref<8x8x512xf32, #tpu.memory_space<vmem>>, vector<1x8x512xf32>
    %624 = vector.shape_cast %623 : vector<1x8x512xf32> to vector<8x512xf32>
    %625 = arith.truncf %617 : vector<8x128xf32> to vector<8x128xbf16>
    %c0_270 = arith.constant 0 : index
    %c0_271 = arith.constant 0 : index
    %626 = vector.load %arg4[%c0_270, %c0_271] : memref<128x512xbf16, #tpu.memory_space<vmem>>, vector<128x512xbf16>
    %cst_272 = arith.constant dense<0.000000e+00> : vector<8x512xf32>
    %627 = tpu.matmul %625, %626, %cst_272 {dimension_numbers = #tpu.dot_dimension_numbers<[1], [0], [0], [1], [0, 0, 1, 1], [], []>} : vector<8x128xbf16>, vector<128x512xbf16>, vector<8x512xf32> -> vector<8x512xf32>
    %628 = arith.addf %624, %627 : vector<8x512xf32>
    %629 = vector.extract_strided_slice %628 {offsets = [0, 0], sizes = [8, 128], strides = [1, 1]} : vector<8x512xf32> to vector<8x128xf32>
    %cst_273 = arith.constant 5.000000e-01 : f32
    %630 = vector.broadcast %cst_273 : f32 to vector<8x128xf32>
    %631 = arith.mulf %630, %629 : vector<8x128xf32>
    %632 = math.tanh %631 : vector<8x128xf32>
    %cst_274 = arith.constant 5.000000e-01 : f32
    %633 = vector.broadcast %cst_274 : f32 to vector<8x128xf32>
    %634 = arith.mulf %633, %632 : vector<8x128xf32>
    %cst_275 = arith.constant 5.000000e-01 : f32
    %635 = vector.broadcast %cst_275 : f32 to vector<8x128xf32>
    %636 = arith.addf %634, %635 : vector<8x128xf32>
    %637 = vector.extract_strided_slice %628 {offsets = [0, 128], sizes = [8, 128], strides = [1, 1]} : vector<8x512xf32> to vector<8x128xf32>
    %cst_276 = arith.constant 5.000000e-01 : f32
    %638 = vector.broadcast %cst_276 : f32 to vector<8x128xf32>
    %639 = arith.mulf %638, %637 : vector<8x128xf32>
    %640 = math.tanh %639 : vector<8x128xf32>
    %cst_277 = arith.constant 5.000000e-01 : f32
    %641 = vector.broadcast %cst_277 : f32 to vector<8x128xf32>
    %642 = arith.mulf %641, %640 : vector<8x128xf32>
    %cst_278 = arith.constant 5.000000e-01 : f32
    %643 = vector.broadcast %cst_278 : f32 to vector<8x128xf32>
    %644 = arith.addf %642, %643 : vector<8x128xf32>
    %645 = vector.extract_strided_slice %628 {offsets = [0, 256], sizes = [8, 128], strides = [1, 1]} : vector<8x512xf32> to vector<8x128xf32>
    %646 = math.tanh %645 : vector<8x128xf32>
    %647 = vector.extract_strided_slice %628 {offsets = [0, 384], sizes = [8, 128], strides = [1, 1]} : vector<8x512xf32> to vector<8x128xf32>
    %cst_279 = arith.constant 5.000000e-01 : f32
    %648 = vector.broadcast %cst_279 : f32 to vector<8x128xf32>
    %649 = arith.mulf %648, %647 : vector<8x128xf32>
    %650 = math.tanh %649 : vector<8x128xf32>
    %cst_280 = arith.constant 5.000000e-01 : f32
    %651 = vector.broadcast %cst_280 : f32 to vector<8x128xf32>
    %652 = arith.mulf %651, %650 : vector<8x128xf32>
    %cst_281 = arith.constant 5.000000e-01 : f32
    %653 = vector.broadcast %cst_281 : f32 to vector<8x128xf32>
    %654 = arith.addf %652, %653 : vector<8x128xf32>
    %655 = arith.mulf %644, %615 : vector<8x128xf32>
    %656 = arith.mulf %636, %646 : vector<8x128xf32>
    %657 = arith.addf %655, %656 : vector<8x128xf32>
    %658 = math.tanh %657 : vector<8x128xf32>
    %659 = arith.mulf %654, %658 : vector<8x128xf32>
    %660 = arith.index_cast %c6_i32_267 : i32 to index
    %c0_282 = arith.constant 0 : index
    %c0_283 = arith.constant 0 : index
    %661 = vector.load %arg9[%660, %c0_282, %c0_283] : memref<8x8x128xf32, #tpu.memory_space<vmem>>, vector<1x8x128xf32>
    %662 = vector.shape_cast %661 : vector<1x8x128xf32> to vector<8x128xf32>
    %663 = vector.shape_cast %659 : vector<8x128xf32> to vector<1x8x128xf32>
    tpu.vector_store %arg9[%660, %c0_282, %c0_283], %663 {strides = array<i32>} : memref<8x8x128xf32, #tpu.memory_space<vmem>>, vector<1x8x128xf32>,
    %c7_i32_284 = arith.constant 7 : i32
    %664 = arith.index_cast %c7_i32_284 : i32 to index
    %c0_285 = arith.constant 0 : index
    %c0_286 = arith.constant 0 : index
    %665 = vector.load %arg12[%664, %c0_285, %c0_286] : memref<8x8x512xf32, #tpu.memory_space<vmem>>, vector<1x8x512xf32>
    %666 = vector.shape_cast %665 : vector<1x8x512xf32> to vector<8x512xf32>
    %667 = arith.truncf %659 : vector<8x128xf32> to vector<8x128xbf16>
    %c0_287 = arith.constant 0 : index
    %c0_288 = arith.constant 0 : index
    %668 = vector.load %arg4[%c0_287, %c0_288] : memref<128x512xbf16, #tpu.memory_space<vmem>>, vector<128x512xbf16>
    %cst_289 = arith.constant dense<0.000000e+00> : vector<8x512xf32>
    %669 = tpu.matmul %667, %668, %cst_289 {dimension_numbers = #tpu.dot_dimension_numbers<[1], [0], [0], [1], [0, 0, 1, 1], [], []>} : vector<8x128xbf16>, vector<128x512xbf16>, vector<8x512xf32> -> vector<8x512xf32>
    %670 = arith.addf %666, %669 : vector<8x512xf32>
    %671 = vector.extract_strided_slice %670 {offsets = [0, 0], sizes = [8, 128], strides = [1, 1]} : vector<8x512xf32> to vector<8x128xf32>
    %cst_290 = arith.constant 5.000000e-01 : f32
    %672 = vector.broadcast %cst_290 : f32 to vector<8x128xf32>
    %673 = arith.mulf %672, %671 : vector<8x128xf32>
    %674 = math.tanh %673 : vector<8x128xf32>
    %cst_291 = arith.constant 5.000000e-01 : f32
    %675 = vector.broadcast %cst_291 : f32 to vector<8x128xf32>
    %676 = arith.mulf %675, %674 : vector<8x128xf32>
    %cst_292 = arith.constant 5.000000e-01 : f32
    %677 = vector.broadcast %cst_292 : f32 to vector<8x128xf32>
    %678 = arith.addf %676, %677 : vector<8x128xf32>
    %679 = vector.extract_strided_slice %670 {offsets = [0, 128], sizes = [8, 128], strides = [1, 1]} : vector<8x512xf32> to vector<8x128xf32>
    %cst_293 = arith.constant 5.000000e-01 : f32
    %680 = vector.broadcast %cst_293 : f32 to vector<8x128xf32>
    %681 = arith.mulf %680, %679 : vector<8x128xf32>
    %682 = math.tanh %681 : vector<8x128xf32>
    %cst_294 = arith.constant 5.000000e-01 : f32
    %683 = vector.broadcast %cst_294 : f32 to vector<8x128xf32>
    %684 = arith.mulf %683, %682 : vector<8x128xf32>
    %cst_295 = arith.constant 5.000000e-01 : f32
    %685 = vector.broadcast %cst_295 : f32 to vector<8x128xf32>
    %686 = arith.addf %684, %685 : vector<8x128xf32>
    %687 = vector.extract_strided_slice %670 {offsets = [0, 256], sizes = [8, 128], strides = [1, 1]} : vector<8x512xf32> to vector<8x128xf32>
    %688 = math.tanh %687 : vector<8x128xf32>
    %689 = vector.extract_strided_slice %670 {offsets = [0, 384], sizes = [8, 128], strides = [1, 1]} : vector<8x512xf32> to vector<8x128xf32>
    %cst_296 = arith.constant 5.000000e-01 : f32
    %690 = vector.broadcast %cst_296 : f32 to vector<8x128xf32>
    %691 = arith.mulf %690, %689 : vector<8x128xf32>
    %692 = math.tanh %691 : vector<8x128xf32>
    %cst_297 = arith.constant 5.000000e-01 : f32
    %693 = vector.broadcast %cst_297 : f32 to vector<8x128xf32>
    %694 = arith.mulf %693, %692 : vector<8x128xf32>
    %cst_298 = arith.constant 5.000000e-01 : f32
    %695 = vector.broadcast %cst_298 : f32 to vector<8x128xf32>
    %696 = arith.addf %694, %695 : vector<8x128xf32>
    %697 = arith.mulf %686, %657 : vector<8x128xf32>
    %698 = arith.mulf %678, %688 : vector<8x128xf32>
    %699 = arith.addf %697, %698 : vector<8x128xf32>
    %700 = math.tanh %699 : vector<8x128xf32>
    %701 = arith.mulf %696, %700 : vector<8x128xf32>
    %702 = arith.index_cast %c7_i32_284 : i32 to index
    %c0_299 = arith.constant 0 : index
    %c0_300 = arith.constant 0 : index
    %703 = vector.load %arg9[%702, %c0_299, %c0_300] : memref<8x8x128xf32, #tpu.memory_space<vmem>>, vector<1x8x128xf32>
    %704 = vector.shape_cast %703 : vector<1x8x128xf32> to vector<8x128xf32>
    %705 = vector.shape_cast %701 : vector<8x128xf32> to vector<1x8x128xf32>
    tpu.vector_store %arg9[%702, %c0_299, %c0_300], %705 {strides = array<i32>} : memref<8x8x128xf32, #tpu.memory_space<vmem>>, vector<1x8x128xf32>,
    %c8_i32_301 = arith.constant 8 : i32
    %c1_302 = arith.constant 1 : index
    %c0_303 = arith.constant 0 : index
    %c0_304 = arith.constant 0 : index
    %706 = vector.load %arg10[%c1_302, %c0_303, %c0_304] : memref<2x8x128xf32, #tpu.memory_space<vmem>>, vector<1x8x128xf32>
    %707 = vector.shape_cast %706 : vector<1x8x128xf32> to vector<8x128xf32>
    %708 = vector.shape_cast %701 : vector<8x128xf32> to vector<1x8x128xf32>
    tpu.vector_store %arg10[%c1_302, %c0_303, %c0_304], %708 {strides = array<i32>} : memref<2x8x128xf32, #tpu.memory_space<vmem>>, vector<1x8x128xf32>,
    %c1_305 = arith.constant 1 : index
    %c0_306 = arith.constant 0 : index
    %c0_307 = arith.constant 0 : index
    %709 = vector.load %arg11[%c1_305, %c0_306, %c0_307] : memref<2x8x128xf32, #tpu.memory_space<vmem>>, vector<1x8x128xf32>
    %710 = vector.shape_cast %709 : vector<1x8x128xf32> to vector<8x128xf32>
    %711 = vector.shape_cast %699 : vector<8x128xf32> to vector<1x8x128xf32>
    tpu.vector_store %arg11[%c1_305, %c0_306, %c0_307], %711 {strides = array<i32>} : memref<2x8x128xf32, #tpu.memory_space<vmem>>, vector<1x8x128xf32>,
    return
  }
}

</mosaic_0001>

<llo_original>
// kernel: tpu_custom_call.1
$region0: #{tpu_custom_call.1}
  #allocation0 [shape = 'u32[]', space=smem, size = 0x4, offset = 0x4, fixed_abs, tag = 'smem constant byte address 0x4 - core index']
  #allocation1 [shape = 'u32[72,128]{1,0:T(1,128)}', space=vmem, size = 0x9000, scoped, tag = 'internal scratch']
  #allocation2 [shape = 'f32[8,8,512]{2,1,0:T(8,128)}', space=vmem, size = 0x20000, scoped, tag = 'scratch operand']
  %s0 = inlined_call_operand.hbm [shape: f32[8,8,128], index: 0, kind: input, shape index: {}]
  %s1 = inlined_call_operand.hbm [shape: bf16[128,512], index: 1, kind: input, shape index: {}]
  %s2 = inlined_call_operand.hbm [shape: bf16[128,512], index: 2, kind: input, shape index: {}]
  %s3 = inlined_call_operand.hbm [shape: bf16[128,512], index: 3, kind: input, shape index: {}]
  %s4 = inlined_call_operand.hbm [shape: bf16[128,512], index: 4, kind: input, shape index: {}]
  %s5 = inlined_call_operand.vmem [shape: f32[1,512], index: 5, kind: input, shape index: {}]
  %s6 = inlined_call_operand.hbm [shape: f32[1,512], index: 6, kind: input, shape index: {}]
  %s7 = inlined_call_operand.hbm [shape: f32[2,8,128], index: 7, kind: input, shape index: {}]
  %s8 = inlined_call_operand.hbm [shape: f32[2,8,128], index: 8, kind: input, shape index: {}]
  %s9 = inlined_call_operand.hbm [shape: f32[8,8,128], index: 9, kind: output, shape index: {0}]
  %s10 = inlined_call_operand.hbm [shape: f32[2,8,128], index: 10, kind: output, shape index: {1}]
  %s11 = inlined_call_operand.hbm [shape: f32[2,8,128], index: 11, kind: output, shape index: {2}]
  %12 = xla_tuple %s9, %s10, %s11
  %s13 = sld [smem:[#allocation0]]
  $region94: #{tpu_custom_call.1} parent=0
    _
  %s15 = ssub.s32 1, %s13
  %s16 = scalar_select 0, %s15, %s13
  $region1: #{tpu_custom_call.1} parent=0
    #allocation3 [shape = 'u8[32768]{0}', space=vmem, size = 0x8000, scoped, tag = 'input window, operand 0, single buffered']
    #allocation4 [shape = 's32[1]{0}', space=sflag, size = 0x4, scoped, tag = 'scoped memory for tpu_custom_call.1']
    #allocation5 [shape = 's32[1]{0}', space=sflag, size = 0x4, scoped, tag = 'scoped memory for tpu_custom_call.1']
    #allocation6 [shape = 'u8[131072]{0}', space=vmem, size = 0x20000, scoped, tag = 'input window, operand 1, single buffered']
    #allocation7 [shape = 's32[1]{0}', space=sflag, size = 0x4, scoped, tag = 'scoped memory for tpu_custom_call.1']
    #allocation8 [shape = 'u8[131072]{0}', space=vmem, size = 0x20000, scoped, tag = 'input window, operand 2, single buffered']
    #allocation9 [shape = 'u8[131072]{0}', space=vmem, size = 0x20000, scoped, tag = 'input window, operand 3, single buffered']
    #allocation10 [shape = 's32[1]{0}', space=sflag, size = 0x4, scoped, tag = 'scoped memory for tpu_custom_call.1']
    #allocation11 [shape = 'u8[131072]{0}', space=vmem, size = 0x20000, scoped, tag = 'input window, operand 4, single buffered']
    #allocation12 [shape = 'u8[2048]{0}', space=vmem, size = 0x800, scoped, tag = 'input window, operand 6, single buffered']
    #allocation13 [shape = 's32[1]{0}', space=sflag, size = 0x4, scoped, tag = 'scoped memory for tpu_custom_call.1']
    #allocation14 [shape = 'u8[8192]{0}', space=vmem, size = 0x2000, scoped, tag = 'input window, operand 7, single buffered']
    #allocation15 [shape = 'u8[8192]{0}', space=vmem, size = 0x2000, scoped, tag = 'input window, operand 8, single buffered']
    #allocation16 [shape = 's32[1]{0}', space=sflag, size = 0x4, scoped, tag = 'scoped memory for tpu_custom_call.1']
    #allocation17 [shape = 'u8[32768]{0}', space=vmem, size = 0x8000, scoped, tag = 'output window, operand 0, single buffered']
    #allocation18 [shape = 'u8[8192]{0}', space=vmem, size = 0x2000, scoped, tag = 'output window, operand 1, single buffered']
    #allocation19 [shape = 's32[1]{0}', space=sflag, size = 0x4, scoped, tag = 'scoped memory for tpu_custom_call.1']
    #allocation20 [shape = 'u8[8192]{0}', space=vmem, size = 0x2000, scoped, tag = 'output window, operand 2, single buffered']
    %17 = vsyncpa [#allocation4], 0
    %18 = vsyncpa [#allocation7], 0
    %19 = vsyncpa [#allocation10], 0
    %20 = vsyncpa [#allocation13], 0
    %21 = vsyncpa [#allocation16], 0
    %22 = vsyncpa [#allocation5], 0
    %23 = vsyncpa [#allocation19], 0
    // Predicated region
    $region2: #{tpu_custom_call.1} parent=1 // pred_check
      _
    $region3: #{tpu_custom_call.1} parent=1 // pred_check_branch
      %25 = sbr.rel (0) target = $region5
    $region4: #{tpu_custom_call.1} parent=1 // pred_region
      %27 = vsyncadd [#allocation4], 0
      %s28 = sshll.u32 %s0, 4
      %s29 = int_to_ptr.hbm [resolvable:$true] %s28
      %s30 = sshll.u32 [#allocation3], 4
      %s31 = int_to_ptr.vmem [resolvable:$true] %s30
      %36 = dma.hbm_to_vmem [thread:$0]  %s29, 1024, %s31, [#allocation4], 128, 128, 8
    $region5: #{tpu_custom_call.1} parent=1 // pred_fallthru
      _
    // Predicated region
    $region6: #{tpu_custom_call.1} parent=1 // pred_check
      _
    $region7: #{tpu_custom_call.1} parent=1 // pred_check_branch
      %38 = sbr.rel (0) target = $region9
    $region8: #{tpu_custom_call.1} parent=1 // pred_region
      %40 = vsyncadd [#allocation7], 0
      %s41 = sshll.u32 %s1, 4
      %s42 = int_to_ptr.hbm [resolvable:$true] %s41
      %s43 = sshll.u32 [#allocation6], 4
      %s44 = int_to_ptr.vmem [resolvable:$true] %s43
      %49 = dma.hbm_to_vmem [thread:$0]  %s42, 4096, %s44, [#allocation7], 256, 256, 16
    $region9: #{tpu_custom_call.1} parent=1 // pred_fallthru
      _
    // Predicated region
    $region10: #{tpu_custom_call.1} parent=1 // pred_check
      _
    $region11: #{tpu_custom_call.1} parent=1 // pred_check_branch
      %51 = sbr.rel (0) target = $region13
    $region12: #{tpu_custom_call.1} parent=1 // pred_region
      %53 = vsyncadd [#allocation7], 0
      %s54 = sshll.u32 %s2, 4
      %s55 = int_to_ptr.hbm [resolvable:$true] %s54
      %s56 = sshll.u32 [#allocation8], 4
      %s57 = int_to_ptr.vmem [resolvable:$true] %s56
      %62 = dma.hbm_to_vmem [thread:$0]  %s55, 4096, %s57, [#allocation7], 256, 256, 16
    $region13: #{tpu_custom_call.1} parent=1 // pred_fallthru
      _
    // Predicated region
    $region14: #{tpu_custom_call.1} parent=1 // pred_check
      _
    $region15: #{tpu_custom_call.1} parent=1 // pred_check_branch
      %64 = sbr.rel (0) target = $region17
    $region16: #{tpu_custom_call.1} parent=1 // pred_region
      %66 = vsyncadd [#allocation10], 0
      %s67 = sshll.u32 %s3, 4
      %s68 = int_to_ptr.hbm [resolvable:$true] %s67
      %s69 = sshll.u32 [#allocation9], 4
      %s70 = int_to_ptr.vmem [resolvable:$true] %s69
      %75 = dma.hbm_to_vmem [thread:$0]  %s68, 4096, %s70, [#allocation10], 256, 256, 16
    $region17: #{tpu_custom_call.1} parent=1 // pred_fallthru
      _
    // Predicated region
    $region18: #{tpu_custom_call.1} parent=1 // pred_check
      _
    $region19: #{tpu_custom_call.1} parent=1 // pred_check_branch
      %77 = sbr.rel (0) target = $region21
    $region20: #{tpu_custom_call.1} parent=1 // pred_region
      %79 = vsyncadd [#allocation10], 0
      %s80 = sshll.u32 %s4, 4
      %s81 = int_to_ptr.hbm [resolvable:$true] %s80
      %s82 = sshll.u32 [#allocation11], 4
      %s83 = int_to_ptr.vmem [resolvable:$true] %s82
      %88 = dma.hbm_to_vmem [thread:$0]  %s81, 4096, %s83, [#allocation10], 256, 256, 16
    $region21: #{tpu_custom_call.1} parent=1 // pred_fallthru
      _
    // Predicated region
    $region22: #{tpu_custom_call.1} parent=1 // pred_check
      _
    $region23: #{tpu_custom_call.1} parent=1 // pred_check_branch
      %90 = sbr.rel (0) target = $region25
    $region24: #{tpu_custom_call.1} parent=1 // pred_region
      _
    $region25: #{tpu_custom_call.1} parent=1 // pred_fallthru
      _
    // Predicated region
    $region26: #{tpu_custom_call.1} parent=1 // pred_check
      _
    $region27: #{tpu_custom_call.1} parent=1 // pred_check_branch
      %92 = sbr.rel (0) target = $region29
    $region28: #{tpu_custom_call.1} parent=1 // pred_region
      %94 = vsyncadd [#allocation13], 0
      %s96 = sshll.u32 %s6, 4
      %s97 = int_to_ptr.hbm [resolvable:$true] %s96
      %s98 = sshll.u32 [#allocation12], 4
      %s99 = int_to_ptr.vmem [resolvable:$true] %s98
      %101 = dma.hbm_to_vmem [thread:$0]  %s97, 64, %s99, [#allocation13]
    $region29: #{tpu_custom_call.1} parent=1 // pred_fallthru
      _
    // Predicated region
    $region30: #{tpu_custom_call.1} parent=1 // pred_check
      _
    $region31: #{tpu_custom_call.1} parent=1 // pred_check_branch
      %103 = sbr.rel (0) target = $region33
    $region32: #{tpu_custom_call.1} parent=1 // pred_region
      %105 = vsyncadd [#allocation13], 0
      %s106 = sshll.u32 %s7, 4
      %s107 = int_to_ptr.hbm [resolvable:$true] %s106
      %s108 = sshll.u32 [#allocation14], 4
      %s109 = int_to_ptr.vmem [resolvable:$true] %s108
      %114 = dma.hbm_to_vmem [thread:$0]  %s107, 256, %s109, [#allocation13], 128, 128, 8
    $region33: #{tpu_custom_call.1} parent=1 // pred_fallthru
      _
    // Predicated region
    $region34: #{tpu_custom_call.1} parent=1 // pred_check
      _
    $region35: #{tpu_custom_call.1} parent=1 // pred_check_branch
      %116 = sbr.rel (0) target = $region37
    $region36: #{tpu_custom_call.1} parent=1 // pred_region
      %118 = vsyncadd [#allocation16], 0
      %s119 = sshll.u32 %s8, 4
      %s120 = int_to_ptr.hbm [resolvable:$true] %s119
      %s121 = sshll.u32 [#allocation15], 4
      %s122 = int_to_ptr.vmem [resolvable:$true] %s121
      %127 = dma.hbm_to_vmem [thread:$0]  %s120, 256, %s122, [#allocation16], 128, 128, 8
    $region37: #{tpu_custom_call.1} parent=1 // pred_fallthru
      _
    // Predicated region
    $region38: #{tpu_custom_call.1} parent=1 // pred_check
      _
    $region39: #{tpu_custom_call.1} parent=1 // pred_check_branch
      %129 = sbr.rel (0) target = $region41
    $region40: #{tpu_custom_call.1} parent=1 // pred_region
      %131 = dma.done [#allocation4], 1024
    $region41: #{tpu_custom_call.1} parent=1 // pred_fallthru
      _
    // Predicated region
    $region42: #{tpu_custom_call.1} parent=1 // pred_check
      _
    $region43: #{tpu_custom_call.1} parent=1 // pred_check_branch
      %133 = sbr.rel (0) target = $region45
    $region44: #{tpu_custom_call.1} parent=1 // pred_region
      %135 = dma.done [#allocation7], 4096
    $region45: #{tpu_custom_call.1} parent=1 // pred_fallthru
      _
    // Predicated region
    $region46: #{tpu_custom_call.1} parent=1 // pred_check
      _
    $region47: #{tpu_custom_call.1} parent=1 // pred_check_branch
      %137 = sbr.rel (0) target = $region49
    $region48: #{tpu_custom_call.1} parent=1 // pred_region
      %139 = dma.done [#allocation7], 4096
    $region49: #{tpu_custom_call.1} parent=1 // pred_fallthru
      _
    // Predicated region
    $region50: #{tpu_custom_call.1} parent=1 // pred_check
      _
    $region51: #{tpu_custom_call.1} parent=1 // pred_check_branch
      %141 = sbr.rel (0) target = $region53
    $region52: #{tpu_custom_call.1} parent=1 // pred_region
      %143 = dma.done [#allocation10], 4096
    $region53: #{tpu_custom_call.1} parent=1 // pred_fallthru
      _
    // Predicated region
    $region54: #{tpu_custom_call.1} parent=1 // pred_check
      _
    $region55: #{tpu_custom_call.1} parent=1 // pred_check_branch
      %145 = sbr.rel (0) target = $region57
    $region56: #{tpu_custom_call.1} parent=1 // pred_region
      %147 = dma.done [#allocation10], 4096
    $region57: #{tpu_custom_call.1} parent=1 // pred_fallthru
      _
    // Predicated region
    $region58: #{tpu_custom_call.1} parent=1 // pred_check
      _
    $region59: #{tpu_custom_call.1} parent=1 // pred_check_branch
      %149 = sbr.rel (0) target = $region61
    $region60: #{tpu_custom_call.1} parent=1 // pred_region
      %151 = dma.done [#allocation13], 64
    $region61: #{tpu_custom_call.1} parent=1 // pred_fallthru
      _
    // Predicated region
    $region62: #{tpu_custom_call.1} parent=1 // pred_check
      _
    $region63: #{tpu_custom_call.1} parent=1 // pred_check_branch
      %153 = sbr.rel (0) target = $region65
    $region64: #{tpu_custom_call.1} parent=1 // pred_region
      %155 = dma.done [#allocation13], 256
    $region65: #{tpu_custom_call.1} parent=1 // pred_fallthru
      _
    // Predicated region
    $region66: #{tpu_custom_call.1} parent=1 // pred_check
      _
    $region67: #{tpu_custom_call.1} parent=1 // pred_check_branch
      %157 = sbr.rel (0) target = $region69
    $region68: #{tpu_custom_call.1} parent=1 // pred_region
      %159 = dma.done [#allocation16], 256
    $region69: #{tpu_custom_call.1} parent=1 // pred_fallthru
      _
    %v160 = vld [vmem:[#allocation3] sm:$0xff]
    %v161 = vld [vmem:[#allocation3 + $0x8] sm:$0xff]
    %v162 = vld [vmem:[#allocation3 + $0x10] sm:$0xff]
    %v163 = vld [vmem:[#allocation3 + $0x18] sm:$0xff]
    %v164 = vld [vmem:[#allocation3 + $0x20] sm:$0xff]
    %v165 = vld [vmem:[#allocation3 + $0x28] sm:$0xff]
    %v166 = vld [vmem:[#allocation3 + $0x30] sm:$0xff]
    %v167 = vld [vmem:[#allocation3 + $0x38] sm:$0xff]
    %v168 = vpack.c.bf16 %v161, %v160
    %v169 = vpack.c.bf16 %v163, %v162
    %v170 = vpack.c.bf16 %v165, %v164
    %v171 = vpack.c.bf16 %v167, %v166
    %v172 = vld [vmem:[#allocation6] sm:$0xff]
    %v173 = vld [vmem:[#allocation6 + $0x8] sm:$0xff]
    %v174 = vld [vmem:[#allocation6 + $0x10] sm:$0xff]
    %v175 = vld [vmem:[#allocation6 + $0x18] sm:$0xff]
    %v176 = vld [vmem:[#allocation6 + $0x20] sm:$0xff]
    %v177 = vld [vmem:[#allocation6 + $0x28] sm:$0xff]
    %v178 = vld [vmem:[#allocation6 + $0x30] sm:$0xff]
    %v179 = vld [vmem:[#allocation6 + $0x38] sm:$0xff]
    %v180 = vld [vmem:[#allocation6 + $0x40] sm:$0xff]
    %v181 = vld [vmem:[#allocation6 + $0x48] sm:$0xff]
    %v182 = vld [vmem:[#allocation6 + $0x50] sm:$0xff]
    %v183 = vld [vmem:[#allocation6 + $0x58] sm:$0xff]
    %v184 = vld [vmem:[#allocation6 + $0x60] sm:$0xff]
    %v185 = vld [vmem:[#allocation6 + $0x68] sm:$0xff]
    %v186 = vld [vmem:[#allocation6 + $0x70] sm:$0xff]
    %v187 = vld [vmem:[#allocation6 + $0x78] sm:$0xff]
    %v188 = vld [vmem:[#allocation6 + $0x80] sm:$0xff]
    %v189 = vld [vmem:[#allocation6 + $0x88] sm:$0xff]
    %v190 = vld [vmem:[#allocation6 + $0x90] sm:$0xff]
    %v191 = vld [vmem:[#allocation6 + $0x98] sm:$0xff]
    %v192 = vld [vmem:[#allocation6 + $0xa0] sm:$0xff]
    %v193 = vld [vmem:[#allocation6 + $0xa8] sm:$0xff]
    %v194 = vld [vmem:[#allocation6 + $0xb0] sm:$0xff]
    %v195 = vld [vmem:[#allocation6 + $0xb8] sm:$0xff]
    %v196 = vld [vmem:[#allocation6 + $0xc0] sm:$0xff]
    %v197 = vld [vmem:[#allocation6 + $0xc8] sm:$0xff]
    %v198 = vld [vmem:[#allocation6 + $0xd0] sm:$0xff]
    %v199 = vld [vmem:[#allocation6 + $0xd8] sm:$0xff]
    %v200 = vld [vmem:[#allocation6 + $0xe0] sm:$0xff]
    %v201 = vld [vmem:[#allocation6 + $0xe8] sm:$0xff]
    %v202 = vld [vmem:[#allocation6 + $0xf0] sm:$0xff]
    %v203 = vld [vmem:[#allocation6 + $0xf8] sm:$0xff]
    %v204 = vld [vmem:[%s5] sm:$0xf]
    %v206 = vperm.slane %v204, 0
    %v207 = vperm.slane %v204, 1
    %v208 = vperm.slane %v204, 2
    %v209 = vperm.slane %v204, 3
    %v246 = vunpack.c.l.b16 %v172
    %v247 = vunpack.c.h.b16 %v172
    %v248 = vunpack.c.l.b16 %v173
    %v249 = vunpack.c.h.b16 %v173
    %v250 = vunpack.c.l.b16 %v174
    %v251 = vunpack.c.h.b16 %v174
    %v252 = vunpack.c.l.b16 %v175
    %v253 = vunpack.c.h.b16 %v175
    %v254 = vunpack.c.l.b16 %v176
    %v255 = vunpack.c.h.b16 %v176
    %v256 = vunpack.c.l.b16 %v177
    %v257 = vunpack.c.h.b16 %v177
    %v258 = vunpack.c.l.b16 %v178
    %v259 = vunpack.c.h.b16 %v178
    %v260 = vunpack.c.l.b16 %v179
    %v261 = vunpack.c.h.b16 %v179
    %v262 = vunpack.c.l.b16 %v180
    %v263 = vunpack.c.h.b16 %v180
    %v264 = vunpack.c.l.b16 %v181
    %v265 = vunpack.c.h.b16 %v181
    %v266 = vunpack.c.l.b16 %v182
    %v267 = vunpack.c.h.b16 %v182
    %v268 = vunpack.c.l.b16 %v183
    %v269 = vunpack.c.h.b16 %v183
    %v270 = vunpack.c.l.b16 %v184
    %v271 = vunpack.c.h.b16 %v184
    %v272 = vunpack.c.l.b16 %v185
    %v273 = vunpack.c.h.b16 %v185
    %v274 = vunpack.c.l.b16 %v186
    %v275 = vunpack.c.h.b16 %v186
    %v276 = vunpack.c.l.b16 %v187
    %v277 = vunpack.c.h.b16 %v187
    %v278 = vunpack.c.l.b16 %v188
    %v279 = vunpack.c.h.b16 %v188
    %v280 = vunpack.c.l.b16 %v189
    %v281 = vunpack.c.h.b16 %v189
    %v282 = vunpack.c.l.b16 %v190
    %v283 = vunpack.c.h.b16 %v190
    %v284 = vunpack.c.l.b16 %v191
    %v285 = vunpack.c.h.b16 %v191
    %v286 = vunpack.c.l.b16 %v192
    %v287 = vunpack.c.h.b16 %v192
    %v288 = vunpack.c.l.b16 %v193
    %v289 = vunpack.c.h.b16 %v193
    %v290 = vunpack.c.l.b16 %v194
    %v291 = vunpack.c.h.b16 %v194
    %v292 = vunpack.c.l.b16 %v195
    %v293 = vunpack.c.h.b16 %v195
    %v294 = vunpack.c.l.b16 %v196
    %v295 = vunpack.c.h.b16 %v196
    %v296 = vunpack.c.l.b16 %v197
    %v297 = vunpack.c.h.b16 %v197
    %v298 = vunpack.c.l.b16 %v198
    %v299 = vunpack.c.h.b16 %v198
    %v300 = vunpack.c.l.b16 %v199
    %v301 = vunpack.c.h.b16 %v199
    %v302 = vunpack.c.l.b16 %v200
    %v303 = vunpack.c.h.b16 %v200
    %v304 = vunpack.c.l.b16 %v201
    %v305 = vunpack.c.h.b16 %v201
    %v306 = vunpack.c.l.b16 %v202
    %v307 = vunpack.c.h.b16 %v202
    %v308 = vunpack.c.l.b16 %v203
    %v309 = vunpack.c.h.b16 %v203
    %v310 = vpack.c.b16 %v250, %v246
    %v311 = vpack.c.b16 %v251, %v247
    %v312 = vpack.c.b16 %v252, %v248
    %v313 = vpack.c.b16 %v253, %v249
    %v314 = vpack.c.b16 %v258, %v254
    %v315 = vpack.c.b16 %v259, %v255
    %v316 = vpack.c.b16 %v260, %v256
    %v317 = vpack.c.b16 %v261, %v257
    %v318 = vpack.c.b16 %v266, %v262
    %v319 = vpack.c.b16 %v267, %v263
    %v320 = vpack.c.b16 %v268, %v264
    %v321 = vpack.c.b16 %v269, %v265
    %v322 = vpack.c.b16 %v274, %v270
    %v323 = vpack.c.b16 %v275, %v271
    %v324 = vpack.c.b16 %v276, %v272
    %v325 = vpack.c.b16 %v277, %v273
    %v326 = vpack.c.b16 %v282, %v278
    %v327 = vpack.c.b16 %v283, %v279
    %v328 = vpack.c.b16 %v284, %v280
    %v329 = vpack.c.b16 %v285, %v281
    %v330 = vpack.c.b16 %v290, %v286
    %v331 = vpack.c.b16 %v291, %v287
    %v332 = vpack.c.b16 %v292, %v288
    %v333 = vpack.c.b16 %v293, %v289
    %v334 = vpack.c.b16 %v298, %v294
    %v335 = vpack.c.b16 %v299, %v295
    %v336 = vpack.c.b16 %v300, %v296
    %v337 = vpack.c.b16 %v301, %v297
    %v338 = vpack.c.b16 %v306, %v302
    %v339 = vpack.c.b16 %v307, %v303
    %v340 = vpack.c.b16 %v308, %v304
    %v341 = vpack.c.b16 %v309, %v305
    %374 = vmatpush.bf16.msra.mxu0 %v338
    %375 = vmatpush.bf16.msra.mxu0 %v334
    %376 = vmatpush.bf16.msra.mxu0 %v330
    %377 = vmatpush.bf16.msra.mxu0 %v326
    %378 = vmatpush.bf16.msra.mxu0 %v322
    %379 = vmatpush.bf16.msra.mxu0 %v318
    %380 = vmatpush.bf16.msra.mxu0 %v314
    %381 = vmatpush.bf16.msra.mxu0 %v310
    %382 = vmatmul.bf16.gmra.mxu0 %v168
    %v383 = vpop.f32.mrf.mxu0
    %v384 = vadd.f32 %v206, %v383
    %v385 = vpop.f32.mrf.mxu0
    %v386 = vadd.f32 %v206, %v385
    %387 = vmatmul.bf16.gmra.mxu0 %v169
    %v388 = vpop.f32.mrf.mxu0
    %v389 = vadd.f32 %v206, %v388
    %v390 = vpop.f32.mrf.mxu0
    %v391 = vadd.f32 %v206, %v390
    %392 = vmatmul.bf16.gmra.mxu0 %v170
    %v393 = vpop.f32.mrf.mxu0
    %v394 = vadd.f32 %v206, %v393
    %v395 = vpop.f32.mrf.mxu0
    %v396 = vadd.f32 %v206, %v395
    %397 = vmatmul.bf16.gmra.mxu0 %v171
    %v398 = vpop.f32.mrf.mxu0
    %v399 = vadd.f32 %v206, %v398
    %v400 = vpop.f32.mrf.mxu0
    %v401 = vadd.f32 %v206, %v400
    %402 = vdwg.mxu0
    %403 = vmatpush.bf16.msra.mxu0 %v339
    %404 = vmatpush.bf16.msra.mxu0 %v335
    %405 = vmatpush.bf16.msra.mxu0 %v331
    %406 = vmatpush.bf16.msra.mxu0 %v327
    %407 = vmatpush.bf16.msra.mxu0 %v323
    %408 = vmatpush.bf16.msra.mxu0 %v319
    %409 = vmatpush.bf16.msra.mxu0 %v315
    %410 = vmatpush.bf16.msra.mxu0 %v311
    %411 = vmatmul.bf16.gmra.mxu0 %v168
    %v412 = vpop.f32.mrf.mxu0
    %v413 = vadd.f32 %v207, %v412
    %v414 = vpop.f32.mrf.mxu0
    %v415 = vadd.f32 %v207, %v414
    %416 = vmatmul.bf16.gmra.mxu0 %v169
    %v417 = vpop.f32.mrf.mxu0
    %v418 = vadd.f32 %v207, %v417
    %v419 = vpop.f32.mrf.mxu0
    %v420 = vadd.f32 %v207, %v419
    %421 = vmatmul.bf16.gmra.mxu0 %v170
    %v422 = vpop.f32.mrf.mxu0
    %v423 = vadd.f32 %v207, %v422
    %v424 = vpop.f32.mrf.mxu0
    %v425 = vadd.f32 %v207, %v424
    %426 = vmatmul.bf16.gmra.mxu0 %v171
    %v427 = vpop.f32.mrf.mxu0
    %v428 = vadd.f32 %v207, %v427
    %v429 = vpop.f32.mrf.mxu0
    %v430 = vadd.f32 %v207, %v429
    %431 = vdwg.mxu0
    %432 = vmatpush.bf16.msra.mxu0 %v340
    %433 = vmatpush.bf16.msra.mxu0 %v336
    %434 = vmatpush.bf16.msra.mxu0 %v332
    %435 = vmatpush.bf16.msra.mxu0 %v328
    %436 = vmatpush.bf16.msra.mxu0 %v324
    %437 = vmatpush.bf16.msra.mxu0 %v320
    %438 = vmatpush.bf16.msra.mxu0 %v316
    %439 = vmatpush.bf16.msra.mxu0 %v312
    %440 = vmatmul.bf16.gmra.mxu0 %v168
    %v441 = vpop.f32.mrf.mxu0
    %v442 = vadd.f32 %v208, %v441
    %v443 = vpop.f32.mrf.mxu0
    %v444 = vadd.f32 %v208, %v443
    %445 = vmatmul.bf16.gmra.mxu0 %v169
    %v446 = vpop.f32.mrf.mxu0
    %v447 = vadd.f32 %v208, %v446
    %v448 = vpop.f32.mrf.mxu0
    %v449 = vadd.f32 %v208, %v448
    %450 = vmatmul.bf16.gmra.mxu0 %v170
    %v451 = vpop.f32.mrf.mxu0
    %v452 = vadd.f32 %v208, %v451
    %v453 = vpop.f32.mrf.mxu0
    %v454 = vadd.f32 %v208, %v453
    %455 = vmatmul.bf16.gmra.mxu0 %v171
    %v456 = vpop.f32.mrf.mxu0
    %v457 = vadd.f32 %v208, %v456
    %v458 = vpop.f32.mrf.mxu0
    %v459 = vadd.f32 %v208, %v458
    %460 = vdwg.mxu0
    %461 = vmatpush.bf16.msra.mxu0 %v341
    %462 = vmatpush.bf16.msra.mxu0 %v337
    %463 = vmatpush.bf16.msra.mxu0 %v333
    %464 = vmatpush.bf16.msra.mxu0 %v329
    %465 = vmatpush.bf16.msra.mxu0 %v325
    %466 = vmatpush.bf16.msra.mxu0 %v321
    %467 = vmatpush.bf16.msra.mxu0 %v317
    %468 = vmatpush.bf16.msra.mxu0 %v313
    %469 = vmatmul.bf16.gmra.mxu0 %v168
    %v470 = vpop.f32.mrf.mxu0
    %v471 = vadd.f32 %v209, %v470
    %v472 = vpop.f32.mrf.mxu0
    %v473 = vadd.f32 %v209, %v472
    %474 = vmatmul.bf16.gmra.mxu0 %v169
    %v475 = vpop.f32.mrf.mxu0
    %v476 = vadd.f32 %v209, %v475
    %v477 = vpop.f32.mrf.mxu0
    %v478 = vadd.f32 %v209, %v477
    %479 = vmatmul.bf16.gmra.mxu0 %v170
    %v480 = vpop.f32.mrf.mxu0
    %v481 = vadd.f32 %v209, %v480
    %v482 = vpop.f32.mrf.mxu0
    %v483 = vadd.f32 %v209, %v482
    %484 = vmatmul.bf16.gmra.mxu0 %v171
    %v485 = vpop.f32.mrf.mxu0
    %v486 = vadd.f32 %v209, %v485
    %v487 = vpop.f32.mrf.mxu0
    %v488 = vadd.f32 %v209, %v487
    %489 = vdwg.mxu0
    %490 = vst [vmem:[#allocation2] sm:$0xff] %v384
    %491 = vst [vmem:[#allocation2 + $0x8] sm:$0xff] %v413
    %492 = vst [vmem:[#allocation2 + $0x10] sm:$0xff] %v442
    %493 = vst [vmem:[#allocation2 + $0x18] sm:$0xff] %v471
    %494 = vst [vmem:[#allocation2 + $0x20] sm:$0xff] %v386
    %495 = vst [vmem:[#allocation2 + $0x28] sm:$0xff] %v415
    %496 = vst [vmem:[#allocation2 + $0x30] sm:$0xff] %v444
    %497 = vst [vmem:[#allocation2 + $0x38] sm:$0xff] %v473
    %498 = vst [vmem:[#allocation2 + $0x40] sm:$0xff] %v389
    %499 = vst [vmem:[#allocation2 + $0x48] sm:$0xff] %v418
    %500 = vst [vmem:[#allocation2 + $0x50] sm:$0xff] %v447
    %501 = vst [vmem:[#allocation2 + $0x58] sm:$0xff] %v476
    %502 = vst [vmem:[#allocation2 + $0x60] sm:$0xff] %v391
    %503 = vst [vmem:[#allocation2 + $0x68] sm:$0xff] %v420
    %504 = vst [vmem:[#allocation2 + $0x70] sm:$0xff] %v449
    %505 = vst [vmem:[#allocation2 + $0x78] sm:$0xff] %v478
    %506 = vst [vmem:[#allocation2 + $0x80] sm:$0xff] %v394
    %507 = vst [vmem:[#allocation2 + $0x88] sm:$0xff] %v423
    %508 = vst [vmem:[#allocation2 + $0x90] sm:$0xff] %v452
    %509 = vst [vmem:[#allocation2 + $0x98] sm:$0xff] %v481
    %510 = vst [vmem:[#allocation2 + $0xa0] sm:$0xff] %v396
    %511 = vst [vmem:[#allocation2 + $0xa8] sm:$0xff] %v425
    %512 = vst [vmem:[#allocation2 + $0xb0] sm:$0xff] %v454
    %513 = vst [vmem:[#allocation2 + $0xb8] sm:$0xff] %v483
    %514 = vst [vmem:[#allocation2 + $0xc0] sm:$0xff] %v399
    %515 = vst [vmem:[#allocation2 + $0xc8] sm:$0xff] %v428
    %516 = vst [vmem:[#allocation2 + $0xd0] sm:$0xff] %v457
    %517 = vst [vmem:[#allocation2 + $0xd8] sm:$0xff] %v486
    %518 = vst [vmem:[#allocation2 + $0xe0] sm:$0xff] %v401
    %519 = vst [vmem:[#allocation2 + $0xe8] sm:$0xff] %v430
    %520 = vst [vmem:[#allocation2 + $0xf0] sm:$0xff] %v459
    %521 = vst [vmem:[#allocation2 + $0xf8] sm:$0xff] %v488
    %v522 = vld [vmem:[#allocation14] sm:$0xff]
    %v523 = vld [vmem:[#allocation15] sm:$0xff]
    %v524 = vld [vmem:[#allocation2] sm:$0xff]
    %v525 = vld [vmem:[#allocation2 + $0x8] sm:$0xff]
    %v526 = vld [vmem:[#allocation2 + $0x10] sm:$0xff]
    %v527 = vld [vmem:[#allocation2 + $0x18] sm:$0xff]
    %v528 = vpack.c.bf16 %v522, %v522
    %v529 = vld [vmem:[#allocation9] sm:$0xff]
    %v530 = vld [vmem:[#allocation9 + $0x8] sm:$0xff]
    %v531 = vld [vmem:[#allocation9 + $0x10] sm:$0xff]
    %v532 = vld [vmem:[#allocation9 + $0x18] sm:$0xff]
    %v533 = vld [vmem:[#allocation9 + $0x20] sm:$0xff]
    %v534 = vld [vmem:[#allocation9 + $0x28] sm:$0xff]
    %v535 = vld [vmem:[#allocation9 + $0x30] sm:$0xff]
    %v536 = vld [vmem:[#allocation9 + $0x38] sm:$0xff]
    %v537 = vld [vmem:[#allocation9 + $0x40] sm:$0xff]
    %v538 = vld [vmem:[#allocation9 + $0x48] sm:$0xff]
    %v539 = vld [vmem:[#allocation9 + $0x50] sm:$0xff]
    %v540 = vld [vmem:[#allocation9 + $0x58] sm:$0xff]
    %v541 = vld [vmem:[#allocation9 + $0x60] sm:$0xff]
    %v542 = vld [vmem:[#allocation9 + $0x68] sm:$0xff]
    %v543 = vld [vmem:[#allocation9 + $0x70] sm:$0xff]
    %v544 = vld [vmem:[#allocation9 + $0x78] sm:$0xff]
    %v545 = vld [vmem:[#allocation9 + $0x80] sm:$0xff]
    %v546 = vld [vmem:[#allocation9 + $0x88] sm:$0xff]
    %v547 = vld [vmem:[#allocation9 + $0x90] sm:$0xff]
    %v548 = vld [vmem:[#allocation9 + $0x98] sm:$0xff]
    %v549 = vld [vmem:[#allocation9 + $0xa0] sm:$0xff]
    %v550 = vld [vmem:[#allocation9 + $0xa8] sm:$0xff]
    %v551 = vld [vmem:[#allocation9 + $0xb0] sm:$0xff]
    %v552 = vld [vmem:[#allocation9 + $0xb8] sm:$0xff]
    %v553 = vld [vmem:[#allocation9 + $0xc0] sm:$0xff]
    %v554 = vld [vmem:[#allocation9 + $0xc8] sm:$0xff]
    %v555 = vld [vmem:[#allocation9 + $0xd0] sm:$0xff]
    %v556 = vld [vmem:[#allocation9 + $0xd8] sm:$0xff]
    %v557 = vld [vmem:[#allocation9 + $0xe0] sm:$0xff]
    %v558 = vld [vmem:[#allocation9 + $0xe8] sm:$0xff]
    %v559 = vld [vmem:[#allocation9 + $0xf0] sm:$0xff]
    %v560 = vld [vmem:[#allocation9 + $0xf8] sm:$0xff]
    %v593 = vunpack.c.l.b16 %v529
    %v594 = vunpack.c.h.b16 %v529
    %v595 = vunpack.c.l.b16 %v530
    %v596 = vunpack.c.h.b16 %v530
    %v597 = vunpack.c.l.b16 %v531
    %v598 = vunpack.c.h.b16 %v531
    %v599 = vunpack.c.l.b16 %v532
    %v600 = vunpack.c.h.b16 %v532
    %v601 = vunpack.c.l.b16 %v533
    %v602 = vunpack.c.h.b16 %v533
    %v603 = vunpack.c.l.b16 %v534
    %v604 = vunpack.c.h.b16 %v534
    %v605 = vunpack.c.l.b16 %v535
    %v606 = vunpack.c.h.b16 %v535
    %v607 = vunpack.c.l.b16 %v536
    %v608 = vunpack.c.h.b16 %v536
    %v609 = vunpack.c.l.b16 %v537
    %v610 = vunpack.c.h.b16 %v537
    %v611 = vunpack.c.l.b16 %v538
    %v612 = vunpack.c.h.b16 %v538
    %v613 = vunpack.c.l.b16 %v539
    %v614 = vunpack.c.h.b16 %v539
    %v615 = vunpack.c.l.b16 %v540
    %v616 = vunpack.c.h.b16 %v540
    %v617 = vunpack.c.l.b16 %v541
    %v618 = vunpack.c.h.b16 %v541
    %v619 = vunpack.c.l.b16 %v542
    %v620 = vunpack.c.h.b16 %v542
    %v621 = vunpack.c.l.b16 %v543
    %v622 = vunpack.c.h.b16 %v543
    %v623 = vunpack.c.l.b16 %v544
    %v624 = vunpack.c.h.b16 %v544
    %v625 = vunpack.c.l.b16 %v545
    %v626 = vunpack.c.h.b16 %v545
    %v627 = vunpack.c.l.b16 %v546
    %v628 = vunpack.c.h.b16 %v546
    %v629 = vunpack.c.l.b16 %v547
    %v630 = vunpack.c.h.b16 %v547
    %v631 = vunpack.c.l.b16 %v548
    %v632 = vunpack.c.h.b16 %v548
    %v633 = vunpack.c.l.b16 %v549
    %v634 = vunpack.c.h.b16 %v549
    %v635 = vunpack.c.l.b16 %v550
    %v636 = vunpack.c.h.b16 %v550
    %v637 = vunpack.c.l.b16 %v551
    %v638 = vunpack.c.h.b16 %v551
    %v639 = vunpack.c.l.b16 %v552
    %v640 = vunpack.c.h.b16 %v552
    %v641 = vunpack.c.l.b16 %v553
    %v642 = vunpack.c.h.b16 %v553
    %v643 = vunpack.c.l.b16 %v554
    %v644 = vunpack.c.h.b16 %v554
    %v645 = vunpack.c.l.b16 %v555
    %v646 = vunpack.c.h.b16 %v555
    %v647 = vunpack.c.l.b16 %v556
    %v648 = vunpack.c.h.b16 %v556
    %v649 = vunpack.c.l.b16 %v557
    %v650 = vunpack.c.h.b16 %v557
    %v651 = vunpack.c.l.b16 %v558
    %v652 = vunpack.c.h.b16 %v558
    %v653 = vunpack.c.l.b16 %v559
    %v654 = vunpack.c.h.b16 %v559
    %v655 = vunpack.c.l.b16 %v560
    %v656 = vunpack.c.h.b16 %v560
    %v657 = vpack.c.b16 %v597, %v593
    %v658 = vpack.c.b16 %v598, %v594
    %v659 = vpack.c.b16 %v599, %v595
    %v660 = vpack.c.b16 %v600, %v596
    %v661 = vpack.c.b16 %v605, %v601
    %v662 = vpack.c.b16 %v606, %v602
    %v663 = vpack.c.b16 %v607, %v603
    %v664 = vpack.c.b16 %v608, %v604
    %v665 = vpack.c.b16 %v613, %v609
    %v666 = vpack.c.b16 %v614, %v610
    %v667 = vpack.c.b16 %v615, %v611
    %v668 = vpack.c.b16 %v616, %v612
    %v669 = vpack.c.b16 %v621, %v617
    %v670 = vpack.c.b16 %v622, %v618
    %v671 = vpack.c.b16 %v623, %v619
    %v672 = vpack.c.b16 %v624, %v620
    %v673 = vpack.c.b16 %v629, %v625
    %v674 = vpack.c.b16 %v630, %v626
    %v675 = vpack.c.b16 %v631, %v627
    %v676 = vpack.c.b16 %v632, %v628
    %v677 = vpack.c.b16 %v637, %v633
    %v678 = vpack.c.b16 %v638, %v634
    %v679 = vpack.c.b16 %v639, %v635
    %v680 = vpack.c.b16 %v640, %v636
    %v681 = vpack.c.b16 %v645, %v641
    %v682 = vpack.c.b16 %v646, %v642
    %v683 = vpack.c.b16 %v647, %v643
    %v684 = vpack.c.b16 %v648, %v644
    %v685 = vpack.c.b16 %v653, %v649
    %v686 = vpack.c.b16 %v654, %v650
    %v687 = vpack.c.b16 %v655, %v651
    %v688 = vpack.c.b16 %v656, %v652
    %721 = vmatpush.bf16.msra.mxu0 %v685
    %722 = vmatpush.bf16.msra.mxu0 %v681
    %723 = vmatpush.bf16.msra.mxu0 %v677
    %724 = vmatpush.bf16.msra.mxu0 %v673
    %725 = vmatpush.bf16.msra.mxu0 %v669
    %726 = vmatpush.bf16.msra.mxu0 %v665
    %727 = vmatpush.bf16.msra.mxu0 %v661
    %728 = vmatpush.bf16.msra.mxu0 %v657
    %729 = vmatmul.bf16.gmra.mxu0 %v528
    %v730 = vpop.f32.mrf.mxu0
    %v731 = vadd.f32 0.0, %v730
    %v732 = vpop.f32.mrf.mxu0
    %733 = vdwg.mxu0
    %734 = vmatpush.bf16.msra.mxu0 %v686
    %735 = vmatpush.bf16.msra.mxu0 %v682
    %736 = vmatpush.bf16.msra.mxu0 %v678
    %737 = vmatpush.bf16.msra.mxu0 %v674
    %738 = vmatpush.bf16.msra.mxu0 %v670
    %739 = vmatpush.bf16.msra.mxu0 %v666
    %740 = vmatpush.bf16.msra.mxu0 %v662
    %741 = vmatpush.bf16.msra.mxu0 %v658
    %742 = vmatmul.bf16.gmra.mxu0 %v528
    %v743 = vpop.f32.mrf.mxu0
    %v744 = vadd.f32 0.0, %v743
    %v745 = vpop.f32.mrf.mxu0
    %746 = vdwg.mxu0
    %747 = vmatpush.bf16.msra.mxu0 %v687
    %748 = vmatpush.bf16.msra.mxu0 %v683
    %749 = vmatpush.bf16.msra.mxu0 %v679
    %750 = vmatpush.bf16.msra.mxu0 %v675
    %751 = vmatpush.bf16.msra.mxu0 %v671
    %752 = vmatpush.bf16.msra.mxu0 %v667
    %753 = vmatpush.bf16.msra.mxu0 %v663
    %754 = vmatpush.bf16.msra.mxu0 %v659
    %755 = vmatmul.bf16.gmra.mxu0 %v528
    %v756 = vpop.f32.mrf.mxu0
    %v757 = vadd.f32 0.0, %v756
    %v758 = vpop.f32.mrf.mxu0
    %759 = vdwg.mxu0
    %760 = vmatpush.bf16.msra.mxu0 %v688
    %761 = vmatpush.bf16.msra.mxu0 %v684
    %762 = vmatpush.bf16.msra.mxu0 %v680
    %763 = vmatpush.bf16.msra.mxu0 %v676
    %764 = vmatpush.bf16.msra.mxu0 %v672
    %765 = vmatpush.bf16.msra.mxu0 %v668
    %766 = vmatpush.bf16.msra.mxu0 %v664
    %767 = vmatpush.bf16.msra.mxu0 %v660
    %768 = vmatmul.bf16.gmra.mxu0 %v528
    %v769 = vpop.f32.mrf.mxu0
    %v770 = vadd.f32 0.0, %v769
    %v771 = vpop.f32.mrf.mxu0
    %772 = vdwg.mxu0
    %v773 = vadd.f32 %v524, %v731
    %v774 = vadd.f32 %v525, %v744
    %v775 = vadd.f32 %v526, %v757
    %v776 = vadd.f32 %v527, %v770
    %v777 = vmul.f32 %v773, 0.5
    %v778 = vtanh.pop %v777
    %v779 = vmul.f32 %v778, 0.5
    %v780 = vadd.f32 %v779, 0.5
    %v781 = vmul.f32 %v774, 0.5
    %v782 = vtanh.pop %v781
    %v783 = vmul.f32 %v782, 0.5
    %v784 = vadd.f32 %v783, 0.5
    %v785 = vtanh.pop %v775
    %v786 = vmul.f32 %v776, 0.5
    %v787 = vtanh.pop %v786
    %v788 = vmul.f32 %v787, 0.5
    %v789 = vadd.f32 %v788, 0.5
    %v790 = vmul.f32 %v784, %v523
    %v791 = vmul.f32 %v780, %v785
    %v792 = vadd.f32 %v790, %v791
    %v793 = vtanh.pop %v792
    %v794 = vmul.f32 %v789, %v793
    %795 = vst [vmem:[#allocation17] sm:$0xff] %v794
    %s796 = scalar_lea.vmem [#allocation2], 32
    %v797 = vld [vmem:[%s796] sm:$0xff]
    %v798 = vld [vmem:[%s796 + $0x8] sm:$0xff]
    %v799 = vld [vmem:[%s796 + $0x10] sm:$0xff]
    %v800 = vld [vmem:[%s796 + $0x18] sm:$0xff]
    %v801 = vpack.c.bf16 %v794, %v794
    %v802 = vld [vmem:[#allocation9] sm:$0xff]
    %v803 = vld [vmem:[#allocation9 + $0x8] sm:$0xff]
    %v804 = vld [vmem:[#allocation9 + $0x10] sm:$0xff]
    %v805 = vld [vmem:[#allocation9 + $0x18] sm:$0xff]
    %v806 = vld [vmem:[#allocation9 + $0x20] sm:$0xff]
    %v807 = vld [vmem:[#allocation9 + $0x28] sm:$0xff]
    %v808 = vld [vmem:[#allocation9 + $0x30] sm:$0xff]
    %v809 = vld [vmem:[#allocation9 + $0x38] sm:$0xff]
    %v810 = vld [vmem:[#allocation9 + $0x40] sm:$0xff]
    %v811 = vld [vmem:[#allocation9 + $0x48] sm:$0xff]
    %v812 = vld [vmem:[#allocation9 + $0x50] sm:$0xff]
    %v813 = vld [vmem:[#allocation9 + $0x58] sm:$0xff]
    %v814 = vld [vmem:[#allocation9 + $0x60] sm:$0xff]
    %v815 = vld [vmem:[#allocation9 + $0x68] sm:$0xff]
    %v816 = vld [vmem:[#allocation9 + $0x70] sm:$0xff]
    %v817 = vld [vmem:[#allocation9 + $0x78] sm:$0xff]
    %v818 = vld [vmem:[#allocation9 + $0x80] sm:$0xff]
    %v819 = vld [vmem:[#allocation9 + $0x88] sm:$0xff]
    %v820 = vld [vmem:[#allocation9 + $0x90] sm:$0xff]
    %v821 = vld [vmem:[#allocation9 + $0x98] sm:$0xff]
    %v822 = vld [vmem:[#allocation9 + $0xa0] sm:$0xff]
    %v823 = vld [vmem:[#allocation9 + $0xa8] sm:$0xff]
    %v824 = vld [vmem:[#allocation9 + $0xb0] sm:$0xff]
    %v825 = vld [vmem:[#allocation9 + $0xb8] sm:$0xff]
    %v826 = vld [vmem:[#allocation9 + $0xc0] sm:$0xff]
    %v827 = vld [vmem:[#allocation9 + $0xc8] sm:$0xff]
    %v828 = vld [vmem:[#allocation9 + $0xd0] sm:$0xff]
    %v829 = vld [vmem:[#allocation9 + $0xd8] sm:$0xff]
    %v830 = vld [vmem:[#allocation9 + $0xe0] sm:$0xff]
    %v831 = vld [vmem:[#allocation9 + $0xe8] sm:$0xff]
    %v832 = vld [vmem:[#allocation9 + $0xf0] sm:$0xff]
    %v833 = vld [vmem:[#allocation9 + $0xf8] sm:$0xff]
    %v866 = vunpack.c.l.b16 %v802
    %v867 = vunpack.c.h.b16 %v802
    %v868 = vunpack.c.l.b16 %v803
    %v869 = vunpack.c.h.b16 %v803
    %v870 = vunpack.c.l.b16 %v804
    %v871 = vunpack.c.h.b16 %v804
    %v872 = vunpack.c.l.b16 %v805
    %v873 = vunpack.c.h.b16 %v805
    %v874 = vunpack.c.l.b16 %v806
    %v875 = vunpack.c.h.b16 %v806
    %v876 = vunpack.c.l.b16 %v807
    %v877 = vunpack.c.h.b16 %v807
    %v878 = vunpack.c.l.b16 %v808
    %v879 = vunpack.c.h.b16 %v808
    %v880 = vunpack.c.l.b16 %v809
    %v881 = vunpack.c.h.b16 %v809
    %v882 = vunpack.c.l.b16 %v810
    %v883 = vunpack.c.h.b16 %v810
    %v884 = vunpack.c.l.b16 %v811
    %v885 = vunpack.c.h.b16 %v811
    %v886 = vunpack.c.l.b16 %v812
    %v887 = vunpack.c.h.b16 %v812
    %v888 = vunpack.c.l.b16 %v813
    %v889 = vunpack.c.h.b16 %v813
    %v890 = vunpack.c.l.b16 %v814
    %v891 = vunpack.c.h.b16 %v814
    %v892 = vunpack.c.l.b16 %v815
    %v893 = vunpack.c.h.b16 %v815
    %v894 = vunpack.c.l.b16 %v816
    %v895 = vunpack.c.h.b16 %v816
    %v896 = vunpack.c.l.b16 %v817
    %v897 = vunpack.c.h.b16 %v817
    %v898 = vunpack.c.l.b16 %v818
    %v899 = vunpack.c.h.b16 %v818
    %v900 = vunpack.c.l.b16 %v819
    %v901 = vunpack.c.h.b16 %v819
    %v902 = vunpack.c.l.b16 %v820
    %v903 = vunpack.c.h.b16 %v820
    %v904 = vunpack.c.l.b16 %v821
    %v905 = vunpack.c.h.b16 %v821
    %v906 = vunpack.c.l.b16 %v822
    %v907 = vunpack.c.h.b16 %v822
    %v908 = vunpack.c.l.b16 %v823
    %v909 = vunpack.c.h.b16 %v823
    %v910 = vunpack.c.l.b16 %v824
    %v911 = vunpack.c.h.b16 %v824
    %v912 = vunpack.c.l.b16 %v825
    %v913 = vunpack.c.h.b16 %v825
    %v914 = vunpack.c.l.b16 %v826
    %v915 = vunpack.c.h.b16 %v826
    %v916 = vunpack.c.l.b16 %v827
    %v917 = vunpack.c.h.b16 %v827
    %v918 = vunpack.c.l.b16 %v828
    %v919 = vunpack.c.h.b16 %v828
    %v920 = vunpack.c.l.b16 %v829
    %v921 = vunpack.c.h.b16 %v829
    %v922 = vunpack.c.l.b16 %v830
    %v923 = vunpack.c.h.b16 %v830
    %v924 = vunpack.c.l.b16 %v831
    %v925 = vunpack.c.h.b16 %v831
    %v926 = vunpack.c.l.b16 %v832
    %v927 = vunpack.c.h.b16 %v832
    %v928 = vunpack.c.l.b16 %v833
    %v929 = vunpack.c.h.b16 %v833
    %v930 = vpack.c.b16 %v870, %v866
    %v931 = vpack.c.b16 %v871, %v867
    %v932 = vpack.c.b16 %v872, %v868
    %v933 = vpack.c.b16 %v873, %v869
    %v934 = vpack.c.b16 %v878, %v874
    %v935 = vpack.c.b16 %v879, %v875
    %v936 = vpack.c.b16 %v880, %v876
    %v937 = vpack.c.b16 %v881, %v877
    %v938 = vpack.c.b16 %v886, %v882
    %v939 = vpack.c.b16 %v887, %v883
    %v940 = vpack.c.b16 %v888, %v884
    %v941 = vpack.c.b16 %v889, %v885
    %v942 = vpack.c.b16 %v894, %v890
    %v943 = vpack.c.b16 %v895, %v891
    %v944 = vpack.c.b16 %v896, %v892
    %v945 = vpack.c.b16 %v897, %v893
    %v946 = vpack.c.b16 %v902, %v898
    %v947 = vpack.c.b16 %v903, %v899
    %v948 = vpack.c.b16 %v904, %v900
    %v949 = vpack.c.b16 %v905, %v901
    %v950 = vpack.c.b16 %v910, %v906
    %v951 = vpack.c.b16 %v911, %v907
    %v952 = vpack.c.b16 %v912, %v908
    %v953 = vpack.c.b16 %v913, %v909
    %v954 = vpack.c.b16 %v918, %v914
    %v955 = vpack.c.b16 %v919, %v915
    %v956 = vpack.c.b16 %v920, %v916
    %v957 = vpack.c.b16 %v921, %v917
    %v958 = vpack.c.b16 %v926, %v922
    %v959 = vpack.c.b16 %v927, %v923
    %v960 = vpack.c.b16 %v928, %v924
    %v961 = vpack.c.b16 %v929, %v925
    %994 = vmatpush.bf16.msra.mxu0 %v958
    %995 = vmatpush.bf16.msra.mxu0 %v954
    %996 = vmatpush.bf16.msra.mxu0 %v950
    %997 = vmatpush.bf16.msra.mxu0 %v946
    %998 = vmatpush.bf16.msra.mxu0 %v942
    %999 = vmatpush.bf16.msra.mxu0 %v938
    %1000 = vmatpush.bf16.msra.mxu0 %v934
    %1001 = vmatpush.bf16.msra.mxu0 %v930
    %1002 = vmatmul.bf16.gmra.mxu0 %v801
    %v1003 = vpop.f32.mrf.mxu0
    %v1004 = vadd.f32 0.0, %v1003
    %v1005 = vpop.f32.mrf.mxu0
    %1006 = vdwg.mxu0
    %1007 = vmatpush.bf16.msra.mxu0 %v959
    %1008 = vmatpush.bf16.msra.mxu0 %v955
    %1009 = vmatpush.bf16.msra.mxu0 %v951
    %1010 = vmatpush.bf16.msra.mxu0 %v947
    %1011 = vmatpush.bf16.msra.mxu0 %v943
    %1012 = vmatpush.bf16.msra.mxu0 %v939
    %1013 = vmatpush.bf16.msra.mxu0 %v935
    %1014 = vmatpush.bf16.msra.mxu0 %v931
    %1015 = vmatmul.bf16.gmra.mxu0 %v801
    %v1016 = vpop.f32.mrf.mxu0
    %v1017 = vadd.f32 0.0, %v1016
    %v1018 = vpop.f32.mrf.mxu0
    %1019 = vdwg.mxu0
    %1020 = vmatpush.bf16.msra.mxu0 %v960
    %1021 = vmatpush.bf16.msra.mxu0 %v956
    %1022 = vmatpush.bf16.msra.mxu0 %v952
    %1023 = vmatpush.bf16.msra.mxu0 %v948
    %1024 = vmatpush.bf16.msra.mxu0 %v944
    %1025 = vmatpush.bf16.msra.mxu0 %v940
    %1026 = vmatpush.bf16.msra.mxu0 %v936
    %1027 = vmatpush.bf16.msra.mxu0 %v932
    %1028 = vmatmul.bf16.gmra.mxu0 %v801
    %v1029 = vpop.f32.mrf.mxu0
    %v1030 = vadd.f32 0.0, %v1029
    %v1031 = vpop.f32.mrf.mxu0
    %1032 = vdwg.mxu0
    %1033 = vmatpush.bf16.msra.mxu0 %v961
    %1034 = vmatpush.bf16.msra.mxu0 %v957
    %1035 = vmatpush.bf16.msra.mxu0 %v953
    %1036 = vmatpush.bf16.msra.mxu0 %v949
    %1037 = vmatpush.bf16.msra.mxu0 %v945
    %1038 = vmatpush.bf16.msra.mxu0 %v941
    %1039 = vmatpush.bf16.msra.mxu0 %v937
    %1040 = vmatpush.bf16.msra.mxu0 %v933
    %1041 = vmatmul.bf16.gmra.mxu0 %v801
    %v1042 = vpop.f32.mrf.mxu0
    %v1043 = vadd.f32 0.0, %v1042
    %v1044 = vpop.f32.mrf.mxu0
    %1045 = vdwg.mxu0
    %v1046 = vadd.f32 %v797, %v1004
    %v1047 = vadd.f32 %v798, %v1017
    %v1048 = vadd.f32 %v799, %v1030
    %v1049 = vadd.f32 %v800, %v1043
    %v1050 = vmul.f32 %v1046, 0.5
    %v1051 = vtanh.pop %v1050
    %v1052 = vmul.f32 %v1051, 0.5
    %v1053 = vadd.f32 %v1052, 0.5
    %v1054 = vmul.f32 %v1047, 0.5
    %v1055 = vtanh.pop %v1054
    %v1056 = vmul.f32 %v1055, 0.5
    %v1057 = vadd.f32 %v1056, 0.5
    %v1058 = vtanh.pop %v1048
    %v1059 = vmul.f32 %v1049, 0.5
    %v1060 = vtanh.pop %v1059
    %v1061 = vmul.f32 %v1060, 0.5
    %v1062 = vadd.f32 %v1061, 0.5
    %v1063 = vmul.f32 %v1057, %v792
    %v1064 = vmul.f32 %v1053, %v1058
    %v1065 = vadd.f32 %v1063, %v1064
    %v1066 = vtanh.pop %v1065
    %v1067 = vmul.f32 %v1062, %v1066
    %s1068 = scalar_lea.vmem [#allocation17], 8
    %1069 = vst [vmem:[%s1068] sm:$0xff] %v1067
    %s1070 = scalar_lea.vmem [#allocation2], 64
    %v1071 = vld [vmem:[%s1070] sm:$0xff]
    %v1072 = vld [vmem:[%s1070 + $0x8] sm:$0xff]
    %v1073 = vld [vmem:[%s1070 + $0x10] sm:$0xff]
    %v1074 = vld [vmem:[%s1070 + $0x18] sm:$0xff]
    %v1075 = vpack.c.bf16 %v1067, %v1067
    %v1076 = vld [vmem:[#allocation9] sm:$0xff]
    %v1077 = vld [vmem:[#allocation9 + $0x8] sm:$0xff]
    %v1078 = vld [vmem:[#allocation9 + $0x10] sm:$0xff]
    %v1079 = vld [vmem:[#allocation9 + $0x18] sm:$0xff]
    %v1080 = vld [vmem:[#allocation9 + $0x20] sm:$0xff]
    %v1081 = vld [vmem:[#allocation9 + $0x28] sm:$0xff]
    %v1082 = vld [vmem:[#allocation9 + $0x30] sm:$0xff]
    %v1083 = vld [vmem:[#allocation9 + $0x38] sm:$0xff]
    %v1084 = vld [vmem:[#allocation9 + $0x40] sm:$0xff]
    %v1085 = vld [vmem:[#allocation9 + $0x48] sm:$0xff]
    %v1086 = vld [vmem:[#allocation9 + $0x50] sm:$0xff]
    %v1087 = vld [vmem:[#allocation9 + $0x58] sm:$0xff]
    %v1088 = vld [vmem:[#allocation9 + $0x60] sm:$0xff]
    %v1089 = vld [vmem:[#allocation9 + $0x68] sm:$0xff]
    %v1090 = vld [vmem:[#allocation9 + $0x70] sm:$0xff]
    %v1091 = vld [vmem:[#allocation9 + $0x78] sm:$0xff]
    %v1092 = vld [vmem:[#allocation9 + $0x80] sm:$0xff]
    %v1093 = vld [vmem:[#allocation9 + $0x88] sm:$0xff]
    %v1094 = vld [vmem:[#allocation9 + $0x90] sm:$0xff]
    %v1095 = vld [vmem:[#allocation9 + $0x98] sm:$0xff]
    %v1096 = vld [vmem:[#allocation9 + $0xa0] sm:$0xff]
    %v1097 = vld [vmem:[#allocation9 + $0xa8] sm:$0xff]
    %v1098 = vld [vmem:[#allocation9 + $0xb0] sm:$0xff]
    %v1099 = vld [vmem:[#allocation9 + $0xb8] sm:$0xff]
    %v1100 = vld [vmem:[#allocation9 + $0xc0] sm:$0xff]
    %v1101 = vld [vmem:[#allocation9 + $0xc8] sm:$0xff]
    %v1102 = vld [vmem:[#allocation9 + $0xd0] sm:$0xff]
    %v1103 = vld [vmem:[#allocation9 + $0xd8] sm:$0xff]
    %v1104 = vld [vmem:[#allocation9 + $0xe0] sm:$0xff]
    %v1105 = vld [vmem:[#allocation9 + $0xe8] sm:$0xff]
    %v1106 = vld [vmem:[#allocation9 + $0xf0] sm:$0xff]
    %v1107 = vld [vmem:[#allocation9 + $0xf8] sm:$0xff]
    %v1140 = vunpack.c.l.b16 %v1076
    %v1141 = vunpack.c.h.b16 %v1076
    %v1142 = vunpack.c.l.b16 %v1077
    %v1143 = vunpack.c.h.b16 %v1077
    %v1144 = vunpack.c.l.b16 %v1078
    %v1145 = vunpack.c.h.b16 %v1078
    %v1146 = vunpack.c.l.b16 %v1079
    %v1147 = vunpack.c.h.b16 %v1079
    %v1148 = vunpack.c.l.b16 %v1080
    %v1149 = vunpack.c.h.b16 %v1080
    %v1150 = vunpack.c.l.b16 %v1081
    %v1151 = vunpack.c.h.b16 %v1081
    %v1152 = vunpack.c.l.b16 %v1082
    %v1153 = vunpack.c.h.b16 %v1082
    %v1154 = vunpack.c.l.b16 %v1083
    %v1155 = vunpack.c.h.b16 %v1083
    %v1156 = vunpack.c.l.b16 %v1084
    %v1157 = vunpack.c.h.b16 %v1084
    %v1158 = vunpack.c.l.b16 %v1085
    %v1159 = vunpack.c.h.b16 %v1085
    %v1160 = vunpack.c.l.b16 %v1086
    %v1161 = vunpack.c.h.b16 %v1086
    %v1162 = vunpack.c.l.b16 %v1087
    %v1163 = vunpack.c.h.b16 %v1087
    %v1164 = vunpack.c.l.b16 %v1088
    %v1165 = vunpack.c.h.b16 %v1088
    %v1166 = vunpack.c.l.b16 %v1089
    %v1167 = vunpack.c.h.b16 %v1089
    %v1168 = vunpack.c.l.b16 %v1090
    %v1169 = vunpack.c.h.b16 %v1090
    %v1170 = vunpack.c.l.b16 %v1091
    %v1171 = vunpack.c.h.b16 %v1091
    %v1172 = vunpack.c.l.b16 %v1092
    %v1173 = vunpack.c.h.b16 %v1092
    %v1174 = vunpack.c.l.b16 %v1093
    %v1175 = vunpack.c.h.b16 %v1093
    %v1176 = vunpack.c.l.b16 %v1094
    %v1177 = vunpack.c.h.b16 %v1094
    %v1178 = vunpack.c.l.b16 %v1095
    %v1179 = vunpack.c.h.b16 %v1095
    %v1180 = vunpack.c.l.b16 %v1096
    %v1181 = vunpack.c.h.b16 %v1096
    %v1182 = vunpack.c.l.b16 %v1097
    %v1183 = vunpack.c.h.b16 %v1097
    %v1184 = vunpack.c.l.b16 %v1098
    %v1185 = vunpack.c.h.b16 %v1098
    %v1186 = vunpack.c.l.b16 %v1099
    %v1187 = vunpack.c.h.b16 %v1099
    %v1188 = vunpack.c.l.b16 %v1100
    %v1189 = vunpack.c.h.b16 %v1100
    %v1190 = vunpack.c.l.b16 %v1101
    %v1191 = vunpack.c.h.b16 %v1101
    %v1192 = vunpack.c.l.b16 %v1102
    %v1193 = vunpack.c.h.b16 %v1102
    %v1194 = vunpack.c.l.b16 %v1103
    %v1195 = vunpack.c.h.b16 %v1103
    %v1196 = vunpack.c.l.b16 %v1104
    %v1197 = vunpack.c.h.b16 %v1104
    %v1198 = vunpack.c.l.b16 %v1105
    %v1199 = vunpack.c.h.b16 %v1105
    %v1200 = vunpack.c.l.b16 %v1106
    %v1201 = vunpack.c.h.b16 %v1106
    %v1202 = vunpack.c.l.b16 %v1107
    %v1203 = vunpack.c.h.b16 %v1107
    %v1204 = vpack.c.b16 %v1144, %v1140
    %v1205 = vpack.c.b16 %v1145, %v1141
    %v1206 = vpack.c.b16 %v1146, %v1142
    %v1207 = vpack.c.b16 %v1147, %v1143
    %v1208 = vpack.c.b16 %v1152, %v1148
    %v1209 = vpack.c.b16 %v1153, %v1149
    %v1210 = vpack.c.b16 %v1154, %v1150
    %v1211 = vpack.c.b16 %v1155, %v1151
    %v1212 = vpack.c.b16 %v1160, %v1156
    %v1213 = vpack.c.b16 %v1161, %v1157
    %v1214 = vpack.c.b16 %v1162, %v1158
    %v1215 = vpack.c.b16 %v1163, %v1159
    %v1216 = vpack.c.b16 %v1168, %v1164
    %v1217 = vpack.c.b16 %v1169, %v1165
    %v1218 = vpack.c.b16 %v1170, %v1166
    %v1219 = vpack.c.b16 %v1171, %v1167
    %v1220 = vpack.c.b16 %v1176, %v1172
    %v1221 = vpack.c.b16 %v1177, %v1173
    %v1222 = vpack.c.b16 %v1178, %v1174
    %v1223 = vpack.c.b16 %v1179, %v1175
    %v1224 = vpack.c.b16 %v1184, %v1180
    %v1225 = vpack.c.b16 %v1185, %v1181
    %v1226 = vpack.c.b16 %v1186, %v1182
    %v1227 = vpack.c.b16 %v1187, %v1183
    %v1228 = vpack.c.b16 %v1192, %v1188
    %v1229 = vpack.c.b16 %v1193, %v1189
    %v1230 = vpack.c.b16 %v1194, %v1190
    %v1231 = vpack.c.b16 %v1195, %v1191
    %v1232 = vpack.c.b16 %v1200, %v1196
    %v1233 = vpack.c.b16 %v1201, %v1197
    %v1234 = vpack.c.b16 %v1202, %v1198
    %v1235 = vpack.c.b16 %v1203, %v1199
    %1268 = vmatpush.bf16.msra.mxu0 %v1232
    %1269 = vmatpush.bf16.msra.mxu0 %v1228
    %1270 = vmatpush.bf16.msra.mxu0 %v1224
    %1271 = vmatpush.bf16.msra.mxu0 %v1220
    %1272 = vmatpush.bf16.msra.mxu0 %v1216
    %1273 = vmatpush.bf16.msra.mxu0 %v1212
    %1274 = vmatpush.bf16.msra.mxu0 %v1208
    %1275 = vmatpush.bf16.msra.mxu0 %v1204
    %1276 = vmatmul.bf16.gmra.mxu0 %v1075
    %v1277 = vpop.f32.mrf.mxu0
    %v1278 = vadd.f32 0.0, %v1277
    %v1279 = vpop.f32.mrf.mxu0
    %1280 = vdwg.mxu0
    %1281 = vmatpush.bf16.msra.mxu0 %v1233
    %1282 = vmatpush.bf16.msra.mxu0 %v1229
    %1283 = vmatpush.bf16.msra.mxu0 %v1225
    %1284 = vmatpush.bf16.msra.mxu0 %v1221
    %1285 = vmatpush.bf16.msra.mxu0 %v1217
    %1286 = vmatpush.bf16.msra.mxu0 %v1213
    %1287 = vmatpush.bf16.msra.mxu0 %v1209
    %1288 = vmatpush.bf16.msra.mxu0 %v1205
    %1289 = vmatmul.bf16.gmra.mxu0 %v1075
    %v1290 = vpop.f32.mrf.mxu0
    %v1291 = vadd.f32 0.0, %v1290
    %v1292 = vpop.f32.mrf.mxu0
    %1293 = vdwg.mxu0
    %1294 = vmatpush.bf16.msra.mxu0 %v1234
    %1295 = vmatpush.bf16.msra.mxu0 %v1230
    %1296 = vmatpush.bf16.msra.mxu0 %v1226
    %1297 = vmatpush.bf16.msra.mxu0 %v1222
    %1298 = vmatpush.bf16.msra.mxu0 %v1218
    %1299 = vmatpush.bf16.msra.mxu0 %v1214
    %1300 = vmatpush.bf16.msra.mxu0 %v1210
    %1301 = vmatpush.bf16.msra.mxu0 %v1206
    %1302 = vmatmul.bf16.gmra.mxu0 %v1075
    %v1303 = vpop.f32.mrf.mxu0
    %v1304 = vadd.f32 0.0, %v1303
    %v1305 = vpop.f32.mrf.mxu0
    %1306 = vdwg.mxu0
    %1307 = vmatpush.bf16.msra.mxu0 %v1235
    %1308 = vmatpush.bf16.msra.mxu0 %v1231
    %1309 = vmatpush.bf16.msra.mxu0 %v1227
    %1310 = vmatpush.bf16.msra.mxu0 %v1223
    %1311 = vmatpush.bf16.msra.mxu0 %v1219
    %1312 = vmatpush.bf16.msra.mxu0 %v1215
    %1313 = vmatpush.bf16.msra.mxu0 %v1211
    %1314 = vmatpush.bf16.msra.mxu0 %v1207
    %1315 = vmatmul.bf16.gmra.mxu0 %v1075
    %v1316 = vpop.f32.mrf.mxu0
    %v1317 = vadd.f32 0.0, %v1316
    %v1318 = vpop.f32.mrf.mxu0
    %1319 = vdwg.mxu0
    %v1320 = vadd.f32 %v1071, %v1278
    %v1321 = vadd.f32 %v1072, %v1291
    %v1322 = vadd.f32 %v1073, %v1304
    %v1323 = vadd.f32 %v1074, %v1317
    %v1324 = vmul.f32 %v1320, 0.5
    %v1325 = vtanh.pop %v1324
    %v1326 = vmul.f32 %v1325, 0.5
    %v1327 = vadd.f32 %v1326, 0.5
    %v1328 = vmul.f32 %v1321, 0.5
    %v1329 = vtanh.pop %v1328
    %v1330 = vmul.f32 %v1329, 0.5
    %v1331 = vadd.f32 %v1330, 0.5
    %v1332 = vtanh.pop %v1322
    %v1333 = vmul.f32 %v1323, 0.5
    %v1334 = vtanh.pop %v1333
    %v1335 = vmul.f32 %v1334, 0.5
    %v1336 = vadd.f32 %v1335, 0.5
    %v1337 = vmul.f32 %v1331, %v1065
    %v1338 = vmul.f32 %v1327, %v1332
    %v1339 = vadd.f32 %v1337, %v1338
    %v1340 = vtanh.pop %v1339
    %v1341 = vmul.f32 %v1336, %v1340
    %s1342 = scalar_lea.vmem [#allocation17], 16
    %1343 = vst [vmem:[%s1342] sm:$0xff] %v1341
    %s1344 = scalar_lea.vmem [#allocation2], 96
    %v1345 = vld [vmem:[%s1344] sm:$0xff]
    %v1346 = vld [vmem:[%s1344 + $0x8] sm:$0xff]
    %v1347 = vld [vmem:[%s1344 + $0x10] sm:$0xff]
    %v1348 = vld [vmem:[%s1344 + $0x18] sm:$0xff]
    %v1349 = vpack.c.bf16 %v1341, %v1341
    %v1350 = vld [vmem:[#allocation9] sm:$0xff]
    %v1351 = vld [vmem:[#allocation9 + $0x8] sm:$0xff]
    %v1352 = vld [vmem:[#allocation9 + $0x10] sm:$0xff]
    %v1353 = vld [vmem:[#allocation9 + $0x18] sm:$0xff]
    %v1354 = vld [vmem:[#allocation9 + $0x20] sm:$0xff]
    %v1355 = vld [vmem:[#allocation9 + $0x28] sm:$0xff]
    %v1356 = vld [vmem:[#allocation9 + $0x30] sm:$0xff]
    %v1357 = vld [vmem:[#allocation9 + $0x38] sm:$0xff]
    %v1358 = vld [vmem:[#allocation9 + $0x40] sm:$0xff]
    %v1359 = vld [vmem:[#allocation9 + $0x48] sm:$0xff]
    %v1360 = vld [vmem:[#allocation9 + $0x50] sm:$0xff]
    %v1361 = vld [vmem:[#allocation9 + $0x58] sm:$0xff]
    %v1362 = vld [vmem:[#allocation9 + $0x60] sm:$0xff]
    %v1363 = vld [vmem:[#allocation9 + $0x68] sm:$0xff]
    %v1364 = vld [vmem:[#allocation9 + $0x70] sm:$0xff]
    %v1365 = vld [vmem:[#allocation9 + $0x78] sm:$0xff]
    %v1366 = vld [vmem:[#allocation9 + $0x80] sm:$0xff]
    %v1367 = vld [vmem:[#allocation9 + $0x88] sm:$0xff]
    %v1368 = vld [vmem:[#allocation9 + $0x90] sm:$0xff]
    %v1369 = vld [vmem:[#allocation9 + $0x98] sm:$0xff]
    %v1370 = vld [vmem:[#allocation9 + $0xa0] sm:$0xff]
    %v1371 = vld [vmem:[#allocation9 + $0xa8] sm:$0xff]
    %v1372 = vld [vmem:[#allocation9 + $0xb0] sm:$0xff]
    %v1373 = vld [vmem:[#allocation9 + $0xb8] sm:$0xff]
    %v1374 = vld [vmem:[#allocation9 + $0xc0] sm:$0xff]
    %v1375 = vld [vmem:[#allocation9 + $0xc8] sm:$0xff]
    %v1376 = vld [vmem:[#allocation9 + $0xd0] sm:$0xff]
    %v1377 = vld [vmem:[#allocation9 + $0xd8] sm:$0xff]
    %v1378 = vld [vmem:[#allocation9 + $0xe0] sm:$0xff]
    %v1379 = vld [vmem:[#allocation9 + $0xe8] sm:$0xff]
    %v1380 = vld [vmem:[#allocation9 + $0xf0] sm:$0xff]
    %v1381 = vld [vmem:[#allocation9 + $0xf8] sm:$0xff]
    %v1414 = vunpack.c.l.b16 %v1350
    %v1415 = vunpack.c.h.b16 %v1350
    %v1416 = vunpack.c.l.b16 %v1351
    %v1417 = vunpack.c.h.b16 %v1351
    %v1418 = vunpack.c.l.b16 %v1352
    %v1419 = vunpack.c.h.b16 %v1352
    %v1420 = vunpack.c.l.b16 %v1353
    %v1421 = vunpack.c.h.b16 %v1353
    %v1422 = vunpack.c.l.b16 %v1354
    %v1423 = vunpack.c.h.b16 %v1354
    %v1424 = vunpack.c.l.b16 %v1355
    %v1425 = vunpack.c.h.b16 %v1355
    %v1426 = vunpack.c.l.b16 %v1356
    %v1427 = vunpack.c.h.b16 %v1356
    %v1428 = vunpack.c.l.b16 %v1357
    %v1429 = vunpack.c.h.b16 %v1357
    %v1430 = vunpack.c.l.b16 %v1358
    %v1431 = vunpack.c.h.b16 %v1358
    %v1432 = vunpack.c.l.b16 %v1359
    %v1433 = vunpack.c.h.b16 %v1359
    %v1434 = vunpack.c.l.b16 %v1360
    %v1435 = vunpack.c.h.b16 %v1360
    %v1436 = vunpack.c.l.b16 %v1361
    %v1437 = vunpack.c.h.b16 %v1361
    %v1438 = vunpack.c.l.b16 %v1362
    %v1439 = vunpack.c.h.b16 %v1362
    %v1440 = vunpack.c.l.b16 %v1363
    %v1441 = vunpack.c.h.b16 %v1363
    %v1442 = vunpack.c.l.b16 %v1364
    %v1443 = vunpack.c.h.b16 %v1364
    %v1444 = vunpack.c.l.b16 %v1365
    %v1445 = vunpack.c.h.b16 %v1365
    %v1446 = vunpack.c.l.b16 %v1366
    %v1447 = vunpack.c.h.b16 %v1366
    %v1448 = vunpack.c.l.b16 %v1367
    %v1449 = vunpack.c.h.b16 %v1367
    %v1450 = vunpack.c.l.b16 %v1368
    %v1451 = vunpack.c.h.b16 %v1368
    %v1452 = vunpack.c.l.b16 %v1369
    %v1453 = vunpack.c.h.b16 %v1369
    %v1454 = vunpack.c.l.b16 %v1370
    %v1455 = vunpack.c.h.b16 %v1370
    %v1456 = vunpack.c.l.b16 %v1371
    %v1457 = vunpack.c.h.b16 %v1371
    %v1458 = vunpack.c.l.b16 %v1372
    %v1459 = vunpack.c.h.b16 %v1372
    %v1460 = vunpack.c.l.b16 %v1373
    %v1461 = vunpack.c.h.b16 %v1373
    %v1462 = vunpack.c.l.b16 %v1374
    %v1463 = vunpack.c.h.b16 %v1374
    %v1464 = vunpack.c.l.b16 %v1375
    %v1465 = vunpack.c.h.b16 %v1375
    %v1466 = vunpack.c.l.b16 %v1376
    %v1467 = vunpack.c.h.b16 %v1376
    %v1468 = vunpack.c.l.b16 %v1377
    %v1469 = vunpack.c.h.b16 %v1377
    %v1470 = vunpack.c.l.b16 %v1378
    %v1471 = vunpack.c.h.b16 %v1378
    %v1472 = vunpack.c.l.b16 %v1379
    %v1473 = vunpack.c.h.b16 %v1379
    %v1474 = vunpack.c.l.b16 %v1380
    %v1475 = vunpack.c.h.b16 %v1380
    %v1476 = vunpack.c.l.b16 %v1381
    %v1477 = vunpack.c.h.b16 %v1381
    %v1478 = vpack.c.b16 %v1418, %v1414
    %v1479 = vpack.c.b16 %v1419, %v1415
    %v1480 = vpack.c.b16 %v1420, %v1416
    %v1481 = vpack.c.b16 %v1421, %v1417
    %v1482 = vpack.c.b16 %v1426, %v1422
    %v1483 = vpack.c.b16 %v1427, %v1423
    %v1484 = vpack.c.b16 %v1428, %v1424
    %v1485 = vpack.c.b16 %v1429, %v1425
    %v1486 = vpack.c.b16 %v1434, %v1430
    %v1487 = vpack.c.b16 %v1435, %v1431
    %v1488 = vpack.c.b16 %v1436, %v1432
    %v1489 = vpack.c.b16 %v1437, %v1433
    %v1490 = vpack.c.b16 %v1442, %v1438
    %v1491 = vpack.c.b16 %v1443, %v1439
    %v1492 = vpack.c.b16 %v1444, %v1440
    %v1493 = vpack.c.b16 %v1445, %v1441
    %v1494 = vpack.c.b16 %v1450, %v1446
    %v1495 = vpack.c.b16 %v1451, %v1447
    %v1496 = vpack.c.b16 %v1452, %v1448
    %v1497 = vpack.c.b16 %v1453, %v1449
    %v1498 = vpack.c.b16 %v1458, %v1454
    %v1499 = vpack.c.b16 %v1459, %v1455
    %v1500 = vpack.c.b16 %v1460, %v1456
    %v1501 = vpack.c.b16 %v1461, %v1457
    %v1502 = vpack.c.b16 %v1466, %v1462
    %v1503 = vpack.c.b16 %v1467, %v1463
    %v1504 = vpack.c.b16 %v1468, %v1464
    %v1505 = vpack.c.b16 %v1469, %v1465
    %v1506 = vpack.c.b16 %v1474, %v1470
    %v1507 = vpack.c.b16 %v1475, %v1471
    %v1508 = vpack.c.b16 %v1476, %v1472
    %v1509 = vpack.c.b16 %v1477, %v1473
    %1542 = vmatpush.bf16.msra.mxu0 %v1506
    %1543 = vmatpush.bf16.msra.mxu0 %v1502
    %1544 = vmatpush.bf16.msra.mxu0 %v1498
    %1545 = vmatpush.bf16.msra.mxu0 %v1494
    %1546 = vmatpush.bf16.msra.mxu0 %v1490
    %1547 = vmatpush.bf16.msra.mxu0 %v1486
    %1548 = vmatpush.bf16.msra.mxu0 %v1482
    %1549 = vmatpush.bf16.msra.mxu0 %v1478
    %1550 = vmatmul.bf16.gmra.mxu0 %v1349
    %v1551 = vpop.f32.mrf.mxu0
    %v1552 = vadd.f32 0.0, %v1551
    %v1553 = vpop.f32.mrf.mxu0
    %1554 = vdwg.mxu0
    %1555 = vmatpush.bf16.msra.mxu0 %v1507
    %1556 = vmatpush.bf16.msra.mxu0 %v1503
    %1557 = vmatpush.bf16.msra.mxu0 %v1499
    %1558 = vmatpush.bf16.msra.mxu0 %v1495
    %1559 = vmatpush.bf16.msra.mxu0 %v1491
    %1560 = vmatpush.bf16.msra.mxu0 %v1487
    %1561 = vmatpush.bf16.msra.mxu0 %v1483
    %1562 = vmatpush.bf16.msra.mxu0 %v1479
    %1563 = vmatmul.bf16.gmra.mxu0 %v1349
    %v1564 = vpop.f32.mrf.mxu0
    %v1565 = vadd.f32 0.0, %v1564
    %v1566 = vpop.f32.mrf.mxu0
    %1567 = vdwg.mxu0
    %1568 = vmatpush.bf16.msra.mxu0 %v1508
    %1569 = vmatpush.bf16.msra.mxu0 %v1504
    %1570 = vmatpush.bf16.msra.mxu0 %v1500
    %1571 = vmatpush.bf16.msra.mxu0 %v1496
    %1572 = vmatpush.bf16.msra.mxu0 %v1492
    %1573 = vmatpush.bf16.msra.mxu0 %v1488
    %1574 = vmatpush.bf16.msra.mxu0 %v1484
    %1575 = vmatpush.bf16.msra.mxu0 %v1480
    %1576 = vmatmul.bf16.gmra.mxu0 %v1349
    %v1577 = vpop.f32.mrf.mxu0
    %v1578 = vadd.f32 0.0, %v1577
    %v1579 = vpop.f32.mrf.mxu0
    %1580 = vdwg.mxu0
    %1581 = vmatpush.bf16.msra.mxu0 %v1509
    %1582 = vmatpush.bf16.msra.mxu0 %v1505
    %1583 = vmatpush.bf16.msra.mxu0 %v1501
    %1584 = vmatpush.bf16.msra.mxu0 %v1497
    %1585 = vmatpush.bf16.msra.mxu0 %v1493
    %1586 = vmatpush.bf16.msra.mxu0 %v1489
    %1587 = vmatpush.bf16.msra.mxu0 %v1485
    %1588 = vmatpush.bf16.msra.mxu0 %v1481
    %1589 = vmatmul.bf16.gmra.mxu0 %v1349
    %v1590 = vpop.f32.mrf.mxu0
    %v1591 = vadd.f32 0.0, %v1590
    %v1592 = vpop.f32.mrf.mxu0
    %1593 = vdwg.mxu0
    %v1594 = vadd.f32 %v1345, %v1552
    %v1595 = vadd.f32 %v1346, %v1565
    %v1596 = vadd.f32 %v1347, %v1578
    %v1597 = vadd.f32 %v1348, %v1591
    %v1598 = vmul.f32 %v1594, 0.5
    %v1599 = vtanh.pop %v1598
    %v1600 = vmul.f32 %v1599, 0.5
    %v1601 = vadd.f32 %v1600, 0.5
    %v1602 = vmul.f32 %v1595, 0.5
    %v1603 = vtanh.pop %v1602
    %v1604 = vmul.f32 %v1603, 0.5
    %v1605 = vadd.f32 %v1604, 0.5
    %v1606 = vtanh.pop %v1596
    %v1607 = vmul.f32 %v1597, 0.5
    %v1608 = vtanh.pop %v1607
    %v1609 = vmul.f32 %v1608, 0.5
    %v1610 = vadd.f32 %v1609, 0.5
    %v1611 = vmul.f32 %v1605, %v1339
    %v1612 = vmul.f32 %v1601, %v1606
    %v1613 = vadd.f32 %v1611, %v1612
    %v1614 = vtanh.pop %v1613
    %v1615 = vmul.f32 %v1610, %v1614
    %s1616 = scalar_lea.vmem [#allocation17], 24
    %1617 = vst [vmem:[%s1616] sm:$0xff] %v1615
    %s1618 = scalar_lea.vmem [#allocation2], 128
    %v1619 = vld [vmem:[%s1618] sm:$0xff]
    %v1620 = vld [vmem:[%s1618 + $0x8] sm:$0xff]
    %v1621 = vld [vmem:[%s1618 + $0x10] sm:$0xff]
    %v1622 = vld [vmem:[%s1618 + $0x18] sm:$0xff]
    %v1623 = vpack.c.bf16 %v1615, %v1615
    %v1624 = vld [vmem:[#allocation9] sm:$0xff]
    %v1625 = vld [vmem:[#allocation9 + $0x8] sm:$0xff]
    %v1626 = vld [vmem:[#allocation9 + $0x10] sm:$0xff]
    %v1627 = vld [vmem:[#allocation9 + $0x18] sm:$0xff]
    %v1628 = vld [vmem:[#allocation9 + $0x20] sm:$0xff]
    %v1629 = vld [vmem:[#allocation9 + $0x28] sm:$0xff]
    %v1630 = vld [vmem:[#allocation9 + $0x30] sm:$0xff]
    %v1631 = vld [vmem:[#allocation9 + $0x38] sm:$0xff]
    %v1632 = vld [vmem:[#allocation9 + $0x40] sm:$0xff]
    %v1633 = vld [vmem:[#allocation9 + $0x48] sm:$0xff]
    %v1634 = vld [vmem:[#allocation9 + $0x50] sm:$0xff]
    %v1635 = vld [vmem:[#allocation9 + $0x58] sm:$0xff]
    %v1636 = vld [vmem:[#allocation9 + $0x60] sm:$0xff]
    %v1637 = vld [vmem:[#allocation9 + $0x68] sm:$0xff]
    %v1638 = vld [vmem:[#allocation9 + $0x70] sm:$0xff]
    %v1639 = vld [vmem:[#allocation9 + $0x78] sm:$0xff]
    %v1640 = vld [vmem:[#allocation9 + $0x80] sm:$0xff]
    %v1641 = vld [vmem:[#allocation9 + $0x88] sm:$0xff]
    %v1642 = vld [vmem:[#allocation9 + $0x90] sm:$0xff]
    %v1643 = vld [vmem:[#allocation9 + $0x98] sm:$0xff]
    %v1644 = vld [vmem:[#allocation9 + $0xa0] sm:$0xff]
    %v1645 = vld [vmem:[#allocation9 + $0xa8] sm:$0xff]
    %v1646 = vld [vmem:[#allocation9 + $0xb0] sm:$0xff]
    %v1647 = vld [vmem:[#allocation9 + $0xb8] sm:$0xff]
    %v1648 = vld [vmem:[#allocation9 + $0xc0] sm:$0xff]
    %v1649 = vld [vmem:[#allocation9 + $0xc8] sm:$0xff]
    %v1650 = vld [vmem:[#allocation9 + $0xd0] sm:$0xff]
    %v1651 = vld [vmem:[#allocation9 + $0xd8] sm:$0xff]
    %v1652 = vld [vmem:[#allocation9 + $0xe0] sm:$0xff]
    %v1653 = vld [vmem:[#allocation9 + $0xe8] sm:$0xff]
    %v1654 = vld [vmem:[#allocation9 + $0xf0] sm:$0xff]
    %v1655 = vld [vmem:[#allocation9 + $0xf8] sm:$0xff]
    %v1688 = vunpack.c.l.b16 %v1624
    %v1689 = vunpack.c.h.b16 %v1624
    %v1690 = vunpack.c.l.b16 %v1625
    %v1691 = vunpack.c.h.b16 %v1625
    %v1692 = vunpack.c.l.b16 %v1626
    %v1693 = vunpack.c.h.b16 %v1626
    %v1694 = vunpack.c.l.b16 %v1627
    %v1695 = vunpack.c.h.b16 %v1627
    %v1696 = vunpack.c.l.b16 %v1628
    %v1697 = vunpack.c.h.b16 %v1628
    %v1698 = vunpack.c.l.b16 %v1629
    %v1699 = vunpack.c.h.b16 %v1629
    %v1700 = vunpack.c.l.b16 %v1630
    %v1701 = vunpack.c.h.b16 %v1630
    %v1702 = vunpack.c.l.b16 %v1631
    %v1703 = vunpack.c.h.b16 %v1631
    %v1704 = vunpack.c.l.b16 %v1632
    %v1705 = vunpack.c.h.b16 %v1632
    %v1706 = vunpack.c.l.b16 %v1633
    %v1707 = vunpack.c.h.b16 %v1633
    %v1708 = vunpack.c.l.b16 %v1634
    %v1709 = vunpack.c.h.b16 %v1634
    %v1710 = vunpack.c.l.b16 %v1635
    %v1711 = vunpack.c.h.b16 %v1635
    %v1712 = vunpack.c.l.b16 %v1636
    %v1713 = vunpack.c.h.b16 %v1636
    %v1714 = vunpack.c.l.b16 %v1637
    %v1715 = vunpack.c.h.b16 %v1637
    %v1716 = vunpack.c.l.b16 %v1638
    %v1717 = vunpack.c.h.b16 %v1638
    %v1718 = vunpack.c.l.b16 %v1639
    %v1719 = vunpack.c.h.b16 %v1639
    %v1720 = vunpack.c.l.b16 %v1640
    %v1721 = vunpack.c.h.b16 %v1640
    %v1722 = vunpack.c.l.b16 %v1641
    %v1723 = vunpack.c.h.b16 %v1641
    %v1724 = vunpack.c.l.b16 %v1642
    %v1725 = vunpack.c.h.b16 %v1642
    %v1726 = vunpack.c.l.b16 %v1643
    %v1727 = vunpack.c.h.b16 %v1643
    %v1728 = vunpack.c.l.b16 %v1644
    %v1729 = vunpack.c.h.b16 %v1644
    %v1730 = vunpack.c.l.b16 %v1645
    %v1731 = vunpack.c.h.b16 %v1645
    %v1732 = vunpack.c.l.b16 %v1646
    %v1733 = vunpack.c.h.b16 %v1646
    %v1734 = vunpack.c.l.b16 %v1647
    %v1735 = vunpack.c.h.b16 %v1647
    %v1736 = vunpack.c.l.b16 %v1648
    %v1737 = vunpack.c.h.b16 %v1648
    %v1738 = vunpack.c.l.b16 %v1649
    %v1739 = vunpack.c.h.b16 %v1649
    %v1740 = vunpack.c.l.b16 %v1650
    %v1741 = vunpack.c.h.b16 %v1650
    %v1742 = vunpack.c.l.b16 %v1651
    %v1743 = vunpack.c.h.b16 %v1651
    %v1744 = vunpack.c.l.b16 %v1652
    %v1745 = vunpack.c.h.b16 %v1652
    %v1746 = vunpack.c.l.b16 %v1653
    %v1747 = vunpack.c.h.b16 %v1653
    %v1748 = vunpack.c.l.b16 %v1654
    %v1749 = vunpack.c.h.b16 %v1654
    %v1750 = vunpack.c.l.b16 %v1655
    %v1751 = vunpack.c.h.b16 %v1655
    %v1752 = vpack.c.b16 %v1692, %v1688
    %v1753 = vpack.c.b16 %v1693, %v1689
    %v1754 = vpack.c.b16 %v1694, %v1690
    %v1755 = vpack.c.b16 %v1695, %v1691
    %v1756 = vpack.c.b16 %v1700, %v1696
    %v1757 = vpack.c.b16 %v1701, %v1697
    %v1758 = vpack.c.b16 %v1702, %v1698
    %v1759 = vpack.c.b16 %v1703, %v1699
    %v1760 = vpack.c.b16 %v1708, %v1704
    %v1761 = vpack.c.b16 %v1709, %v1705
    %v1762 = vpack.c.b16 %v1710, %v1706
    %v1763 = vpack.c.b16 %v1711, %v1707
    %v1764 = vpack.c.b16 %v1716, %v1712
    %v1765 = vpack.c.b16 %v1717, %v1713
    %v1766 = vpack.c.b16 %v1718, %v1714
    %v1767 = vpack.c.b16 %v1719, %v1715
    %v1768 = vpack.c.b16 %v1724, %v1720
    %v1769 = vpack.c.b16 %v1725, %v1721
    %v1770 = vpack.c.b16 %v1726, %v1722
    %v1771 = vpack.c.b16 %v1727, %v1723
    %v1772 = vpack.c.b16 %v1732, %v1728
    %v1773 = vpack.c.b16 %v1733, %v1729
    %v1774 = vpack.c.b16 %v1734, %v1730
    %v1775 = vpack.c.b16 %v1735, %v1731
    %v1776 = vpack.c.b16 %v1740, %v1736
    %v1777 = vpack.c.b16 %v1741, %v1737
    %v1778 = vpack.c.b16 %v1742, %v1738
    %v1779 = vpack.c.b16 %v1743, %v1739
    %v1780 = vpack.c.b16 %v1748, %v1744
    %v1781 = vpack.c.b16 %v1749, %v1745
    %v1782 = vpack.c.b16 %v1750, %v1746
    %v1783 = vpack.c.b16 %v1751, %v1747
    %1816 = vmatpush.bf16.msra.mxu0 %v1780
    %1817 = vmatpush.bf16.msra.mxu0 %v1776
    %1818 = vmatpush.bf16.msra.mxu0 %v1772
    %1819 = vmatpush.bf16.msra.mxu0 %v1768
    %1820 = vmatpush.bf16.msra.mxu0 %v1764
    %1821 = vmatpush.bf16.msra.mxu0 %v1760
    %1822 = vmatpush.bf16.msra.mxu0 %v1756
    %1823 = vmatpush.bf16.msra.mxu0 %v1752
    %1824 = vmatmul.bf16.gmra.mxu0 %v1623
    %v1825 = vpop.f32.mrf.mxu0
    %v1826 = vadd.f32 0.0, %v1825
    %v1827 = vpop.f32.mrf.mxu0
    %1828 = vdwg.mxu0
    %1829 = vmatpush.bf16.msra.mxu0 %v1781
    %1830 = vmatpush.bf16.msra.mxu0 %v1777
    %1831 = vmatpush.bf16.msra.mxu0 %v1773
    %1832 = vmatpush.bf16.msra.mxu0 %v1769
    %1833 = vmatpush.bf16.msra.mxu0 %v1765
    %1834 = vmatpush.bf16.msra.mxu0 %v1761
    %1835 = vmatpush.bf16.msra.mxu0 %v1757
    %1836 = vmatpush.bf16.msra.mxu0 %v1753
    %1837 = vmatmul.bf16.gmra.mxu0 %v1623
    %v1838 = vpop.f32.mrf.mxu0
    %v1839 = vadd.f32 0.0, %v1838
    %v1840 = vpop.f32.mrf.mxu0
    %1841 = vdwg.mxu0
    %1842 = vmatpush.bf16.msra.mxu0 %v1782
    %1843 = vmatpush.bf16.msra.mxu0 %v1778
    %1844 = vmatpush.bf16.msra.mxu0 %v1774
    %1845 = vmatpush.bf16.msra.mxu0 %v1770
    %1846 = vmatpush.bf16.msra.mxu0 %v1766
    %1847 = vmatpush.bf16.msra.mxu0 %v1762
    %1848 = vmatpush.bf16.msra.mxu0 %v1758
    %1849 = vmatpush.bf16.msra.mxu0 %v1754
    %1850 = vmatmul.bf16.gmra.mxu0 %v1623
    %v1851 = vpop.f32.mrf.mxu0
    %v1852 = vadd.f32 0.0, %v1851
    %v1853 = vpop.f32.mrf.mxu0
    %1854 = vdwg.mxu0
    %1855 = vmatpush.bf16.msra.mxu0 %v1783
    %1856 = vmatpush.bf16.msra.mxu0 %v1779
    %1857 = vmatpush.bf16.msra.mxu0 %v1775
    %1858 = vmatpush.bf16.msra.mxu0 %v1771
    %1859 = vmatpush.bf16.msra.mxu0 %v1767
    %1860 = vmatpush.bf16.msra.mxu0 %v1763
    %1861 = vmatpush.bf16.msra.mxu0 %v1759
    %1862 = vmatpush.bf16.msra.mxu0 %v1755
    %1863 = vmatmul.bf16.gmra.mxu0 %v1623
    %v1864 = vpop.f32.mrf.mxu0
    %v1865 = vadd.f32 0.0, %v1864
    %v1866 = vpop.f32.mrf.mxu0
    %1867 = vdwg.mxu0
    %v1868 = vadd.f32 %v1619, %v1826
    %v1869 = vadd.f32 %v1620, %v1839
    %v1870 = vadd.f32 %v1621, %v1852
    %v1871 = vadd.f32 %v1622, %v1865
    %v1872 = vmul.f32 %v1868, 0.5
    %v1873 = vtanh.pop %v1872
    %v1874 = vmul.f32 %v1873, 0.5
    %v1875 = vadd.f32 %v1874, 0.5
    %v1876 = vmul.f32 %v1869, 0.5
    %v1877 = vtanh.pop %v1876
    %v1878 = vmul.f32 %v1877, 0.5
    %v1879 = vadd.f32 %v1878, 0.5
    %v1880 = vtanh.pop %v1870
    %v1881 = vmul.f32 %v1871, 0.5
    %v1882 = vtanh.pop %v1881
    %v1883 = vmul.f32 %v1882, 0.5
    %v1884 = vadd.f32 %v1883, 0.5
    %v1885 = vmul.f32 %v1879, %v1613
    %v1886 = vmul.f32 %v1875, %v1880
    %v1887 = vadd.f32 %v1885, %v1886
    %v1888 = vtanh.pop %v1887
    %v1889 = vmul.f32 %v1884, %v1888
    %s1890 = scalar_lea.vmem [#allocation17], 32
    %1891 = vst [vmem:[%s1890] sm:$0xff] %v1889
    %s1892 = scalar_lea.vmem [#allocation2], 160
    %v1893 = vld [vmem:[%s1892] sm:$0xff]
    %v1894 = vld [vmem:[%s1892 + $0x8] sm:$0xff]
    %v1895 = vld [vmem:[%s1892 + $0x10] sm:$0xff]
    %v1896 = vld [vmem:[%s1892 + $0x18] sm:$0xff]
    %v1897 = vpack.c.bf16 %v1889, %v1889
    %v1898 = vld [vmem:[#allocation9] sm:$0xff]
    %v1899 = vld [vmem:[#allocation9 + $0x8] sm:$0xff]
    %v1900 = vld [vmem:[#allocation9 + $0x10] sm:$0xff]
    %v1901 = vld [vmem:[#allocation9 + $0x18] sm:$0xff]
    %v1902 = vld [vmem:[#allocation9 + $0x20] sm:$0xff]
    %v1903 = vld [vmem:[#allocation9 + $0x28] sm:$0xff]
    %v1904 = vld [vmem:[#allocation9 + $0x30] sm:$0xff]
    %v1905 = vld [vmem:[#allocation9 + $0x38] sm:$0xff]
    %v1906 = vld [vmem:[#allocation9 + $0x40] sm:$0xff]
    %v1907 = vld [vmem:[#allocation9 + $0x48] sm:$0xff]
    %v1908 = vld [vmem:[#allocation9 + $0x50] sm:$0xff]
    %v1909 = vld [vmem:[#allocation9 + $0x58] sm:$0xff]
    %v1910 = vld [vmem:[#allocation9 + $0x60] sm:$0xff]
    %v1911 = vld [vmem:[#allocation9 + $0x68] sm:$0xff]
    %v1912 = vld [vmem:[#allocation9 + $0x70] sm:$0xff]
    %v1913 = vld [vmem:[#allocation9 + $0x78] sm:$0xff]
    %v1914 = vld [vmem:[#allocation9 + $0x80] sm:$0xff]
    %v1915 = vld [vmem:[#allocation9 + $0x88] sm:$0xff]
    %v1916 = vld [vmem:[#allocation9 + $0x90] sm:$0xff]
    %v1917 = vld [vmem:[#allocation9 + $0x98] sm:$0xff]
    %v1918 = vld [vmem:[#allocation9 + $0xa0] sm:$0xff]
    %v1919 = vld [vmem:[#allocation9 + $0xa8] sm:$0xff]
    %v1920 = vld [vmem:[#allocation9 + $0xb0] sm:$0xff]
    %v1921 = vld [vmem:[#allocation9 + $0xb8] sm:$0xff]
    %v1922 = vld [vmem:[#allocation9 + $0xc0] sm:$0xff]
    %v1923 = vld [vmem:[#allocation9 + $0xc8] sm:$0xff]
    %v1924 = vld [vmem:[#allocation9 + $0xd0] sm:$0xff]
    %v1925 = vld [vmem:[#allocation9 + $0xd8] sm:$0xff]
    %v1926 = vld [vmem:[#allocation9 + $0xe0] sm:$0xff]
    %v1927 = vld [vmem:[#allocation9 + $0xe8] sm:$0xff]
    %v1928 = vld [vmem:[#allocation9 + $0xf0] sm:$0xff]
    %v1929 = vld [vmem:[#allocation9 + $0xf8] sm:$0xff]
    %v1962 = vunpack.c.l.b16 %v1898
    %v1963 = vunpack.c.h.b16 %v1898
    %v1964 = vunpack.c.l.b16 %v1899
    %v1965 = vunpack.c.h.b16 %v1899
    %v1966 = vunpack.c.l.b16 %v1900
    %v1967 = vunpack.c.h.b16 %v1900
    %v1968 = vunpack.c.l.b16 %v1901
    %v1969 = vunpack.c.h.b16 %v1901
    %v1970 = vunpack.c.l.b16 %v1902
    %v1971 = vunpack.c.h.b16 %v1902
    %v1972 = vunpack.c.l.b16 %v1903
    %v1973 = vunpack.c.h.b16 %v1903
    %v1974 = vunpack.c.l.b16 %v1904
    %v1975 = vunpack.c.h.b16 %v1904
    %v1976 = vunpack.c.l.b16 %v1905
    %v1977 = vunpack.c.h.b16 %v1905
    %v1978 = vunpack.c.l.b16 %v1906
    %v1979 = vunpack.c.h.b16 %v1906
    %v1980 = vunpack.c.l.b16 %v1907
    %v1981 = vunpack.c.h.b16 %v1907
    %v1982 = vunpack.c.l.b16 %v1908
    %v1983 = vunpack.c.h.b16 %v1908
    %v1984 = vunpack.c.l.b16 %v1909
    %v1985 = vunpack.c.h.b16 %v1909
    %v1986 = vunpack.c.l.b16 %v1910
    %v1987 = vunpack.c.h.b16 %v1910
    %v1988 = vunpack.c.l.b16 %v1911
    %v1989 = vunpack.c.h.b16 %v1911
    %v1990 = vunpack.c.l.b16 %v1912
    %v1991 = vunpack.c.h.b16 %v1912
    %v1992 = vunpack.c.l.b16 %v1913
    %v1993 = vunpack.c.h.b16 %v1913
    %v1994 = vunpack.c.l.b16 %v1914
    %v1995 = vunpack.c.h.b16 %v1914
    %v1996 = vunpack.c.l.b16 %v1915
    %v1997 = vunpack.c.h.b16 %v1915
    %v1998 = vunpack.c.l.b16 %v1916
    %v1999 = vunpack.c.h.b16 %v1916
    %v2000 = vunpack.c.l.b16 %v1917
    %v2001 = vunpack.c.h.b16 %v1917
    %v2002 = vunpack.c.l.b16 %v1918
    %v2003 = vunpack.c.h.b16 %v1918
    %v2004 = vunpack.c.l.b16 %v1919
    %v2005 = vunpack.c.h.b16 %v1919
    %v2006 = vunpack.c.l.b16 %v1920
    %v2007 = vunpack.c.h.b16 %v1920
    %v2008 = vunpack.c.l.b16 %v1921
    %v2009 = vunpack.c.h.b16 %v1921
    %v2010 = vunpack.c.l.b16 %v1922
    %v2011 = vunpack.c.h.b16 %v1922
    %v2012 = vunpack.c.l.b16 %v1923
    %v2013 = vunpack.c.h.b16 %v1923
    %v2014 = vunpack.c.l.b16 %v1924
    %v2015 = vunpack.c.h.b16 %v1924
    %v2016 = vunpack.c.l.b16 %v1925
    %v2017 = vunpack.c.h.b16 %v1925
    %v2018 = vunpack.c.l.b16 %v1926
    %v2019 = vunpack.c.h.b16 %v1926
    %v2020 = vunpack.c.l.b16 %v1927
    %v2021 = vunpack.c.h.b16 %v1927
    %v2022 = vunpack.c.l.b16 %v1928
    %v2023 = vunpack.c.h.b16 %v1928
    %v2024 = vunpack.c.l.b16 %v1929
    %v2025 = vunpack.c.h.b16 %v1929
    %v2026 = vpack.c.b16 %v1966, %v1962
    %v2027 = vpack.c.b16 %v1967, %v1963
    %v2028 = vpack.c.b16 %v1968, %v1964
    %v2029 = vpack.c.b16 %v1969, %v1965
    %v2030 = vpack.c.b16 %v1974, %v1970
    %v2031 = vpack.c.b16 %v1975, %v1971
    %v2032 = vpack.c.b16 %v1976, %v1972
    %v2033 = vpack.c.b16 %v1977, %v1973
    %v2034 = vpack.c.b16 %v1982, %v1978
    %v2035 = vpack.c.b16 %v1983, %v1979
    %v2036 = vpack.c.b16 %v1984, %v1980
    %v2037 = vpack.c.b16 %v1985, %v1981
    %v2038 = vpack.c.b16 %v1990, %v1986
    %v2039 = vpack.c.b16 %v1991, %v1987
    %v2040 = vpack.c.b16 %v1992, %v1988
    %v2041 = vpack.c.b16 %v1993, %v1989
    %v2042 = vpack.c.b16 %v1998, %v1994
    %v2043 = vpack.c.b16 %v1999, %v1995
    %v2044 = vpack.c.b16 %v2000, %v1996
    %v2045 = vpack.c.b16 %v2001, %v1997
    %v2046 = vpack.c.b16 %v2006, %v2002
    %v2047 = vpack.c.b16 %v2007, %v2003
    %v2048 = vpack.c.b16 %v2008, %v2004
    %v2049 = vpack.c.b16 %v2009, %v2005
    %v2050 = vpack.c.b16 %v2014, %v2010
    %v2051 = vpack.c.b16 %v2015, %v2011
    %v2052 = vpack.c.b16 %v2016, %v2012
    %v2053 = vpack.c.b16 %v2017, %v2013
    %v2054 = vpack.c.b16 %v2022, %v2018
    %v2055 = vpack.c.b16 %v2023, %v2019
    %v2056 = vpack.c.b16 %v2024, %v2020
    %v2057 = vpack.c.b16 %v2025, %v2021
    %2090 = vmatpush.bf16.msra.mxu0 %v2054
    %2091 = vmatpush.bf16.msra.mxu0 %v2050
    %2092 = vmatpush.bf16.msra.mxu0 %v2046
    %2093 = vmatpush.bf16.msra.mxu0 %v2042
    %2094 = vmatpush.bf16.msra.mxu0 %v2038
    %2095 = vmatpush.bf16.msra.mxu0 %v2034
    %2096 = vmatpush.bf16.msra.mxu0 %v2030
    %2097 = vmatpush.bf16.msra.mxu0 %v2026
    %2098 = vmatmul.bf16.gmra.mxu0 %v1897
    %v2099 = vpop.f32.mrf.mxu0
    %v2100 = vadd.f32 0.0, %v2099
    %v2101 = vpop.f32.mrf.mxu0
    %2102 = vdwg.mxu0
    %2103 = vmatpush.bf16.msra.mxu0 %v2055
    %2104 = vmatpush.bf16.msra.mxu0 %v2051
    %2105 = vmatpush.bf16.msra.mxu0 %v2047
    %2106 = vmatpush.bf16.msra.mxu0 %v2043
    %2107 = vmatpush.bf16.msra.mxu0 %v2039
    %2108 = vmatpush.bf16.msra.mxu0 %v2035
    %2109 = vmatpush.bf16.msra.mxu0 %v2031
    %2110 = vmatpush.bf16.msra.mxu0 %v2027
    %2111 = vmatmul.bf16.gmra.mxu0 %v1897
    %v2112 = vpop.f32.mrf.mxu0
    %v2113 = vadd.f32 0.0, %v2112
    %v2114 = vpop.f32.mrf.mxu0
    %2115 = vdwg.mxu0
    %2116 = vmatpush.bf16.msra.mxu0 %v2056
    %2117 = vmatpush.bf16.msra.mxu0 %v2052
    %2118 = vmatpush.bf16.msra.mxu0 %v2048
    %2119 = vmatpush.bf16.msra.mxu0 %v2044
    %2120 = vmatpush.bf16.msra.mxu0 %v2040
    %2121 = vmatpush.bf16.msra.mxu0 %v2036
    %2122 = vmatpush.bf16.msra.mxu0 %v2032
    %2123 = vmatpush.bf16.msra.mxu0 %v2028
    %2124 = vmatmul.bf16.gmra.mxu0 %v1897
    %v2125 = vpop.f32.mrf.mxu0
    %v2126 = vadd.f32 0.0, %v2125
    %v2127 = vpop.f32.mrf.mxu0
    %2128 = vdwg.mxu0
    %2129 = vmatpush.bf16.msra.mxu0 %v2057
    %2130 = vmatpush.bf16.msra.mxu0 %v2053
    %2131 = vmatpush.bf16.msra.mxu0 %v2049
    %2132 = vmatpush.bf16.msra.mxu0 %v2045
    %2133 = vmatpush.bf16.msra.mxu0 %v2041
    %2134 = vmatpush.bf16.msra.mxu0 %v2037
    %2135 = vmatpush.bf16.msra.mxu0 %v2033
    %2136 = vmatpush.bf16.msra.mxu0 %v2029
    %2137 = vmatmul.bf16.gmra.mxu0 %v1897
    %v2138 = vpop.f32.mrf.mxu0
    %v2139 = vadd.f32 0.0, %v2138
    %v2140 = vpop.f32.mrf.mxu0
    %2141 = vdwg.mxu0
    %v2142 = vadd.f32 %v1893, %v2100
    %v2143 = vadd.f32 %v1894, %v2113
    %v2144 = vadd.f32 %v1895, %v2126
    %v2145 = vadd.f32 %v1896, %v2139
    %v2146 = vmul.f32 %v2142, 0.5
    %v2147 = vtanh.pop %v2146
    %v2148 = vmul.f32 %v2147, 0.5
    %v2149 = vadd.f32 %v2148, 0.5
    %v2150 = vmul.f32 %v2143, 0.5
    %v2151 = vtanh.pop %v2150
    %v2152 = vmul.f32 %v2151, 0.5
    %v2153 = vadd.f32 %v2152, 0.5
    %v2154 = vtanh.pop %v2144
    %v2155 = vmul.f32 %v2145, 0.5
    %v2156 = vtanh.pop %v2155
    %v2157 = vmul.f32 %v2156, 0.5
    %v2158 = vadd.f32 %v2157, 0.5
    %v2159 = vmul.f32 %v2153, %v1887
    %v2160 = vmul.f32 %v2149, %v2154
    %v2161 = vadd.f32 %v2159, %v2160
    %v2162 = vtanh.pop %v2161
    %v2163 = vmul.f32 %v2158, %v2162
    %s2164 = scalar_lea.vmem [#allocation17], 40
    %2165 = vst [vmem:[%s2164] sm:$0xff] %v2163
    %s2166 = scalar_lea.vmem [#allocation2], 192
    %v2167 = vld [vmem:[%s2166] sm:$0xff]
    %v2168 = vld [vmem:[%s2166 + $0x8] sm:$0xff]
    %v2169 = vld [vmem:[%s2166 + $0x10] sm:$0xff]
    %v2170 = vld [vmem:[%s2166 + $0x18] sm:$0xff]
    %v2171 = vpack.c.bf16 %v2163, %v2163
    %v2172 = vld [vmem:[#allocation9] sm:$0xff]
    %v2173 = vld [vmem:[#allocation9 + $0x8] sm:$0xff]
    %v2174 = vld [vmem:[#allocation9 + $0x10] sm:$0xff]
    %v2175 = vld [vmem:[#allocation9 + $0x18] sm:$0xff]
    %v2176 = vld [vmem:[#allocation9 + $0x20] sm:$0xff]
    %v2177 = vld [vmem:[#allocation9 + $0x28] sm:$0xff]
    %v2178 = vld [vmem:[#allocation9 + $0x30] sm:$0xff]
    %v2179 = vld [vmem:[#allocation9 + $0x38] sm:$0xff]
    %v2180 = vld [vmem:[#allocation9 + $0x40] sm:$0xff]
    %v2181 = vld [vmem:[#allocation9 + $0x48] sm:$0xff]
    %v2182 = vld [vmem:[#allocation9 + $0x50] sm:$0xff]
    %v2183 = vld [vmem:[#allocation9 + $0x58] sm:$0xff]
    %v2184 = vld [vmem:[#allocation9 + $0x60] sm:$0xff]
    %v2185 = vld [vmem:[#allocation9 + $0x68] sm:$0xff]
    %v2186 = vld [vmem:[#allocation9 + $0x70] sm:$0xff]
    %v2187 = vld [vmem:[#allocation9 + $0x78] sm:$0xff]
    %v2188 = vld [vmem:[#allocation9 + $0x80] sm:$0xff]
    %v2189 = vld [vmem:[#allocation9 + $0x88] sm:$0xff]
    %v2190 = vld [vmem:[#allocation9 + $0x90] sm:$0xff]
    %v2191 = vld [vmem:[#allocation9 + $0x98] sm:$0xff]
    %v2192 = vld [vmem:[#allocation9 + $0xa0] sm:$0xff]
    %v2193 = vld [vmem:[#allocation9 + $0xa8] sm:$0xff]
    %v2194 = vld [vmem:[#allocation9 + $0xb0] sm:$0xff]
    %v2195 = vld [vmem:[#allocation9 + $0xb8] sm:$0xff]
    %v2196 = vld [vmem:[#allocation9 + $0xc0] sm:$0xff]
    %v2197 = vld [vmem:[#allocation9 + $0xc8] sm:$0xff]
    %v2198 = vld [vmem:[#allocation9 + $0xd0] sm:$0xff]
    %v2199 = vld [vmem:[#allocation9 + $0xd8] sm:$0xff]
    %v2200 = vld [vmem:[#allocation9 + $0xe0] sm:$0xff]
    %v2201 = vld [vmem:[#allocation9 + $0xe8] sm:$0xff]
    %v2202 = vld [vmem:[#allocation9 + $0xf0] sm:$0xff]
    %v2203 = vld [vmem:[#allocation9 + $0xf8] sm:$0xff]
    %v2236 = vunpack.c.l.b16 %v2172
    %v2237 = vunpack.c.h.b16 %v2172
    %v2238 = vunpack.c.l.b16 %v2173
    %v2239 = vunpack.c.h.b16 %v2173
    %v2240 = vunpack.c.l.b16 %v2174
    %v2241 = vunpack.c.h.b16 %v2174
    %v2242 = vunpack.c.l.b16 %v2175
    %v2243 = vunpack.c.h.b16 %v2175
    %v2244 = vunpack.c.l.b16 %v2176
    %v2245 = vunpack.c.h.b16 %v2176
    %v2246 = vunpack.c.l.b16 %v2177
    %v2247 = vunpack.c.h.b16 %v2177
    %v2248 = vunpack.c.l.b16 %v2178
    %v2249 = vunpack.c.h.b16 %v2178
    %v2250 = vunpack.c.l.b16 %v2179
    %v2251 = vunpack.c.h.b16 %v2179
    %v2252 = vunpack.c.l.b16 %v2180
    %v2253 = vunpack.c.h.b16 %v2180
    %v2254 = vunpack.c.l.b16 %v2181
    %v2255 = vunpack.c.h.b16 %v2181
    %v2256 = vunpack.c.l.b16 %v2182
    %v2257 = vunpack.c.h.b16 %v2182
    %v2258 = vunpack.c.l.b16 %v2183
    %v2259 = vunpack.c.h.b16 %v2183
    %v2260 = vunpack.c.l.b16 %v2184
    %v2261 = vunpack.c.h.b16 %v2184
    %v2262 = vunpack.c.l.b16 %v2185
    %v2263 = vunpack.c.h.b16 %v2185
    %v2264 = vunpack.c.l.b16 %v2186
    %v2265 = vunpack.c.h.b16 %v2186
    %v2266 = vunpack.c.l.b16 %v2187
    %v2267 = vunpack.c.h.b16 %v2187
    %v2268 = vunpack.c.l.b16 %v2188
    %v2269 = vunpack.c.h.b16 %v2188
    %v2270 = vunpack.c.l.b16 %v2189
    %v2271 = vunpack.c.h.b16 %v2189
    %v2272 = vunpack.c.l.b16 %v2190
    %v2273 = vunpack.c.h.b16 %v2190
    %v2274 = vunpack.c.l.b16 %v2191
    %v2275 = vunpack.c.h.b16 %v2191
    %v2276 = vunpack.c.l.b16 %v2192
    %v2277 = vunpack.c.h.b16 %v2192
    %v2278 = vunpack.c.l.b16 %v2193
    %v2279 = vunpack.c.h.b16 %v2193
    %v2280 = vunpack.c.l.b16 %v2194
    %v2281 = vunpack.c.h.b16 %v2194
    %v2282 = vunpack.c.l.b16 %v2195
    %v2283 = vunpack.c.h.b16 %v2195
    %v2284 = vunpack.c.l.b16 %v2196
    %v2285 = vunpack.c.h.b16 %v2196
    %v2286 = vunpack.c.l.b16 %v2197
    %v2287 = vunpack.c.h.b16 %v2197
    %v2288 = vunpack.c.l.b16 %v2198
    %v2289 = vunpack.c.h.b16 %v2198
    %v2290 = vunpack.c.l.b16 %v2199
    %v2291 = vunpack.c.h.b16 %v2199
    %v2292 = vunpack.c.l.b16 %v2200
    %v2293 = vunpack.c.h.b16 %v2200
    %v2294 = vunpack.c.l.b16 %v2201
    %v2295 = vunpack.c.h.b16 %v2201
    %v2296 = vunpack.c.l.b16 %v2202
    %v2297 = vunpack.c.h.b16 %v2202
    %v2298 = vunpack.c.l.b16 %v2203
    %v2299 = vunpack.c.h.b16 %v2203
    %v2300 = vpack.c.b16 %v2240, %v2236
    %v2301 = vpack.c.b16 %v2241, %v2237
    %v2302 = vpack.c.b16 %v2242, %v2238
    %v2303 = vpack.c.b16 %v2243, %v2239
    %v2304 = vpack.c.b16 %v2248, %v2244
    %v2305 = vpack.c.b16 %v2249, %v2245
    %v2306 = vpack.c.b16 %v2250, %v2246
    %v2307 = vpack.c.b16 %v2251, %v2247
    %v2308 = vpack.c.b16 %v2256, %v2252
    %v2309 = vpack.c.b16 %v2257, %v2253
    %v2310 = vpack.c.b16 %v2258, %v2254
    %v2311 = vpack.c.b16 %v2259, %v2255
    %v2312 = vpack.c.b16 %v2264, %v2260
    %v2313 = vpack.c.b16 %v2265, %v2261
    %v2314 = vpack.c.b16 %v2266, %v2262
    %v2315 = vpack.c.b16 %v2267, %v2263
    %v2316 = vpack.c.b16 %v2272, %v2268
    %v2317 = vpack.c.b16 %v2273, %v2269
    %v2318 = vpack.c.b16 %v2274, %v2270
    %v2319 = vpack.c.b16 %v2275, %v2271
    %v2320 = vpack.c.b16 %v2280, %v2276
    %v2321 = vpack.c.b16 %v2281, %v2277
    %v2322 = vpack.c.b16 %v2282, %v2278
    %v2323 = vpack.c.b16 %v2283, %v2279
    %v2324 = vpack.c.b16 %v2288, %v2284
    %v2325 = vpack.c.b16 %v2289, %v2285
    %v2326 = vpack.c.b16 %v2290, %v2286
    %v2327 = vpack.c.b16 %v2291, %v2287
    %v2328 = vpack.c.b16 %v2296, %v2292
    %v2329 = vpack.c.b16 %v2297, %v2293
    %v2330 = vpack.c.b16 %v2298, %v2294
    %v2331 = vpack.c.b16 %v2299, %v2295
    %2364 = vmatpush.bf16.msra.mxu0 %v2328
    %2365 = vmatpush.bf16.msra.mxu0 %v2324
    %2366 = vmatpush.bf16.msra.mxu0 %v2320
    %2367 = vmatpush.bf16.msra.mxu0 %v2316
    %2368 = vmatpush.bf16.msra.mxu0 %v2312
    %2369 = vmatpush.bf16.msra.mxu0 %v2308
    %2370 = vmatpush.bf16.msra.mxu0 %v2304
    %2371 = vmatpush.bf16.msra.mxu0 %v2300
    %2372 = vmatmul.bf16.gmra.mxu0 %v2171
    %v2373 = vpop.f32.mrf.mxu0
    %v2374 = vadd.f32 0.0, %v2373
    %v2375 = vpop.f32.mrf.mxu0
    %2376 = vdwg.mxu0
    %2377 = vmatpush.bf16.msra.mxu0 %v2329
    %2378 = vmatpush.bf16.msra.mxu0 %v2325
    %2379 = vmatpush.bf16.msra.mxu0 %v2321
    %2380 = vmatpush.bf16.msra.mxu0 %v2317
    %2381 = vmatpush.bf16.msra.mxu0 %v2313
    %2382 = vmatpush.bf16.msra.mxu0 %v2309
    %2383 = vmatpush.bf16.msra.mxu0 %v2305
    %2384 = vmatpush.bf16.msra.mxu0 %v2301
    %2385 = vmatmul.bf16.gmra.mxu0 %v2171
    %v2386 = vpop.f32.mrf.mxu0
    %v2387 = vadd.f32 0.0, %v2386
    %v2388 = vpop.f32.mrf.mxu0
    %2389 = vdwg.mxu0
    %2390 = vmatpush.bf16.msra.mxu0 %v2330
    %2391 = vmatpush.bf16.msra.mxu0 %v2326
    %2392 = vmatpush.bf16.msra.mxu0 %v2322
    %2393 = vmatpush.bf16.msra.mxu0 %v2318
    %2394 = vmatpush.bf16.msra.mxu0 %v2314
    %2395 = vmatpush.bf16.msra.mxu0 %v2310
    %2396 = vmatpush.bf16.msra.mxu0 %v2306
    %2397 = vmatpush.bf16.msra.mxu0 %v2302
    %2398 = vmatmul.bf16.gmra.mxu0 %v2171
    %v2399 = vpop.f32.mrf.mxu0
    %v2400 = vadd.f32 0.0, %v2399
    %v2401 = vpop.f32.mrf.mxu0
    %2402 = vdwg.mxu0
    %2403 = vmatpush.bf16.msra.mxu0 %v2331
    %2404 = vmatpush.bf16.msra.mxu0 %v2327
    %2405 = vmatpush.bf16.msra.mxu0 %v2323
    %2406 = vmatpush.bf16.msra.mxu0 %v2319
    %2407 = vmatpush.bf16.msra.mxu0 %v2315
    %2408 = vmatpush.bf16.msra.mxu0 %v2311
    %2409 = vmatpush.bf16.msra.mxu0 %v2307
    %2410 = vmatpush.bf16.msra.mxu0 %v2303
    %2411 = vmatmul.bf16.gmra.mxu0 %v2171
    %v2412 = vpop.f32.mrf.mxu0
    %v2413 = vadd.f32 0.0, %v2412
    %v2414 = vpop.f32.mrf.mxu0
    %2415 = vdwg.mxu0
    %v2416 = vadd.f32 %v2167, %v2374
    %v2417 = vadd.f32 %v2168, %v2387
    %v2418 = vadd.f32 %v2169, %v2400
    %v2419 = vadd.f32 %v2170, %v2413
    %v2420 = vmul.f32 %v2416, 0.5
    %v2421 = vtanh.pop %v2420
    %v2422 = vmul.f32 %v2421, 0.5
    %v2423 = vadd.f32 %v2422, 0.5
    %v2424 = vmul.f32 %v2417, 0.5
    %v2425 = vtanh.pop %v2424
    %v2426 = vmul.f32 %v2425, 0.5
    %v2427 = vadd.f32 %v2426, 0.5
    %v2428 = vtanh.pop %v2418
    %v2429 = vmul.f32 %v2419, 0.5
    %v2430 = vtanh.pop %v2429
    %v2431 = vmul.f32 %v2430, 0.5
    %v2432 = vadd.f32 %v2431, 0.5
    %v2433 = vmul.f32 %v2427, %v2161
    %v2434 = vmul.f32 %v2423, %v2428
    %v2435 = vadd.f32 %v2433, %v2434
    %v2436 = vtanh.pop %v2435
    %v2437 = vmul.f32 %v2432, %v2436
    %s2438 = scalar_lea.vmem [#allocation17], 48
    %2439 = vst [vmem:[%s2438] sm:$0xff] %v2437
    %s2440 = scalar_lea.vmem [#allocation2], 224
    %v2441 = vld [vmem:[%s2440] sm:$0xff]
    %v2442 = vld [vmem:[%s2440 + $0x8] sm:$0xff]
    %v2443 = vld [vmem:[%s2440 + $0x10] sm:$0xff]
    %v2444 = vld [vmem:[%s2440 + $0x18] sm:$0xff]
    %v2445 = vpack.c.bf16 %v2437, %v2437
    %v2446 = vld [vmem:[#allocation9] sm:$0xff]
    %v2447 = vld [vmem:[#allocation9 + $0x8] sm:$0xff]
    %v2448 = vld [vmem:[#allocation9 + $0x10] sm:$0xff]
    %v2449 = vld [vmem:[#allocation9 + $0x18] sm:$0xff]
    %v2450 = vld [vmem:[#allocation9 + $0x20] sm:$0xff]
    %v2451 = vld [vmem:[#allocation9 + $0x28] sm:$0xff]
    %v2452 = vld [vmem:[#allocation9 + $0x30] sm:$0xff]
    %v2453 = vld [vmem:[#allocation9 + $0x38] sm:$0xff]
    %v2454 = vld [vmem:[#allocation9 + $0x40] sm:$0xff]
    %v2455 = vld [vmem:[#allocation9 + $0x48] sm:$0xff]
    %v2456 = vld [vmem:[#allocation9 + $0x50] sm:$0xff]
    %v2457 = vld [vmem:[#allocation9 + $0x58] sm:$0xff]
    %v2458 = vld [vmem:[#allocation9 + $0x60] sm:$0xff]
    %v2459 = vld [vmem:[#allocation9 + $0x68] sm:$0xff]
    %v2460 = vld [vmem:[#allocation9 + $0x70] sm:$0xff]
    %v2461 = vld [vmem:[#allocation9 + $0x78] sm:$0xff]
    %v2462 = vld [vmem:[#allocation9 + $0x80] sm:$0xff]
    %v2463 = vld [vmem:[#allocation9 + $0x88] sm:$0xff]
    %v2464 = vld [vmem:[#allocation9 + $0x90] sm:$0xff]
    %v2465 = vld [vmem:[#allocation9 + $0x98] sm:$0xff]
    %v2466 = vld [vmem:[#allocation9 + $0xa0] sm:$0xff]
    %v2467 = vld [vmem:[#allocation9 + $0xa8] sm:$0xff]
    %v2468 = vld [vmem:[#allocation9 + $0xb0] sm:$0xff]
    %v2469 = vld [vmem:[#allocation9 + $0xb8] sm:$0xff]
    %v2470 = vld [vmem:[#allocation9 + $0xc0] sm:$0xff]
    %v2471 = vld [vmem:[#allocation9 + $0xc8] sm:$0xff]
    %v2472 = vld [vmem:[#allocation9 + $0xd0] sm:$0xff]
    %v2473 = vld [vmem:[#allocation9 + $0xd8] sm:$0xff]
    %v2474 = vld [vmem:[#allocation9 + $0xe0] sm:$0xff]
    %v2475 = vld [vmem:[#allocation9 + $0xe8] sm:$0xff]
    %v2476 = vld [vmem:[#allocation9 + $0xf0] sm:$0xff]
    %v2477 = vld [vmem:[#allocation9 + $0xf8] sm:$0xff]
    %v2510 = vunpack.c.l.b16 %v2446
    %v2511 = vunpack.c.h.b16 %v2446
    %v2512 = vunpack.c.l.b16 %v2447
    %v2513 = vunpack.c.h.b16 %v2447
    %v2514 = vunpack.c.l.b16 %v2448
    %v2515 = vunpack.c.h.b16 %v2448
    %v2516 = vunpack.c.l.b16 %v2449
    %v2517 = vunpack.c.h.b16 %v2449
    %v2518 = vunpack.c.l.b16 %v2450
    %v2519 = vunpack.c.h.b16 %v2450
    %v2520 = vunpack.c.l.b16 %v2451
    %v2521 = vunpack.c.h.b16 %v2451
    %v2522 = vunpack.c.l.b16 %v2452
    %v2523 = vunpack.c.h.b16 %v2452
    %v2524 = vunpack.c.l.b16 %v2453
    %v2525 = vunpack.c.h.b16 %v2453
    %v2526 = vunpack.c.l.b16 %v2454
    %v2527 = vunpack.c.h.b16 %v2454
    %v2528 = vunpack.c.l.b16 %v2455
    %v2529 = vunpack.c.h.b16 %v2455
    %v2530 = vunpack.c.l.b16 %v2456
    %v2531 = vunpack.c.h.b16 %v2456
    %v2532 = vunpack.c.l.b16 %v2457
    %v2533 = vunpack.c.h.b16 %v2457
    %v2534 = vunpack.c.l.b16 %v2458
    %v2535 = vunpack.c.h.b16 %v2458
    %v2536 = vunpack.c.l.b16 %v2459
    %v2537 = vunpack.c.h.b16 %v2459
    %v2538 = vunpack.c.l.b16 %v2460
    %v2539 = vunpack.c.h.b16 %v2460
    %v2540 = vunpack.c.l.b16 %v2461
    %v2541 = vunpack.c.h.b16 %v2461
    %v2542 = vunpack.c.l.b16 %v2462
    %v2543 = vunpack.c.h.b16 %v2462
    %v2544 = vunpack.c.l.b16 %v2463
    %v2545 = vunpack.c.h.b16 %v2463
    %v2546 = vunpack.c.l.b16 %v2464
    %v2547 = vunpack.c.h.b16 %v2464
    %v2548 = vunpack.c.l.b16 %v2465
    %v2549 = vunpack.c.h.b16 %v2465
    %v2550 = vunpack.c.l.b16 %v2466
    %v2551 = vunpack.c.h.b16 %v2466
    %v2552 = vunpack.c.l.b16 %v2467
    %v2553 = vunpack.c.h.b16 %v2467
    %v2554 = vunpack.c.l.b16 %v2468
    %v2555 = vunpack.c.h.b16 %v2468
    %v2556 = vunpack.c.l.b16 %v2469
    %v2557 = vunpack.c.h.b16 %v2469
    %v2558 = vunpack.c.l.b16 %v2470
    %v2559 = vunpack.c.h.b16 %v2470
    %v2560 = vunpack.c.l.b16 %v2471
    %v2561 = vunpack.c.h.b16 %v2471
    %v2562 = vunpack.c.l.b16 %v2472
    %v2563 = vunpack.c.h.b16 %v2472
    %v2564 = vunpack.c.l.b16 %v2473
    %v2565 = vunpack.c.h.b16 %v2473
    %v2566 = vunpack.c.l.b16 %v2474
    %v2567 = vunpack.c.h.b16 %v2474
    %v2568 = vunpack.c.l.b16 %v2475
    %v2569 = vunpack.c.h.b16 %v2475
    %v2570 = vunpack.c.l.b16 %v2476
    %v2571 = vunpack.c.h.b16 %v2476
    %v2572 = vunpack.c.l.b16 %v2477
    %v2573 = vunpack.c.h.b16 %v2477
    %v2574 = vpack.c.b16 %v2514, %v2510
    %v2575 = vpack.c.b16 %v2515, %v2511
    %v2576 = vpack.c.b16 %v2516, %v2512
    %v2577 = vpack.c.b16 %v2517, %v2513
    %v2578 = vpack.c.b16 %v2522, %v2518
    %v2579 = vpack.c.b16 %v2523, %v2519
    %v2580 = vpack.c.b16 %v2524, %v2520
    %v2581 = vpack.c.b16 %v2525, %v2521
    %v2582 = vpack.c.b16 %v2530, %v2526
    %v2583 = vpack.c.b16 %v2531, %v2527
    %v2584 = vpack.c.b16 %v2532, %v2528
    %v2585 = vpack.c.b16 %v2533, %v2529
    %v2586 = vpack.c.b16 %v2538, %v2534
    %v2587 = vpack.c.b16 %v2539, %v2535
    %v2588 = vpack.c.b16 %v2540, %v2536
    %v2589 = vpack.c.b16 %v2541, %v2537
    %v2590 = vpack.c.b16 %v2546, %v2542
    %v2591 = vpack.c.b16 %v2547, %v2543
    %v2592 = vpack.c.b16 %v2548, %v2544
    %v2593 = vpack.c.b16 %v2549, %v2545
    %v2594 = vpack.c.b16 %v2554, %v2550
    %v2595 = vpack.c.b16 %v2555, %v2551
    %v2596 = vpack.c.b16 %v2556, %v2552
    %v2597 = vpack.c.b16 %v2557, %v2553
    %v2598 = vpack.c.b16 %v2562, %v2558
    %v2599 = vpack.c.b16 %v2563, %v2559
    %v2600 = vpack.c.b16 %v2564, %v2560
    %v2601 = vpack.c.b16 %v2565, %v2561
    %v2602 = vpack.c.b16 %v2570, %v2566
    %v2603 = vpack.c.b16 %v2571, %v2567
    %v2604 = vpack.c.b16 %v2572, %v2568
    %v2605 = vpack.c.b16 %v2573, %v2569
    %2638 = vmatpush.bf16.msra.mxu0 %v2602
    %2639 = vmatpush.bf16.msra.mxu0 %v2598
    %2640 = vmatpush.bf16.msra.mxu0 %v2594
    %2641 = vmatpush.bf16.msra.mxu0 %v2590
    %2642 = vmatpush.bf16.msra.mxu0 %v2586
    %2643 = vmatpush.bf16.msra.mxu0 %v2582
    %2644 = vmatpush.bf16.msra.mxu0 %v2578
    %2645 = vmatpush.bf16.msra.mxu0 %v2574
    %2646 = vmatmul.bf16.gmra.mxu0 %v2445
    %v2647 = vpop.f32.mrf.mxu0
    %v2648 = vadd.f32 0.0, %v2647
    %v2649 = vpop.f32.mrf.mxu0
    %2650 = vdwg.mxu0
    %2651 = vmatpush.bf16.msra.mxu0 %v2603
    %2652 = vmatpush.bf16.msra.mxu0 %v2599
    %2653 = vmatpush.bf16.msra.mxu0 %v2595
    %2654 = vmatpush.bf16.msra.mxu0 %v2591
    %2655 = vmatpush.bf16.msra.mxu0 %v2587
    %2656 = vmatpush.bf16.msra.mxu0 %v2583
    %2657 = vmatpush.bf16.msra.mxu0 %v2579
    %2658 = vmatpush.bf16.msra.mxu0 %v2575
    %2659 = vmatmul.bf16.gmra.mxu0 %v2445
    %v2660 = vpop.f32.mrf.mxu0
    %v2661 = vadd.f32 0.0, %v2660
    %v2662 = vpop.f32.mrf.mxu0
    %2663 = vdwg.mxu0
    %2664 = vmatpush.bf16.msra.mxu0 %v2604
    %2665 = vmatpush.bf16.msra.mxu0 %v2600
    %2666 = vmatpush.bf16.msra.mxu0 %v2596
    %2667 = vmatpush.bf16.msra.mxu0 %v2592
    %2668 = vmatpush.bf16.msra.mxu0 %v2588
    %2669 = vmatpush.bf16.msra.mxu0 %v2584
    %2670 = vmatpush.bf16.msra.mxu0 %v2580
    %2671 = vmatpush.bf16.msra.mxu0 %v2576
    %2672 = vmatmul.bf16.gmra.mxu0 %v2445
    %v2673 = vpop.f32.mrf.mxu0
    %v2674 = vadd.f32 0.0, %v2673
    %v2675 = vpop.f32.mrf.mxu0
    %2676 = vdwg.mxu0
    %2677 = vmatpush.bf16.msra.mxu0 %v2605
    %2678 = vmatpush.bf16.msra.mxu0 %v2601
    %2679 = vmatpush.bf16.msra.mxu0 %v2597
    %2680 = vmatpush.bf16.msra.mxu0 %v2593
    %2681 = vmatpush.bf16.msra.mxu0 %v2589
    %2682 = vmatpush.bf16.msra.mxu0 %v2585
    %2683 = vmatpush.bf16.msra.mxu0 %v2581
    %2684 = vmatpush.bf16.msra.mxu0 %v2577
    %2685 = vmatmul.bf16.gmra.mxu0 %v2445
    %v2686 = vpop.f32.mrf.mxu0
    %v2687 = vadd.f32 0.0, %v2686
    %v2688 = vpop.f32.mrf.mxu0
    %2689 = vdwg.mxu0
    %v2690 = vadd.f32 %v2441, %v2648
    %v2691 = vadd.f32 %v2442, %v2661
    %v2692 = vadd.f32 %v2443, %v2674
    %v2693 = vadd.f32 %v2444, %v2687
    %v2694 = vmul.f32 %v2690, 0.5
    %v2695 = vtanh.pop %v2694
    %v2696 = vmul.f32 %v2695, 0.5
    %v2697 = vadd.f32 %v2696, 0.5
    %v2698 = vmul.f32 %v2691, 0.5
    %v2699 = vtanh.pop %v2698
    %v2700 = vmul.f32 %v2699, 0.5
    %v2701 = vadd.f32 %v2700, 0.5
    %v2702 = vtanh.pop %v2692
    %v2703 = vmul.f32 %v2693, 0.5
    %v2704 = vtanh.pop %v2703
    %v2705 = vmul.f32 %v2704, 0.5
    %v2706 = vadd.f32 %v2705, 0.5
    %v2707 = vmul.f32 %v2701, %v2435
    %v2708 = vmul.f32 %v2697, %v2702
    %v2709 = vadd.f32 %v2707, %v2708
    %v2710 = vtanh.pop %v2709
    %v2711 = vmul.f32 %v2706, %v2710
    %s2712 = scalar_lea.vmem [#allocation17], 56
    %2713 = vst [vmem:[%s2712] sm:$0xff] %v2711
    %2714 = vst [vmem:[#allocation18] sm:$0xff] %v2711
    %2715 = vst [vmem:[#allocation20] sm:$0xff] %v2709
    %v2716 = vld [vmem:[#allocation17] sm:$0xff]
    %v2717 = vld [vmem:[#allocation17 + $0x8] sm:$0xff]
    %v2718 = vld [vmem:[#allocation17 + $0x10] sm:$0xff]
    %v2719 = vld [vmem:[#allocation17 + $0x18] sm:$0xff]
    %v2720 = vld [vmem:[#allocation17 + $0x20] sm:$0xff]
    %v2721 = vld [vmem:[#allocation17 + $0x28] sm:$0xff]
    %v2722 = vld [vmem:[#allocation17 + $0x30] sm:$0xff]
    %v2723 = vld [vmem:[#allocation17 + $0x38] sm:$0xff]
    %v2724 = vpack.c.bf16 %v2717, %v2716
    %v2725 = vpack.c.bf16 %v2719, %v2718
    %v2726 = vpack.c.bf16 %v2721, %v2720
    %v2727 = vpack.c.bf16 %v2723, %v2722
    %v2728 = vld [vmem:[#allocation8] sm:$0xff]
    %v2729 = vld [vmem:[#allocation8 + $0x8] sm:$0xff]
    %v2730 = vld [vmem:[#allocation8 + $0x10] sm:$0xff]
    %v2731 = vld [vmem:[#allocation8 + $0x18] sm:$0xff]
    %v2732 = vld [vmem:[#allocation8 + $0x20] sm:$0xff]
    %v2733 = vld [vmem:[#allocation8 + $0x28] sm:$0xff]
    %v2734 = vld [vmem:[#allocation8 + $0x30] sm:$0xff]
    %v2735 = vld [vmem:[#allocation8 + $0x38] sm:$0xff]
    %v2736 = vld [vmem:[#allocation8 + $0x40] sm:$0xff]
    %v2737 = vld [vmem:[#allocation8 + $0x48] sm:$0xff]
    %v2738 = vld [vmem:[#allocation8 + $0x50] sm:$0xff]
    %v2739 = vld [vmem:[#allocation8 + $0x58] sm:$0xff]
    %v2740 = vld [vmem:[#allocation8 + $0x60] sm:$0xff]
    %v2741 = vld [vmem:[#allocation8 + $0x68] sm:$0xff]
    %v2742 = vld [vmem:[#allocation8 + $0x70] sm:$0xff]
    %v2743 = vld [vmem:[#allocation8 + $0x78] sm:$0xff]
    %v2744 = vld [vmem:[#allocation8 + $0x80] sm:$0xff]
    %v2745 = vld [vmem:[#allocation8 + $0x88] sm:$0xff]
    %v2746 = vld [vmem:[#allocation8 + $0x90] sm:$0xff]
    %v2747 = vld [vmem:[#allocation8 + $0x98] sm:$0xff]
    %v2748 = vld [vmem:[#allocation8 + $0xa0] sm:$0xff]
    %v2749 = vld [vmem:[#allocation8 + $0xa8] sm:$0xff]
    %v2750 = vld [vmem:[#allocation8 + $0xb0] sm:$0xff]
    %v2751 = vld [vmem:[#allocation8 + $0xb8] sm:$0xff]
    %v2752 = vld [vmem:[#allocation8 + $0xc0] sm:$0xff]
    %v2753 = vld [vmem:[#allocation8 + $0xc8] sm:$0xff]
    %v2754 = vld [vmem:[#allocation8 + $0xd0] sm:$0xff]
    %v2755 = vld [vmem:[#allocation8 + $0xd8] sm:$0xff]
    %v2756 = vld [vmem:[#allocation8 + $0xe0] sm:$0xff]
    %v2757 = vld [vmem:[#allocation8 + $0xe8] sm:$0xff]
    %v2758 = vld [vmem:[#allocation8 + $0xf0] sm:$0xff]
    %v2759 = vld [vmem:[#allocation8 + $0xf8] sm:$0xff]
    %v2760 = vld [vmem:[#allocation12] sm:$0xf]
    %v2762 = vperm.slane %v2760, 0
    %v2763 = vperm.slane %v2760, 1
    %v2764 = vperm.slane %v2760, 2
    %v2765 = vperm.slane %v2760, 3
    %v2802 = vunpack.c.l.b16 %v2728
    %v2803 = vunpack.c.h.b16 %v2728
    %v2804 = vunpack.c.l.b16 %v2729
    %v2805 = vunpack.c.h.b16 %v2729
    %v2806 = vunpack.c.l.b16 %v2730
    %v2807 = vunpack.c.h.b16 %v2730
    %v2808 = vunpack.c.l.b16 %v2731
    %v2809 = vunpack.c.h.b16 %v2731
    %v2810 = vunpack.c.l.b16 %v2732
    %v2811 = vunpack.c.h.b16 %v2732
    %v2812 = vunpack.c.l.b16 %v2733
    %v2813 = vunpack.c.h.b16 %v2733
    %v2814 = vunpack.c.l.b16 %v2734
    %v2815 = vunpack.c.h.b16 %v2734
    %v2816 = vunpack.c.l.b16 %v2735
    %v2817 = vunpack.c.h.b16 %v2735
    %v2818 = vunpack.c.l.b16 %v2736
    %v2819 = vunpack.c.h.b16 %v2736
    %v2820 = vunpack.c.l.b16 %v2737
    %v2821 = vunpack.c.h.b16 %v2737
    %v2822 = vunpack.c.l.b16 %v2738
    %v2823 = vunpack.c.h.b16 %v2738
    %v2824 = vunpack.c.l.b16 %v2739
    %v2825 = vunpack.c.h.b16 %v2739
    %v2826 = vunpack.c.l.b16 %v2740
    %v2827 = vunpack.c.h.b16 %v2740
    %v2828 = vunpack.c.l.b16 %v2741
    %v2829 = vunpack.c.h.b16 %v2741
    %v2830 = vunpack.c.l.b16 %v2742
    %v2831 = vunpack.c.h.b16 %v2742
    %v2832 = vunpack.c.l.b16 %v2743
    %v2833 = vunpack.c.h.b16 %v2743
    %v2834 = vunpack.c.l.b16 %v2744
    %v2835 = vunpack.c.h.b16 %v2744
    %v2836 = vunpack.c.l.b16 %v2745
    %v2837 = vunpack.c.h.b16 %v2745
    %v2838 = vunpack.c.l.b16 %v2746
    %v2839 = vunpack.c.h.b16 %v2746
    %v2840 = vunpack.c.l.b16 %v2747
    %v2841 = vunpack.c.h.b16 %v2747
    %v2842 = vunpack.c.l.b16 %v2748
    %v2843 = vunpack.c.h.b16 %v2748
    %v2844 = vunpack.c.l.b16 %v2749
    %v2845 = vunpack.c.h.b16 %v2749
    %v2846 = vunpack.c.l.b16 %v2750
    %v2847 = vunpack.c.h.b16 %v2750
    %v2848 = vunpack.c.l.b16 %v2751
    %v2849 = vunpack.c.h.b16 %v2751
    %v2850 = vunpack.c.l.b16 %v2752
    %v2851 = vunpack.c.h.b16 %v2752
    %v2852 = vunpack.c.l.b16 %v2753
    %v2853 = vunpack.c.h.b16 %v2753
    %v2854 = vunpack.c.l.b16 %v2754
    %v2855 = vunpack.c.h.b16 %v2754
    %v2856 = vunpack.c.l.b16 %v2755
    %v2857 = vunpack.c.h.b16 %v2755
    %v2858 = vunpack.c.l.b16 %v2756
    %v2859 = vunpack.c.h.b16 %v2756
    %v2860 = vunpack.c.l.b16 %v2757
    %v2861 = vunpack.c.h.b16 %v2757
    %v2862 = vunpack.c.l.b16 %v2758
    %v2863 = vunpack.c.h.b16 %v2758
    %v2864 = vunpack.c.l.b16 %v2759
    %v2865 = vunpack.c.h.b16 %v2759
    %v2866 = vpack.c.b16 %v2806, %v2802
    %v2867 = vpack.c.b16 %v2807, %v2803
    %v2868 = vpack.c.b16 %v2808, %v2804
    %v2869 = vpack.c.b16 %v2809, %v2805
    %v2870 = vpack.c.b16 %v2814, %v2810
    %v2871 = vpack.c.b16 %v2815, %v2811
    %v2872 = vpack.c.b16 %v2816, %v2812
    %v2873 = vpack.c.b16 %v2817, %v2813
    %v2874 = vpack.c.b16 %v2822, %v2818
    %v2875 = vpack.c.b16 %v2823, %v2819
    %v2876 = vpack.c.b16 %v2824, %v2820
    %v2877 = vpack.c.b16 %v2825, %v2821
    %v2878 = vpack.c.b16 %v2830, %v2826
    %v2879 = vpack.c.b16 %v2831, %v2827
    %v2880 = vpack.c.b16 %v2832, %v2828
    %v2881 = vpack.c.b16 %v2833, %v2829
    %v2882 = vpack.c.b16 %v2838, %v2834
    %v2883 = vpack.c.b16 %v2839, %v2835
    %v2884 = vpack.c.b16 %v2840, %v2836
    %v2885 = vpack.c.b16 %v2841, %v2837
    %v2886 = vpack.c.b16 %v2846, %v2842
    %v2887 = vpack.c.b16 %v2847, %v2843
    %v2888 = vpack.c.b16 %v2848, %v2844
    %v2889 = vpack.c.b16 %v2849, %v2845
    %v2890 = vpack.c.b16 %v2854, %v2850
    %v2891 = vpack.c.b16 %v2855, %v2851
    %v2892 = vpack.c.b16 %v2856, %v2852
    %v2893 = vpack.c.b16 %v2857, %v2853
    %v2894 = vpack.c.b16 %v2862, %v2858
    %v2895 = vpack.c.b16 %v2863, %v2859
    %v2896 = vpack.c.b16 %v2864, %v2860
    %v2897 = vpack.c.b16 %v2865, %v2861
    %2930 = vmatpush.bf16.msra.mxu0 %v2894
    %2931 = vmatpush.bf16.msra.mxu0 %v2890
    %2932 = vmatpush.bf16.msra.mxu0 %v2886
    %2933 = vmatpush.bf16.msra.mxu0 %v2882
    %2934 = vmatpush.bf16.msra.mxu0 %v2878
    %2935 = vmatpush.bf16.msra.mxu0 %v2874
    %2936 = vmatpush.bf16.msra.mxu0 %v2870
    %2937 = vmatpush.bf16.msra.mxu0 %v2866
    %2938 = vmatmul.bf16.gmra.mxu0 %v2724
    %v2939 = vpop.f32.mrf.mxu0
    %v2940 = vadd.f32 %v2762, %v2939
    %v2941 = vpop.f32.mrf.mxu0
    %v2942 = vadd.f32 %v2762, %v2941
    %2943 = vmatmul.bf16.gmra.mxu0 %v2725
    %v2944 = vpop.f32.mrf.mxu0
    %v2945 = vadd.f32 %v2762, %v2944
    %v2946 = vpop.f32.mrf.mxu0
    %v2947 = vadd.f32 %v2762, %v2946
    %2948 = vmatmul.bf16.gmra.mxu0 %v2726
    %v2949 = vpop.f32.mrf.mxu0
    %v2950 = vadd.f32 %v2762, %v2949
    %v2951 = vpop.f32.mrf.mxu0
    %v2952 = vadd.f32 %v2762, %v2951
    %2953 = vmatmul.bf16.gmra.mxu0 %v2727
    %v2954 = vpop.f32.mrf.mxu0
    %v2955 = vadd.f32 %v2762, %v2954
    %v2956 = vpop.f32.mrf.mxu0
    %v2957 = vadd.f32 %v2762, %v2956
    %2958 = vdwg.mxu0
    %2959 = vmatpush.bf16.msra.mxu0 %v2895
    %2960 = vmatpush.bf16.msra.mxu0 %v2891
    %2961 = vmatpush.bf16.msra.mxu0 %v2887
    %2962 = vmatpush.bf16.msra.mxu0 %v2883
    %2963 = vmatpush.bf16.msra.mxu0 %v2879
    %2964 = vmatpush.bf16.msra.mxu0 %v2875
    %2965 = vmatpush.bf16.msra.mxu0 %v2871
    %2966 = vmatpush.bf16.msra.mxu0 %v2867
    %2967 = vmatmul.bf16.gmra.mxu0 %v2724
    %v2968 = vpop.f32.mrf.mxu0
    %v2969 = vadd.f32 %v2763, %v2968
    %v2970 = vpop.f32.mrf.mxu0
    %v2971 = vadd.f32 %v2763, %v2970
    %2972 = vmatmul.bf16.gmra.mxu0 %v2725
    %v2973 = vpop.f32.mrf.mxu0
    %v2974 = vadd.f32 %v2763, %v2973
    %v2975 = vpop.f32.mrf.mxu0
    %v2976 = vadd.f32 %v2763, %v2975
    %2977 = vmatmul.bf16.gmra.mxu0 %v2726
    %v2978 = vpop.f32.mrf.mxu0
    %v2979 = vadd.f32 %v2763, %v2978
    %v2980 = vpop.f32.mrf.mxu0
    %v2981 = vadd.f32 %v2763, %v2980
    %2982 = vmatmul.bf16.gmra.mxu0 %v2727
    %v2983 = vpop.f32.mrf.mxu0
    %v2984 = vadd.f32 %v2763, %v2983
    %v2985 = vpop.f32.mrf.mxu0
    %v2986 = vadd.f32 %v2763, %v2985
    %2987 = vdwg.mxu0
    %2988 = vmatpush.bf16.msra.mxu0 %v2896
    %2989 = vmatpush.bf16.msra.mxu0 %v2892
    %2990 = vmatpush.bf16.msra.mxu0 %v2888
    %2991 = vmatpush.bf16.msra.mxu0 %v2884
    %2992 = vmatpush.bf16.msra.mxu0 %v2880
    %2993 = vmatpush.bf16.msra.mxu0 %v2876
    %2994 = vmatpush.bf16.msra.mxu0 %v2872
    %2995 = vmatpush.bf16.msra.mxu0 %v2868
    %2996 = vmatmul.bf16.gmra.mxu0 %v2724
    %v2997 = vpop.f32.mrf.mxu0
    %v2998 = vadd.f32 %v2764, %v2997
    %v2999 = vpop.f32.mrf.mxu0
    %v3000 = vadd.f32 %v2764, %v2999
    %3001 = vmatmul.bf16.gmra.mxu0 %v2725
    %v3002 = vpop.f32.mrf.mxu0
    %v3003 = vadd.f32 %v2764, %v3002
    %v3004 = vpop.f32.mrf.mxu0
    %v3005 = vadd.f32 %v2764, %v3004
    %3006 = vmatmul.bf16.gmra.mxu0 %v2726
    %v3007 = vpop.f32.mrf.mxu0
    %v3008 = vadd.f32 %v2764, %v3007
    %v3009 = vpop.f32.mrf.mxu0
    %v3010 = vadd.f32 %v2764, %v3009
    %3011 = vmatmul.bf16.gmra.mxu0 %v2727
    %v3012 = vpop.f32.mrf.mxu0
    %v3013 = vadd.f32 %v2764, %v3012
    %v3014 = vpop.f32.mrf.mxu0
    %v3015 = vadd.f32 %v2764, %v3014
    %3016 = vdwg.mxu0
    %3017 = vmatpush.bf16.msra.mxu0 %v2897
    %3018 = vmatpush.bf16.msra.mxu0 %v2893
    %3019 = vmatpush.bf16.msra.mxu0 %v2889
    %3020 = vmatpush.bf16.msra.mxu0 %v2885
    %3021 = vmatpush.bf16.msra.mxu0 %v2881
    %3022 = vmatpush.bf16.msra.mxu0 %v2877
    %3023 = vmatpush.bf16.msra.mxu0 %v2873
    %3024 = vmatpush.bf16.msra.mxu0 %v2869
    %3025 = vmatmul.bf16.gmra.mxu0 %v2724
    %v3026 = vpop.f32.mrf.mxu0
    %v3027 = vadd.f32 %v2765, %v3026
    %v3028 = vpop.f32.mrf.mxu0
    %v3029 = vadd.f32 %v2765, %v3028
    %3030 = vmatmul.bf16.gmra.mxu0 %v2725
    %v3031 = vpop.f32.mrf.mxu0
    %v3032 = vadd.f32 %v2765, %v3031
    %v3033 = vpop.f32.mrf.mxu0
    %v3034 = vadd.f32 %v2765, %v3033
    %3035 = vmatmul.bf16.gmra.mxu0 %v2726
    %v3036 = vpop.f32.mrf.mxu0
    %v3037 = vadd.f32 %v2765, %v3036
    %v3038 = vpop.f32.mrf.mxu0
    %v3039 = vadd.f32 %v2765, %v3038
    %3040 = vmatmul.bf16.gmra.mxu0 %v2727
    %v3041 = vpop.f32.mrf.mxu0
    %v3042 = vadd.f32 %v2765, %v3041
    %v3043 = vpop.f32.mrf.mxu0
    %v3044 = vadd.f32 %v2765, %v3043
    %3045 = vdwg.mxu0
    %3046 = vst [vmem:[#allocation2] sm:$0xff] %v2940
    %3047 = vst [vmem:[#allocation2 + $0x8] sm:$0xff] %v2969
    %3048 = vst [vmem:[#allocation2 + $0x10] sm:$0xff] %v2998
    %3049 = vst [vmem:[#allocation2 + $0x18] sm:$0xff] %v3027
    %3050 = vst [vmem:[#allocation2 + $0x20] sm:$0xff] %v2942
    %3051 = vst [vmem:[#allocation2 + $0x28] sm:$0xff] %v2971
    %3052 = vst [vmem:[#allocation2 + $0x30] sm:$0xff] %v3000
    %3053 = vst [vmem:[#allocation2 + $0x38] sm:$0xff] %v3029
    %3054 = vst [vmem:[#allocation2 + $0x40] sm:$0xff] %v2945
    %3055 = vst [vmem:[#allocation2 + $0x48] sm:$0xff] %v2974
    %3056 = vst [vmem:[#allocation2 + $0x50] sm:$0xff] %v3003
    %3057 = vst [vmem:[#allocation2 + $0x58] sm:$0xff] %v3032
    %3058 = vst [vmem:[#allocation2 + $0x60] sm:$0xff] %v2947
    %3059 = vst [vmem:[#allocation2 + $0x68] sm:$0xff] %v2976
    %3060 = vst [vmem:[#allocation2 + $0x70] sm:$0xff] %v3005
    %3061 = vst [vmem:[#allocation2 + $0x78] sm:$0xff] %v3034
    %3062 = vst [vmem:[#allocation2 + $0x80] sm:$0xff] %v2950
    %3063 = vst [vmem:[#allocation2 + $0x88] sm:$0xff] %v2979
    %3064 = vst [vmem:[#allocation2 + $0x90] sm:$0xff] %v3008
    %3065 = vst [vmem:[#allocation2 + $0x98] sm:$0xff] %v3037
    %3066 = vst [vmem:[#allocation2 + $0xa0] sm:$0xff] %v2952
    %3067 = vst [vmem:[#allocation2 + $0xa8] sm:$0xff] %v2981
    %3068 = vst [vmem:[#allocation2 + $0xb0] sm:$0xff] %v3010
    %3069 = vst [vmem:[#allocation2 + $0xb8] sm:$0xff] %v3039
    %3070 = vst [vmem:[#allocation2 + $0xc0] sm:$0xff] %v2955
    %3071 = vst [vmem:[#allocation2 + $0xc8] sm:$0xff] %v2984
    %3072 = vst [vmem:[#allocation2 + $0xd0] sm:$0xff] %v3013
    %3073 = vst [vmem:[#allocation2 + $0xd8] sm:$0xff] %v3042
    %3074 = vst [vmem:[#allocation2 + $0xe0] sm:$0xff] %v2957
    %3075 = vst [vmem:[#allocation2 + $0xe8] sm:$0xff] %v2986
    %3076 = vst [vmem:[#allocation2 + $0xf0] sm:$0xff] %v3015
    %3077 = vst [vmem:[#allocation2 + $0xf8] sm:$0xff] %v3044
    %s3078 = scalar_lea.vmem [#allocation14], 8
    %v3079 = vld [vmem:[%s3078] sm:$0xff]
    %s3080 = scalar_lea.vmem [#allocation15], 8
    %v3081 = vld [vmem:[%s3080] sm:$0xff]
    %v3082 = vld [vmem:[#allocation2] sm:$0xff]
    %v3083 = vld [vmem:[#allocation2 + $0x8] sm:$0xff]
    %v3084 = vld [vmem:[#allocation2 + $0x10] sm:$0xff]
    %v3085 = vld [vmem:[#allocation2 + $0x18] sm:$0xff]
    %v3086 = vpack.c.bf16 %v3079, %v3079
    %v3087 = vld [vmem:[#allocation11] sm:$0xff]
    %v3088 = vld [vmem:[#allocation11 + $0x8] sm:$0xff]
    %v3089 = vld [vmem:[#allocation11 + $0x10] sm:$0xff]
    %v3090 = vld [vmem:[#allocation11 + $0x18] sm:$0xff]
    %v3091 = vld [vmem:[#allocation11 + $0x20] sm:$0xff]
    %v3092 = vld [vmem:[#allocation11 + $0x28] sm:$0xff]
    %v3093 = vld [vmem:[#allocation11 + $0x30] sm:$0xff]
    %v3094 = vld [vmem:[#allocation11 + $0x38] sm:$0xff]
    %v3095 = vld [vmem:[#allocation11 + $0x40] sm:$0xff]
    %v3096 = vld [vmem:[#allocation11 + $0x48] sm:$0xff]
    %v3097 = vld [vmem:[#allocation11 + $0x50] sm:$0xff]
    %v3098 = vld [vmem:[#allocation11 + $0x58] sm:$0xff]
    %v3099 = vld [vmem:[#allocation11 + $0x60] sm:$0xff]
    %v3100 = vld [vmem:[#allocation11 + $0x68] sm:$0xff]
    %v3101 = vld [vmem:[#allocation11 + $0x70] sm:$0xff]
    %v3102 = vld [vmem:[#allocation11 + $0x78] sm:$0xff]
    %v3103 = vld [vmem:[#allocation11 + $0x80] sm:$0xff]
    %v3104 = vld [vmem:[#allocation11 + $0x88] sm:$0xff]
    %v3105 = vld [vmem:[#allocation11 + $0x90] sm:$0xff]
    %v3106 = vld [vmem:[#allocation11 + $0x98] sm:$0xff]
    %v3107 = vld [vmem:[#allocation11 + $0xa0] sm:$0xff]
    %v3108 = vld [vmem:[#allocation11 + $0xa8] sm:$0xff]
    %v3109 = vld [vmem:[#allocation11 + $0xb0] sm:$0xff]
    %v3110 = vld [vmem:[#allocation11 + $0xb8] sm:$0xff]
    %v3111 = vld [vmem:[#allocation11 + $0xc0] sm:$0xff]
    %v3112 = vld [vmem:[#allocation11 + $0xc8] sm:$0xff]
    %v3113 = vld [vmem:[#allocation11 + $0xd0] sm:$0xff]
    %v3114 = vld [vmem:[#allocation11 + $0xd8] sm:$0xff]
    %v3115 = vld [vmem:[#allocation11 + $0xe0] sm:$0xff]
    %v3116 = vld [vmem:[#allocation11 + $0xe8] sm:$0xff]
    %v3117 = vld [vmem:[#allocation11 + $0xf0] sm:$0xff]
    %v3118 = vld [vmem:[#allocation11 + $0xf8] sm:$0xff]
    %v3151 = vunpack.c.l.b16 %v3087
    %v3152 = vunpack.c.h.b16 %v3087
    %v3153 = vunpack.c.l.b16 %v3088
    %v3154 = vunpack.c.h.b16 %v3088
    %v3155 = vunpack.c.l.b16 %v3089
    %v3156 = vunpack.c.h.b16 %v3089
    %v3157 = vunpack.c.l.b16 %v3090
    %v3158 = vunpack.c.h.b16 %v3090
    %v3159 = vunpack.c.l.b16 %v3091
    %v3160 = vunpack.c.h.b16 %v3091
    %v3161 = vunpack.c.l.b16 %v3092
    %v3162 = vunpack.c.h.b16 %v3092
    %v3163 = vunpack.c.l.b16 %v3093
    %v3164 = vunpack.c.h.b16 %v3093
    %v3165 = vunpack.c.l.b16 %v3094
    %v3166 = vunpack.c.h.b16 %v3094
    %v3167 = vunpack.c.l.b16 %v3095
    %v3168 = vunpack.c.h.b16 %v3095
    %v3169 = vunpack.c.l.b16 %v3096
    %v3170 = vunpack.c.h.b16 %v3096
    %v3171 = vunpack.c.l.b16 %v3097
    %v3172 = vunpack.c.h.b16 %v3097
    %v3173 = vunpack.c.l.b16 %v3098
    %v3174 = vunpack.c.h.b16 %v3098
    %v3175 = vunpack.c.l.b16 %v3099
    %v3176 = vunpack.c.h.b16 %v3099
    %v3177 = vunpack.c.l.b16 %v3100
    %v3178 = vunpack.c.h.b16 %v3100
    %v3179 = vunpack.c.l.b16 %v3101
    %v3180 = vunpack.c.h.b16 %v3101
    %v3181 = vunpack.c.l.b16 %v3102
    %v3182 = vunpack.c.h.b16 %v3102
    %v3183 = vunpack.c.l.b16 %v3103
    %v3184 = vunpack.c.h.b16 %v3103
    %v3185 = vunpack.c.l.b16 %v3104
    %v3186 = vunpack.c.h.b16 %v3104
    %v3187 = vunpack.c.l.b16 %v3105
    %v3188 = vunpack.c.h.b16 %v3105
    %v3189 = vunpack.c.l.b16 %v3106
    %v3190 = vunpack.c.h.b16 %v3106
    %v3191 = vunpack.c.l.b16 %v3107
    %v3192 = vunpack.c.h.b16 %v3107
    %v3193 = vunpack.c.l.b16 %v3108
    %v3194 = vunpack.c.h.b16 %v3108
    %v3195 = vunpack.c.l.b16 %v3109
    %v3196 = vunpack.c.h.b16 %v3109
    %v3197 = vunpack.c.l.b16 %v3110
    %v3198 = vunpack.c.h.b16 %v3110
    %v3199 = vunpack.c.l.b16 %v3111
    %v3200 = vunpack.c.h.b16 %v3111
    %v3201 = vunpack.c.l.b16 %v3112
    %v3202 = vunpack.c.h.b16 %v3112
    %v3203 = vunpack.c.l.b16 %v3113
    %v3204 = vunpack.c.h.b16 %v3113
    %v3205 = vunpack.c.l.b16 %v3114
    %v3206 = vunpack.c.h.b16 %v3114
    %v3207 = vunpack.c.l.b16 %v3115
    %v3208 = vunpack.c.h.b16 %v3115
    %v3209 = vunpack.c.l.b16 %v3116
    %v3210 = vunpack.c.h.b16 %v3116
    %v3211 = vunpack.c.l.b16 %v3117
    %v3212 = vunpack.c.h.b16 %v3117
    %v3213 = vunpack.c.l.b16 %v3118
    %v3214 = vunpack.c.h.b16 %v3118
    %v3215 = vpack.c.b16 %v3155, %v3151
    %v3216 = vpack.c.b16 %v3156, %v3152
    %v3217 = vpack.c.b16 %v3157, %v3153
    %v3218 = vpack.c.b16 %v3158, %v3154
    %v3219 = vpack.c.b16 %v3163, %v3159
    %v3220 = vpack.c.b16 %v3164, %v3160
    %v3221 = vpack.c.b16 %v3165, %v3161
    %v3222 = vpack.c.b16 %v3166, %v3162
    %v3223 = vpack.c.b16 %v3171, %v3167
    %v3224 = vpack.c.b16 %v3172, %v3168
    %v3225 = vpack.c.b16 %v3173, %v3169
    %v3226 = vpack.c.b16 %v3174, %v3170
    %v3227 = vpack.c.b16 %v3179, %v3175
    %v3228 = vpack.c.b16 %v3180, %v3176
    %v3229 = vpack.c.b16 %v3181, %v3177
    %v3230 = vpack.c.b16 %v3182, %v3178
    %v3231 = vpack.c.b16 %v3187, %v3183
    %v3232 = vpack.c.b16 %v3188, %v3184
    %v3233 = vpack.c.b16 %v3189, %v3185
    %v3234 = vpack.c.b16 %v3190, %v3186
    %v3235 = vpack.c.b16 %v3195, %v3191
    %v3236 = vpack.c.b16 %v3196, %v3192
    %v3237 = vpack.c.b16 %v3197, %v3193
    %v3238 = vpack.c.b16 %v3198, %v3194
    %v3239 = vpack.c.b16 %v3203, %v3199
    %v3240 = vpack.c.b16 %v3204, %v3200
    %v3241 = vpack.c.b16 %v3205, %v3201
    %v3242 = vpack.c.b16 %v3206, %v3202
    %v3243 = vpack.c.b16 %v3211, %v3207
    %v3244 = vpack.c.b16 %v3212, %v3208
    %v3245 = vpack.c.b16 %v3213, %v3209
    %v3246 = vpack.c.b16 %v3214, %v3210
    %3279 = vmatpush.bf16.msra.mxu0 %v3243
    %3280 = vmatpush.bf16.msra.mxu0 %v3239
    %3281 = vmatpush.bf16.msra.mxu0 %v3235
    %3282 = vmatpush.bf16.msra.mxu0 %v3231
    %3283 = vmatpush.bf16.msra.mxu0 %v3227
    %3284 = vmatpush.bf16.msra.mxu0 %v3223
    %3285 = vmatpush.bf16.msra.mxu0 %v3219
    %3286 = vmatpush.bf16.msra.mxu0 %v3215
    %3287 = vmatmul.bf16.gmra.mxu0 %v3086
    %v3288 = vpop.f32.mrf.mxu0
    %v3289 = vadd.f32 0.0, %v3288
    %v3290 = vpop.f32.mrf.mxu0
    %3291 = vdwg.mxu0
    %3292 = vmatpush.bf16.msra.mxu0 %v3244
    %3293 = vmatpush.bf16.msra.mxu0 %v3240
    %3294 = vmatpush.bf16.msra.mxu0 %v3236
    %3295 = vmatpush.bf16.msra.mxu0 %v3232
    %3296 = vmatpush.bf16.msra.mxu0 %v3228
    %3297 = vmatpush.bf16.msra.mxu0 %v3224
    %3298 = vmatpush.bf16.msra.mxu0 %v3220
    %3299 = vmatpush.bf16.msra.mxu0 %v3216
    %3300 = vmatmul.bf16.gmra.mxu0 %v3086
    %v3301 = vpop.f32.mrf.mxu0
    %v3302 = vadd.f32 0.0, %v3301
    %v3303 = vpop.f32.mrf.mxu0
    %3304 = vdwg.mxu0
    %3305 = vmatpush.bf16.msra.mxu0 %v3245
    %3306 = vmatpush.bf16.msra.mxu0 %v3241
    %3307 = vmatpush.bf16.msra.mxu0 %v3237
    %3308 = vmatpush.bf16.msra.mxu0 %v3233
    %3309 = vmatpush.bf16.msra.mxu0 %v3229
    %3310 = vmatpush.bf16.msra.mxu0 %v3225
    %3311 = vmatpush.bf16.msra.mxu0 %v3221
    %3312 = vmatpush.bf16.msra.mxu0 %v3217
    %3313 = vmatmul.bf16.gmra.mxu0 %v3086
    %v3314 = vpop.f32.mrf.mxu0
    %v3315 = vadd.f32 0.0, %v3314
    %v3316 = vpop.f32.mrf.mxu0
    %3317 = vdwg.mxu0
    %3318 = vmatpush.bf16.msra.mxu0 %v3246
    %3319 = vmatpush.bf16.msra.mxu0 %v3242
    %3320 = vmatpush.bf16.msra.mxu0 %v3238
    %3321 = vmatpush.bf16.msra.mxu0 %v3234
    %3322 = vmatpush.bf16.msra.mxu0 %v3230
    %3323 = vmatpush.bf16.msra.mxu0 %v3226
    %3324 = vmatpush.bf16.msra.mxu0 %v3222
    %3325 = vmatpush.bf16.msra.mxu0 %v3218
    %3326 = vmatmul.bf16.gmra.mxu0 %v3086
    %v3327 = vpop.f32.mrf.mxu0
    %v3328 = vadd.f32 0.0, %v3327
    %v3329 = vpop.f32.mrf.mxu0
    %3330 = vdwg.mxu0
    %v3331 = vadd.f32 %v3082, %v3289
    %v3332 = vadd.f32 %v3083, %v3302
    %v3333 = vadd.f32 %v3084, %v3315
    %v3334 = vadd.f32 %v3085, %v3328
    %v3335 = vmul.f32 %v3331, 0.5
    %v3336 = vtanh.pop %v3335
    %v3337 = vmul.f32 %v3336, 0.5
    %v3338 = vadd.f32 %v3337, 0.5
    %v3339 = vmul.f32 %v3332, 0.5
    %v3340 = vtanh.pop %v3339
    %v3341 = vmul.f32 %v3340, 0.5
    %v3342 = vadd.f32 %v3341, 0.5
    %v3343 = vtanh.pop %v3333
    %v3344 = vmul.f32 %v3334, 0.5
    %v3345 = vtanh.pop %v3344
    %v3346 = vmul.f32 %v3345, 0.5
    %v3347 = vadd.f32 %v3346, 0.5
    %v3348 = vmul.f32 %v3342, %v3081
    %v3349 = vmul.f32 %v3338, %v3343
    %v3350 = vadd.f32 %v3348, %v3349
    %v3351 = vtanh.pop %v3350
    %v3352 = vmul.f32 %v3347, %v3351
    %3353 = vst [vmem:[#allocation17] sm:$0xff] %v3352
    %v3354 = vld [vmem:[%s796] sm:$0xff]
    %v3355 = vld [vmem:[%s796 + $0x8] sm:$0xff]
    %v3356 = vld [vmem:[%s796 + $0x10] sm:$0xff]
    %v3357 = vld [vmem:[%s796 + $0x18] sm:$0xff]
    %v3358 = vpack.c.bf16 %v3352, %v3352
    %v3359 = vld [vmem:[#allocation11] sm:$0xff]
    %v3360 = vld [vmem:[#allocation11 + $0x8] sm:$0xff]
    %v3361 = vld [vmem:[#allocation11 + $0x10] sm:$0xff]
    %v3362 = vld [vmem:[#allocation11 + $0x18] sm:$0xff]
    %v3363 = vld [vmem:[#allocation11 + $0x20] sm:$0xff]
    %v3364 = vld [vmem:[#allocation11 + $0x28] sm:$0xff]
    %v3365 = vld [vmem:[#allocation11 + $0x30] sm:$0xff]
    %v3366 = vld [vmem:[#allocation11 + $0x38] sm:$0xff]
    %v3367 = vld [vmem:[#allocation11 + $0x40] sm:$0xff]
    %v3368 = vld [vmem:[#allocation11 + $0x48] sm:$0xff]
    %v3369 = vld [vmem:[#allocation11 + $0x50] sm:$0xff]
    %v3370 = vld [vmem:[#allocation11 + $0x58] sm:$0xff]
    %v3371 = vld [vmem:[#allocation11 + $0x60] sm:$0xff]
    %v3372 = vld [vmem:[#allocation11 + $0x68] sm:$0xff]
    %v3373 = vld [vmem:[#allocation11 + $0x70] sm:$0xff]
    %v3374 = vld [vmem:[#allocation11 + $0x78] sm:$0xff]
    %v3375 = vld [vmem:[#allocation11 + $0x80] sm:$0xff]
    %v3376 = vld [vmem:[#allocation11 + $0x88] sm:$0xff]
    %v3377 = vld [vmem:[#allocation11 + $0x90] sm:$0xff]
    %v3378 = vld [vmem:[#allocation11 + $0x98] sm:$0xff]
    %v3379 = vld [vmem:[#allocation11 + $0xa0] sm:$0xff]
    %v3380 = vld [vmem:[#allocation11 + $0xa8] sm:$0xff]
    %v3381 = vld [vmem:[#allocation11 + $0xb0] sm:$0xff]
    %v3382 = vld [vmem:[#allocation11 + $0xb8] sm:$0xff]
    %v3383 = vld [vmem:[#allocation11 + $0xc0] sm:$0xff]
    %v3384 = vld [vmem:[#allocation11 + $0xc8] sm:$0xff]
    %v3385 = vld [vmem:[#allocation11 + $0xd0] sm:$0xff]
    %v3386 = vld [vmem:[#allocation11 + $0xd8] sm:$0xff]
    %v3387 = vld [vmem:[#allocation11 + $0xe0] sm:$0xff]
    %v3388 = vld [vmem:[#allocation11 + $0xe8] sm:$0xff]
    %v3389 = vld [vmem:[#allocation11 + $0xf0] sm:$0xff]
    %v3390 = vld [vmem:[#allocation11 + $0xf8] sm:$0xff]
    %v3423 = vunpack.c.l.b16 %v3359
    %v3424 = vunpack.c.h.b16 %v3359
    %v3425 = vunpack.c.l.b16 %v3360
    %v3426 = vunpack.c.h.b16 %v3360
    %v3427 = vunpack.c.l.b16 %v3361
    %v3428 = vunpack.c.h.b16 %v3361
    %v3429 = vunpack.c.l.b16 %v3362
    %v3430 = vunpack.c.h.b16 %v3362
    %v3431 = vunpack.c.l.b16 %v3363
    %v3432 = vunpack.c.h.b16 %v3363
    %v3433 = vunpack.c.l.b16 %v3364
    %v3434 = vunpack.c.h.b16 %v3364
    %v3435 = vunpack.c.l.b16 %v3365
    %v3436 = vunpack.c.h.b16 %v3365
    %v3437 = vunpack.c.l.b16 %v3366
    %v3438 = vunpack.c.h.b16 %v3366
    %v3439 = vunpack.c.l.b16 %v3367
    %v3440 = vunpack.c.h.b16 %v3367
    %v3441 = vunpack.c.l.b16 %v3368
    %v3442 = vunpack.c.h.b16 %v3368
    %v3443 = vunpack.c.l.b16 %v3369
    %v3444 = vunpack.c.h.b16 %v3369
    %v3445 = vunpack.c.l.b16 %v3370
    %v3446 = vunpack.c.h.b16 %v3370
    %v3447 = vunpack.c.l.b16 %v3371
    %v3448 = vunpack.c.h.b16 %v3371
    %v3449 = vunpack.c.l.b16 %v3372
    %v3450 = vunpack.c.h.b16 %v3372
    %v3451 = vunpack.c.l.b16 %v3373
    %v3452 = vunpack.c.h.b16 %v3373
    %v3453 = vunpack.c.l.b16 %v3374
    %v3454 = vunpack.c.h.b16 %v3374
    %v3455 = vunpack.c.l.b16 %v3375
    %v3456 = vunpack.c.h.b16 %v3375
    %v3457 = vunpack.c.l.b16 %v3376
    %v3458 = vunpack.c.h.b16 %v3376
    %v3459 = vunpack.c.l.b16 %v3377
    %v3460 = vunpack.c.h.b16 %v3377
    %v3461 = vunpack.c.l.b16 %v3378
    %v3462 = vunpack.c.h.b16 %v3378
    %v3463 = vunpack.c.l.b16 %v3379
    %v3464 = vunpack.c.h.b16 %v3379
    %v3465 = vunpack.c.l.b16 %v3380
    %v3466 = vunpack.c.h.b16 %v3380
    %v3467 = vunpack.c.l.b16 %v3381
    %v3468 = vunpack.c.h.b16 %v3381
    %v3469 = vunpack.c.l.b16 %v3382
    %v3470 = vunpack.c.h.b16 %v3382
    %v3471 = vunpack.c.l.b16 %v3383
    %v3472 = vunpack.c.h.b16 %v3383
    %v3473 = vunpack.c.l.b16 %v3384
    %v3474 = vunpack.c.h.b16 %v3384
    %v3475 = vunpack.c.l.b16 %v3385
    %v3476 = vunpack.c.h.b16 %v3385
    %v3477 = vunpack.c.l.b16 %v3386
    %v3478 = vunpack.c.h.b16 %v3386
    %v3479 = vunpack.c.l.b16 %v3387
    %v3480 = vunpack.c.h.b16 %v3387
    %v3481 = vunpack.c.l.b16 %v3388
    %v3482 = vunpack.c.h.b16 %v3388
    %v3483 = vunpack.c.l.b16 %v3389
    %v3484 = vunpack.c.h.b16 %v3389
    %v3485 = vunpack.c.l.b16 %v3390
    %v3486 = vunpack.c.h.b16 %v3390
    %v3487 = vpack.c.b16 %v3427, %v3423
    %v3488 = vpack.c.b16 %v3428, %v3424
    %v3489 = vpack.c.b16 %v3429, %v3425
    %v3490 = vpack.c.b16 %v3430, %v3426
    %v3491 = vpack.c.b16 %v3435, %v3431
    %v3492 = vpack.c.b16 %v3436, %v3432
    %v3493 = vpack.c.b16 %v3437, %v3433
    %v3494 = vpack.c.b16 %v3438, %v3434
    %v3495 = vpack.c.b16 %v3443, %v3439
    %v3496 = vpack.c.b16 %v3444, %v3440
    %v3497 = vpack.c.b16 %v3445, %v3441
    %v3498 = vpack.c.b16 %v3446, %v3442
    %v3499 = vpack.c.b16 %v3451, %v3447
    %v3500 = vpack.c.b16 %v3452, %v3448
    %v3501 = vpack.c.b16 %v3453, %v3449
    %v3502 = vpack.c.b16 %v3454, %v3450
    %v3503 = vpack.c.b16 %v3459, %v3455
    %v3504 = vpack.c.b16 %v3460, %v3456
    %v3505 = vpack.c.b16 %v3461, %v3457
    %v3506 = vpack.c.b16 %v3462, %v3458
    %v3507 = vpack.c.b16 %v3467, %v3463
    %v3508 = vpack.c.b16 %v3468, %v3464
    %v3509 = vpack.c.b16 %v3469, %v3465
    %v3510 = vpack.c.b16 %v3470, %v3466
    %v3511 = vpack.c.b16 %v3475, %v3471
    %v3512 = vpack.c.b16 %v3476, %v3472
    %v3513 = vpack.c.b16 %v3477, %v3473
    %v3514 = vpack.c.b16 %v3478, %v3474
    %v3515 = vpack.c.b16 %v3483, %v3479
    %v3516 = vpack.c.b16 %v3484, %v3480
    %v3517 = vpack.c.b16 %v3485, %v3481
    %v3518 = vpack.c.b16 %v3486, %v3482
    %3551 = vmatpush.bf16.msra.mxu0 %v3515
    %3552 = vmatpush.bf16.msra.mxu0 %v3511
    %3553 = vmatpush.bf16.msra.mxu0 %v3507
    %3554 = vmatpush.bf16.msra.mxu0 %v3503
    %3555 = vmatpush.bf16.msra.mxu0 %v3499
    %3556 = vmatpush.bf16.msra.mxu0 %v3495
    %3557 = vmatpush.bf16.msra.mxu0 %v3491
    %3558 = vmatpush.bf16.msra.mxu0 %v3487
    %3559 = vmatmul.bf16.gmra.mxu0 %v3358
    %v3560 = vpop.f32.mrf.mxu0
    %v3561 = vadd.f32 0.0, %v3560
    %v3562 = vpop.f32.mrf.mxu0
    %3563 = vdwg.mxu0
    %3564 = vmatpush.bf16.msra.mxu0 %v3516
    %3565 = vmatpush.bf16.msra.mxu0 %v3512
    %3566 = vmatpush.bf16.msra.mxu0 %v3508
    %3567 = vmatpush.bf16.msra.mxu0 %v3504
    %3568 = vmatpush.bf16.msra.mxu0 %v3500
    %3569 = vmatpush.bf16.msra.mxu0 %v3496
    %3570 = vmatpush.bf16.msra.mxu0 %v3492
    %3571 = vmatpush.bf16.msra.mxu0 %v3488
    %3572 = vmatmul.bf16.gmra.mxu0 %v3358
    %v3573 = vpop.f32.mrf.mxu0
    %v3574 = vadd.f32 0.0, %v3573
    %v3575 = vpop.f32.mrf.mxu0
    %3576 = vdwg.mxu0
    %3577 = vmatpush.bf16.msra.mxu0 %v3517
    %3578 = vmatpush.bf16.msra.mxu0 %v3513
    %3579 = vmatpush.bf16.msra.mxu0 %v3509
    %3580 = vmatpush.bf16.msra.mxu0 %v3505
    %3581 = vmatpush.bf16.msra.mxu0 %v3501
    %3582 = vmatpush.bf16.msra.mxu0 %v3497
    %3583 = vmatpush.bf16.msra.mxu0 %v3493
    %3584 = vmatpush.bf16.msra.mxu0 %v3489
    %3585 = vmatmul.bf16.gmra.mxu0 %v3358
    %v3586 = vpop.f32.mrf.mxu0
    %v3587 = vadd.f32 0.0, %v3586
    %v3588 = vpop.f32.mrf.mxu0
    %3589 = vdwg.mxu0
    %3590 = vmatpush.bf16.msra.mxu0 %v3518
    %3591 = vmatpush.bf16.msra.mxu0 %v3514
    %3592 = vmatpush.bf16.msra.mxu0 %v3510
    %3593 = vmatpush.bf16.msra.mxu0 %v3506
    %3594 = vmatpush.bf16.msra.mxu0 %v3502
    %3595 = vmatpush.bf16.msra.mxu0 %v3498
    %3596 = vmatpush.bf16.msra.mxu0 %v3494
    %3597 = vmatpush.bf16.msra.mxu0 %v3490
    %3598 = vmatmul.bf16.gmra.mxu0 %v3358
    %v3599 = vpop.f32.mrf.mxu0
    %v3600 = vadd.f32 0.0, %v3599
    %v3601 = vpop.f32.mrf.mxu0
    %3602 = vdwg.mxu0
    %v3603 = vadd.f32 %v3354, %v3561
    %v3604 = vadd.f32 %v3355, %v3574
    %v3605 = vadd.f32 %v3356, %v3587
    %v3606 = vadd.f32 %v3357, %v3600
    %v3607 = vmul.f32 %v3603, 0.5
    %v3608 = vtanh.pop %v3607
    %v3609 = vmul.f32 %v3608, 0.5
    %v3610 = vadd.f32 %v3609, 0.5
    %v3611 = vmul.f32 %v3604, 0.5
    %v3612 = vtanh.pop %v3611
    %v3613 = vmul.f32 %v3612, 0.5
    %v3614 = vadd.f32 %v3613, 0.5
    %v3615 = vtanh.pop %v3605
    %v3616 = vmul.f32 %v3606, 0.5
    %v3617 = vtanh.pop %v3616
    %v3618 = vmul.f32 %v3617, 0.5
    %v3619 = vadd.f32 %v3618, 0.5
    %v3620 = vmul.f32 %v3614, %v3350
    %v3621 = vmul.f32 %v3610, %v3615
    %v3622 = vadd.f32 %v3620, %v3621
    %v3623 = vtanh.pop %v3622
    %v3624 = vmul.f32 %v3619, %v3623
    %3625 = vst [vmem:[%s1068] sm:$0xff] %v3624
    %v3626 = vld [vmem:[%s1070] sm:$0xff]
    %v3627 = vld [vmem:[%s1070 + $0x8] sm:$0xff]
    %v3628 = vld [vmem:[%s1070 + $0x10] sm:$0xff]
    %v3629 = vld [vmem:[%s1070 + $0x18] sm:$0xff]
    %v3630 = vpack.c.bf16 %v3624, %v3624
    %v3631 = vld [vmem:[#allocation11] sm:$0xff]
    %v3632 = vld [vmem:[#allocation11 + $0x8] sm:$0xff]
    %v3633 = vld [vmem:[#allocation11 + $0x10] sm:$0xff]
    %v3634 = vld [vmem:[#allocation11 + $0x18] sm:$0xff]
    %v3635 = vld [vmem:[#allocation11 + $0x20] sm:$0xff]
    %v3636 = vld [vmem:[#allocation11 + $0x28] sm:$0xff]
    %v3637 = vld [vmem:[#allocation11 + $0x30] sm:$0xff]
    %v3638 = vld [vmem:[#allocation11 + $0x38] sm:$0xff]
    %v3639 = vld [vmem:[#allocation11 + $0x40] sm:$0xff]
    %v3640 = vld [vmem:[#allocation11 + $0x48] sm:$0xff]
    %v3641 = vld [vmem:[#allocation11 + $0x50] sm:$0xff]
    %v3642 = vld [vmem:[#allocation11 + $0x58] sm:$0xff]
    %v3643 = vld [vmem:[#allocation11 + $0x60] sm:$0xff]
    %v3644 = vld [vmem:[#allocation11 + $0x68] sm:$0xff]
    %v3645 = vld [vmem:[#allocation11 + $0x70] sm:$0xff]
    %v3646 = vld [vmem:[#allocation11 + $0x78] sm:$0xff]
    %v3647 = vld [vmem:[#allocation11 + $0x80] sm:$0xff]
    %v3648 = vld [vmem:[#allocation11 + $0x88] sm:$0xff]
    %v3649 = vld [vmem:[#allocation11 + $0x90] sm:$0xff]
    %v3650 = vld [vmem:[#allocation11 + $0x98] sm:$0xff]
    %v3651 = vld [vmem:[#allocation11 + $0xa0] sm:$0xff]
    %v3652 = vld [vmem:[#allocation11 + $0xa8] sm:$0xff]
    %v3653 = vld [vmem:[#allocation11 + $0xb0] sm:$0xff]
    %v3654 = vld [vmem:[#allocation11 + $0xb8] sm:$0xff]
    %v3655 = vld [vmem:[#allocation11 + $0xc0] sm:$0xff]
    %v3656 = vld [vmem:[#allocation11 + $0xc8] sm:$0xff]
    %v3657 = vld [vmem:[#allocation11 + $0xd0] sm:$0xff]
    %v3658 = vld [vmem:[#allocation11 + $0xd8] sm:$0xff]
    %v3659 = vld [vmem:[#allocation11 + $0xe0] sm:$0xff]
    %v3660 = vld [vmem:[#allocation11 + $0xe8] sm:$0xff]
    %v3661 = vld [vmem:[#allocation11 + $0xf0] sm:$0xff]
    %v3662 = vld [vmem:[#allocation11 + $0xf8] sm:$0xff]
    %v3695 = vunpack.c.l.b16 %v3631
    %v3696 = vunpack.c.h.b16 %v3631
    %v3697 = vunpack.c.l.b16 %v3632
    %v3698 = vunpack.c.h.b16 %v3632
    %v3699 = vunpack.c.l.b16 %v3633
    %v3700 = vunpack.c.h.b16 %v3633
    %v3701 = vunpack.c.l.b16 %v3634
    %v3702 = vunpack.c.h.b16 %v3634
    %v3703 = vunpack.c.l.b16 %v3635
    %v3704 = vunpack.c.h.b16 %v3635
    %v3705 = vunpack.c.l.b16 %v3636
    %v3706 = vunpack.c.h.b16 %v3636
    %v3707 = vunpack.c.l.b16 %v3637
    %v3708 = vunpack.c.h.b16 %v3637
    %v3709 = vunpack.c.l.b16 %v3638
    %v3710 = vunpack.c.h.b16 %v3638
    %v3711 = vunpack.c.l.b16 %v3639
    %v3712 = vunpack.c.h.b16 %v3639
    %v3713 = vunpack.c.l.b16 %v3640
    %v3714 = vunpack.c.h.b16 %v3640
    %v3715 = vunpack.c.l.b16 %v3641
    %v3716 = vunpack.c.h.b16 %v3641
    %v3717 = vunpack.c.l.b16 %v3642
    %v3718 = vunpack.c.h.b16 %v3642
    %v3719 = vunpack.c.l.b16 %v3643
    %v3720 = vunpack.c.h.b16 %v3643
    %v3721 = vunpack.c.l.b16 %v3644
    %v3722 = vunpack.c.h.b16 %v3644
    %v3723 = vunpack.c.l.b16 %v3645
    %v3724 = vunpack.c.h.b16 %v3645
    %v3725 = vunpack.c.l.b16 %v3646
    %v3726 = vunpack.c.h.b16 %v3646
    %v3727 = vunpack.c.l.b16 %v3647
    %v3728 = vunpack.c.h.b16 %v3647
    %v3729 = vunpack.c.l.b16 %v3648
    %v3730 = vunpack.c.h.b16 %v3648
    %v3731 = vunpack.c.l.b16 %v3649
    %v3732 = vunpack.c.h.b16 %v3649
    %v3733 = vunpack.c.l.b16 %v3650
    %v3734 = vunpack.c.h.b16 %v3650
    %v3735 = vunpack.c.l.b16 %v3651
    %v3736 = vunpack.c.h.b16 %v3651
    %v3737 = vunpack.c.l.b16 %v3652
    %v3738 = vunpack.c.h.b16 %v3652
    %v3739 = vunpack.c.l.b16 %v3653
    %v3740 = vunpack.c.h.b16 %v3653
    %v3741 = vunpack.c.l.b16 %v3654
    %v3742 = vunpack.c.h.b16 %v3654
    %v3743 = vunpack.c.l.b16 %v3655
    %v3744 = vunpack.c.h.b16 %v3655
    %v3745 = vunpack.c.l.b16 %v3656
    %v3746 = vunpack.c.h.b16 %v3656
    %v3747 = vunpack.c.l.b16 %v3657
    %v3748 = vunpack.c.h.b16 %v3657
    %v3749 = vunpack.c.l.b16 %v3658
    %v3750 = vunpack.c.h.b16 %v3658
    %v3751 = vunpack.c.l.b16 %v3659
    %v3752 = vunpack.c.h.b16 %v3659
    %v3753 = vunpack.c.l.b16 %v3660
    %v3754 = vunpack.c.h.b16 %v3660
    %v3755 = vunpack.c.l.b16 %v3661
    %v3756 = vunpack.c.h.b16 %v3661
    %v3757 = vunpack.c.l.b16 %v3662
    %v3758 = vunpack.c.h.b16 %v3662
    %v3759 = vpack.c.b16 %v3699, %v3695
    %v3760 = vpack.c.b16 %v3700, %v3696
    %v3761 = vpack.c.b16 %v3701, %v3697
    %v3762 = vpack.c.b16 %v3702, %v3698
    %v3763 = vpack.c.b16 %v3707, %v3703
    %v3764 = vpack.c.b16 %v3708, %v3704
    %v3765 = vpack.c.b16 %v3709, %v3705
    %v3766 = vpack.c.b16 %v3710, %v3706
    %v3767 = vpack.c.b16 %v3715, %v3711
    %v3768 = vpack.c.b16 %v3716, %v3712
    %v3769 = vpack.c.b16 %v3717, %v3713
    %v3770 = vpack.c.b16 %v3718, %v3714
    %v3771 = vpack.c.b16 %v3723, %v3719
    %v3772 = vpack.c.b16 %v3724, %v3720
    %v3773 = vpack.c.b16 %v3725, %v3721
    %v3774 = vpack.c.b16 %v3726, %v3722
    %v3775 = vpack.c.b16 %v3731, %v3727
    %v3776 = vpack.c.b16 %v3732, %v3728
    %v3777 = vpack.c.b16 %v3733, %v3729
    %v3778 = vpack.c.b16 %v3734, %v3730
    %v3779 = vpack.c.b16 %v3739, %v3735
    %v3780 = vpack.c.b16 %v3740, %v3736
    %v3781 = vpack.c.b16 %v3741, %v3737
    %v3782 = vpack.c.b16 %v3742, %v3738
    %v3783 = vpack.c.b16 %v3747, %v3743
    %v3784 = vpack.c.b16 %v3748, %v3744
    %v3785 = vpack.c.b16 %v3749, %v3745
    %v3786 = vpack.c.b16 %v3750, %v3746
    %v3787 = vpack.c.b16 %v3755, %v3751
    %v3788 = vpack.c.b16 %v3756, %v3752
    %v3789 = vpack.c.b16 %v3757, %v3753
    %v3790 = vpack.c.b16 %v3758, %v3754
    %3823 = vmatpush.bf16.msra.mxu0 %v3787
    %3824 = vmatpush.bf16.msra.mxu0 %v3783
    %3825 = vmatpush.bf16.msra.mxu0 %v3779
    %3826 = vmatpush.bf16.msra.mxu0 %v3775
    %3827 = vmatpush.bf16.msra.mxu0 %v3771
    %3828 = vmatpush.bf16.msra.mxu0 %v3767
    %3829 = vmatpush.bf16.msra.mxu0 %v3763
    %3830 = vmatpush.bf16.msra.mxu0 %v3759
    %3831 = vmatmul.bf16.gmra.mxu0 %v3630
    %v3832 = vpop.f32.mrf.mxu0
    %v3833 = vadd.f32 0.0, %v3832
    %v3834 = vpop.f32.mrf.mxu0
    %3835 = vdwg.mxu0
    %3836 = vmatpush.bf16.msra.mxu0 %v3788
    %3837 = vmatpush.bf16.msra.mxu0 %v3784
    %3838 = vmatpush.bf16.msra.mxu0 %v3780
    %3839 = vmatpush.bf16.msra.mxu0 %v3776
    %3840 = vmatpush.bf16.msra.mxu0 %v3772
    %3841 = vmatpush.bf16.msra.mxu0 %v3768
    %3842 = vmatpush.bf16.msra.mxu0 %v3764
    %3843 = vmatpush.bf16.msra.mxu0 %v3760
    %3844 = vmatmul.bf16.gmra.mxu0 %v3630
    %v3845 = vpop.f32.mrf.mxu0
    %v3846 = vadd.f32 0.0, %v3845
    %v3847 = vpop.f32.mrf.mxu0
    %3848 = vdwg.mxu0
    %3849 = vmatpush.bf16.msra.mxu0 %v3789
    %3850 = vmatpush.bf16.msra.mxu0 %v3785
    %3851 = vmatpush.bf16.msra.mxu0 %v3781
    %3852 = vmatpush.bf16.msra.mxu0 %v3777
    %3853 = vmatpush.bf16.msra.mxu0 %v3773
    %3854 = vmatpush.bf16.msra.mxu0 %v3769
    %3855 = vmatpush.bf16.msra.mxu0 %v3765
    %3856 = vmatpush.bf16.msra.mxu0 %v3761
    %3857 = vmatmul.bf16.gmra.mxu0 %v3630
    %v3858 = vpop.f32.mrf.mxu0
    %v3859 = vadd.f32 0.0, %v3858
    %v3860 = vpop.f32.mrf.mxu0
    %3861 = vdwg.mxu0
    %3862 = vmatpush.bf16.msra.mxu0 %v3790
    %3863 = vmatpush.bf16.msra.mxu0 %v3786
    %3864 = vmatpush.bf16.msra.mxu0 %v3782
    %3865 = vmatpush.bf16.msra.mxu0 %v3778
    %3866 = vmatpush.bf16.msra.mxu0 %v3774
    %3867 = vmatpush.bf16.msra.mxu0 %v3770
    %3868 = vmatpush.bf16.msra.mxu0 %v3766
    %3869 = vmatpush.bf16.msra.mxu0 %v3762
    %3870 = vmatmul.bf16.gmra.mxu0 %v3630
    %v3871 = vpop.f32.mrf.mxu0
    %v3872 = vadd.f32 0.0, %v3871
    %v3873 = vpop.f32.mrf.mxu0
    %3874 = vdwg.mxu0
    %v3875 = vadd.f32 %v3626, %v3833
    %v3876 = vadd.f32 %v3627, %v3846
    %v3877 = vadd.f32 %v3628, %v3859
    %v3878 = vadd.f32 %v3629, %v3872
    %v3879 = vmul.f32 %v3875, 0.5
    %v3880 = vtanh.pop %v3879
    %v3881 = vmul.f32 %v3880, 0.5
    %v3882 = vadd.f32 %v3881, 0.5
    %v3883 = vmul.f32 %v3876, 0.5
    %v3884 = vtanh.pop %v3883
    %v3885 = vmul.f32 %v3884, 0.5
    %v3886 = vadd.f32 %v3885, 0.5
    %v3887 = vtanh.pop %v3877
    %v3888 = vmul.f32 %v3878, 0.5
    %v3889 = vtanh.pop %v3888
    %v3890 = vmul.f32 %v3889, 0.5
    %v3891 = vadd.f32 %v3890, 0.5
    %v3892 = vmul.f32 %v3886, %v3622
    %v3893 = vmul.f32 %v3882, %v3887
    %v3894 = vadd.f32 %v3892, %v3893
    %v3895 = vtanh.pop %v3894
    %v3896 = vmul.f32 %v3891, %v3895
    %3897 = vst [vmem:[%s1342] sm:$0xff] %v3896
    %v3898 = vld [vmem:[%s1344] sm:$0xff]
    %v3899 = vld [vmem:[%s1344 + $0x8] sm:$0xff]
    %v3900 = vld [vmem:[%s1344 + $0x10] sm:$0xff]
    %v3901 = vld [vmem:[%s1344 + $0x18] sm:$0xff]
    %v3902 = vpack.c.bf16 %v3896, %v3896
    %v3903 = vld [vmem:[#allocation11] sm:$0xff]
    %v3904 = vld [vmem:[#allocation11 + $0x8] sm:$0xff]
    %v3905 = vld [vmem:[#allocation11 + $0x10] sm:$0xff]
    %v3906 = vld [vmem:[#allocation11 + $0x18] sm:$0xff]
    %v3907 = vld [vmem:[#allocation11 + $0x20] sm:$0xff]
    %v3908 = vld [vmem:[#allocation11 + $0x28] sm:$0xff]
    %v3909 = vld [vmem:[#allocation11 + $0x30] sm:$0xff]
    %v3910 = vld [vmem:[#allocation11 + $0x38] sm:$0xff]
    %v3911 = vld [vmem:[#allocation11 + $0x40] sm:$0xff]
    %v3912 = vld [vmem:[#allocation11 + $0x48] sm:$0xff]
    %v3913 = vld [vmem:[#allocation11 + $0x50] sm:$0xff]
    %v3914 = vld [vmem:[#allocation11 + $0x58] sm:$0xff]
    %v3915 = vld [vmem:[#allocation11 + $0x60] sm:$0xff]
    %v3916 = vld [vmem:[#allocation11 + $0x68] sm:$0xff]
    %v3917 = vld [vmem:[#allocation11 + $0x70] sm:$0xff]
    %v3918 = vld [vmem:[#allocation11 + $0x78] sm:$0xff]
    %v3919 = vld [vmem:[#allocation11 + $0x80] sm:$0xff]
    %v3920 = vld [vmem:[#allocation11 + $0x88] sm:$0xff]
    %v3921 = vld [vmem:[#allocation11 + $0x90] sm:$0xff]
    %v3922 = vld [vmem:[#allocation11 + $0x98] sm:$0xff]
    %v3923 = vld [vmem:[#allocation11 + $0xa0] sm:$0xff]
    %v3924 = vld [vmem:[#allocation11 + $0xa8] sm:$0xff]
    %v3925 = vld [vmem:[#allocation11 + $0xb0] sm:$0xff]
    %v3926 = vld [vmem:[#allocation11 + $0xb8] sm:$0xff]
    %v3927 = vld [vmem:[#allocation11 + $0xc0] sm:$0xff]
    %v3928 = vld [vmem:[#allocation11 + $0xc8] sm:$0xff]
    %v3929 = vld [vmem:[#allocation11 + $0xd0] sm:$0xff]
    %v3930 = vld [vmem:[#allocation11 + $0xd8] sm:$0xff]
    %v3931 = vld [vmem:[#allocation11 + $0xe0] sm:$0xff]
    %v3932 = vld [vmem:[#allocation11 + $0xe8] sm:$0xff]
    %v3933 = vld [vmem:[#allocation11 + $0xf0] sm:$0xff]
    %v3934 = vld [vmem:[#allocation11 + $0xf8] sm:$0xff]
    %v3967 = vunpack.c.l.b16 %v3903
    %v3968 = vunpack.c.h.b16 %v3903
    %v3969 = vunpack.c.l.b16 %v3904
    %v3970 = vunpack.c.h.b16 %v3904
    %v3971 = vunpack.c.l.b16 %v3905
    %v3972 = vunpack.c.h.b16 %v3905
    %v3973 = vunpack.c.l.b16 %v3906
    %v3974 = vunpack.c.h.b16 %v3906
    %v3975 = vunpack.c.l.b16 %v3907
    %v3976 = vunpack.c.h.b16 %v3907
    %v3977 = vunpack.c.l.b16 %v3908
    %v3978 = vunpack.c.h.b16 %v3908
    %v3979 = vunpack.c.l.b16 %v3909
    %v3980 = vunpack.c.h.b16 %v3909
    %v3981 = vunpack.c.l.b16 %v3910
    %v3982 = vunpack.c.h.b16 %v3910
    %v3983 = vunpack.c.l.b16 %v3911
    %v3984 = vunpack.c.h.b16 %v3911
    %v3985 = vunpack.c.l.b16 %v3912
    %v3986 = vunpack.c.h.b16 %v3912
    %v3987 = vunpack.c.l.b16 %v3913
    %v3988 = vunpack.c.h.b16 %v3913
    %v3989 = vunpack.c.l.b16 %v3914
    %v3990 = vunpack.c.h.b16 %v3914
    %v3991 = vunpack.c.l.b16 %v3915
    %v3992 = vunpack.c.h.b16 %v3915
    %v3993 = vunpack.c.l.b16 %v3916
    %v3994 = vunpack.c.h.b16 %v3916
    %v3995 = vunpack.c.l.b16 %v3917
    %v3996 = vunpack.c.h.b16 %v3917
    %v3997 = vunpack.c.l.b16 %v3918
    %v3998 = vunpack.c.h.b16 %v3918
    %v3999 = vunpack.c.l.b16 %v3919
    %v4000 = vunpack.c.h.b16 %v3919
    %v4001 = vunpack.c.l.b16 %v3920
    %v4002 = vunpack.c.h.b16 %v3920
    %v4003 = vunpack.c.l.b16 %v3921
    %v4004 = vunpack.c.h.b16 %v3921
    %v4005 = vunpack.c.l.b16 %v3922
    %v4006 = vunpack.c.h.b16 %v3922
    %v4007 = vunpack.c.l.b16 %v3923
    %v4008 = vunpack.c.h.b16 %v3923
    %v4009 = vunpack.c.l.b16 %v3924
    %v4010 = vunpack.c.h.b16 %v3924
    %v4011 = vunpack.c.l.b16 %v3925
    %v4012 = vunpack.c.h.b16 %v3925
    %v4013 = vunpack.c.l.b16 %v3926
    %v4014 = vunpack.c.h.b16 %v3926
    %v4015 = vunpack.c.l.b16 %v3927
    %v4016 = vunpack.c.h.b16 %v3927
    %v4017 = vunpack.c.l.b16 %v3928
    %v4018 = vunpack.c.h.b16 %v3928
    %v4019 = vunpack.c.l.b16 %v3929
    %v4020 = vunpack.c.h.b16 %v3929
    %v4021 = vunpack.c.l.b16 %v3930
    %v4022 = vunpack.c.h.b16 %v3930
    %v4023 = vunpack.c.l.b16 %v3931
    %v4024 = vunpack.c.h.b16 %v3931
    %v4025 = vunpack.c.l.b16 %v3932
    %v4026 = vunpack.c.h.b16 %v3932
    %v4027 = vunpack.c.l.b16 %v3933
    %v4028 = vunpack.c.h.b16 %v3933
    %v4029 = vunpack.c.l.b16 %v3934
    %v4030 = vunpack.c.h.b16 %v3934
    %v4031 = vpack.c.b16 %v3971, %v3967
    %v4032 = vpack.c.b16 %v3972, %v3968
    %v4033 = vpack.c.b16 %v3973, %v3969
    %v4034 = vpack.c.b16 %v3974, %v3970
    %v4035 = vpack.c.b16 %v3979, %v3975
    %v4036 = vpack.c.b16 %v3980, %v3976
    %v4037 = vpack.c.b16 %v3981, %v3977
    %v4038 = vpack.c.b16 %v3982, %v3978
    %v4039 = vpack.c.b16 %v3987, %v3983
    %v4040 = vpack.c.b16 %v3988, %v3984
    %v4041 = vpack.c.b16 %v3989, %v3985
    %v4042 = vpack.c.b16 %v3990, %v3986
    %v4043 = vpack.c.b16 %v3995, %v3991
    %v4044 = vpack.c.b16 %v3996, %v3992
    %v4045 = vpack.c.b16 %v3997, %v3993
    %v4046 = vpack.c.b16 %v3998, %v3994
    %v4047 = vpack.c.b16 %v4003, %v3999
    %v4048 = vpack.c.b16 %v4004, %v4000
    %v4049 = vpack.c.b16 %v4005, %v4001
    %v4050 = vpack.c.b16 %v4006, %v4002
    %v4051 = vpack.c.b16 %v4011, %v4007
    %v4052 = vpack.c.b16 %v4012, %v4008
    %v4053 = vpack.c.b16 %v4013, %v4009
    %v4054 = vpack.c.b16 %v4014, %v4010
    %v4055 = vpack.c.b16 %v4019, %v4015
    %v4056 = vpack.c.b16 %v4020, %v4016
    %v4057 = vpack.c.b16 %v4021, %v4017
    %v4058 = vpack.c.b16 %v4022, %v4018
    %v4059 = vpack.c.b16 %v4027, %v4023
    %v4060 = vpack.c.b16 %v4028, %v4024
    %v4061 = vpack.c.b16 %v4029, %v4025
    %v4062 = vpack.c.b16 %v4030, %v4026
    %4095 = vmatpush.bf16.msra.mxu0 %v4059
    %4096 = vmatpush.bf16.msra.mxu0 %v4055
    %4097 = vmatpush.bf16.msra.mxu0 %v4051
    %4098 = vmatpush.bf16.msra.mxu0 %v4047
    %4099 = vmatpush.bf16.msra.mxu0 %v4043
    %4100 = vmatpush.bf16.msra.mxu0 %v4039
    %4101 = vmatpush.bf16.msra.mxu0 %v4035
    %4102 = vmatpush.bf16.msra.mxu0 %v4031
    %4103 = vmatmul.bf16.gmra.mxu0 %v3902
    %v4104 = vpop.f32.mrf.mxu0
    %v4105 = vadd.f32 0.0, %v4104
    %v4106 = vpop.f32.mrf.mxu0
    %4107 = vdwg.mxu0
    %4108 = vmatpush.bf16.msra.mxu0 %v4060
    %4109 = vmatpush.bf16.msra.mxu0 %v4056
    %4110 = vmatpush.bf16.msra.mxu0 %v4052
    %4111 = vmatpush.bf16.msra.mxu0 %v4048
    %4112 = vmatpush.bf16.msra.mxu0 %v4044
    %4113 = vmatpush.bf16.msra.mxu0 %v4040
    %4114 = vmatpush.bf16.msra.mxu0 %v4036
    %4115 = vmatpush.bf16.msra.mxu0 %v4032
    %4116 = vmatmul.bf16.gmra.mxu0 %v3902
    %v4117 = vpop.f32.mrf.mxu0
    %v4118 = vadd.f32 0.0, %v4117
    %v4119 = vpop.f32.mrf.mxu0
    %4120 = vdwg.mxu0
    %4121 = vmatpush.bf16.msra.mxu0 %v4061
    %4122 = vmatpush.bf16.msra.mxu0 %v4057
    %4123 = vmatpush.bf16.msra.mxu0 %v4053
    %4124 = vmatpush.bf16.msra.mxu0 %v4049
    %4125 = vmatpush.bf16.msra.mxu0 %v4045
    %4126 = vmatpush.bf16.msra.mxu0 %v4041
    %4127 = vmatpush.bf16.msra.mxu0 %v4037
    %4128 = vmatpush.bf16.msra.mxu0 %v4033
    %4129 = vmatmul.bf16.gmra.mxu0 %v3902
    %v4130 = vpop.f32.mrf.mxu0
    %v4131 = vadd.f32 0.0, %v4130
    %v4132 = vpop.f32.mrf.mxu0
    %4133 = vdwg.mxu0
    %4134 = vmatpush.bf16.msra.mxu0 %v4062
    %4135 = vmatpush.bf16.msra.mxu0 %v4058
    %4136 = vmatpush.bf16.msra.mxu0 %v4054
    %4137 = vmatpush.bf16.msra.mxu0 %v4050
    %4138 = vmatpush.bf16.msra.mxu0 %v4046
    %4139 = vmatpush.bf16.msra.mxu0 %v4042
    %4140 = vmatpush.bf16.msra.mxu0 %v4038
    %4141 = vmatpush.bf16.msra.mxu0 %v4034
    %4142 = vmatmul.bf16.gmra.mxu0 %v3902
    %v4143 = vpop.f32.mrf.mxu0
    %v4144 = vadd.f32 0.0, %v4143
    %v4145 = vpop.f32.mrf.mxu0
    %4146 = vdwg.mxu0
    %v4147 = vadd.f32 %v3898, %v4105
    %v4148 = vadd.f32 %v3899, %v4118
    %v4149 = vadd.f32 %v3900, %v4131
    %v4150 = vadd.f32 %v3901, %v4144
    %v4151 = vmul.f32 %v4147, 0.5
    %v4152 = vtanh.pop %v4151
    %v4153 = vmul.f32 %v4152, 0.5
    %v4154 = vadd.f32 %v4153, 0.5
    %v4155 = vmul.f32 %v4148, 0.5
    %v4156 = vtanh.pop %v4155
    %v4157 = vmul.f32 %v4156, 0.5
    %v4158 = vadd.f32 %v4157, 0.5
    %v4159 = vtanh.pop %v4149
    %v4160 = vmul.f32 %v4150, 0.5
    %v4161 = vtanh.pop %v4160
    %v4162 = vmul.f32 %v4161, 0.5
    %v4163 = vadd.f32 %v4162, 0.5
    %v4164 = vmul.f32 %v4158, %v3894
    %v4165 = vmul.f32 %v4154, %v4159
    %v4166 = vadd.f32 %v4164, %v4165
    %v4167 = vtanh.pop %v4166
    %v4168 = vmul.f32 %v4163, %v4167
    %4169 = vst [vmem:[%s1616] sm:$0xff] %v4168
    %v4170 = vld [vmem:[%s1618] sm:$0xff]
    %v4171 = vld [vmem:[%s1618 + $0x8] sm:$0xff]
    %v4172 = vld [vmem:[%s1618 + $0x10] sm:$0xff]
    %v4173 = vld [vmem:[%s1618 + $0x18] sm:$0xff]
    %v4174 = vpack.c.bf16 %v4168, %v4168
    %v4175 = vld [vmem:[#allocation11] sm:$0xff]
    %v4176 = vld [vmem:[#allocation11 + $0x8] sm:$0xff]
    %v4177 = vld [vmem:[#allocation11 + $0x10] sm:$0xff]
    %v4178 = vld [vmem:[#allocation11 + $0x18] sm:$0xff]
    %v4179 = vld [vmem:[#allocation11 + $0x20] sm:$0xff]
    %v4180 = vld [vmem:[#allocation11 + $0x28] sm:$0xff]
    %v4181 = vld [vmem:[#allocation11 + $0x30] sm:$0xff]
    %v4182 = vld [vmem:[#allocation11 + $0x38] sm:$0xff]
    %v4183 = vld [vmem:[#allocation11 + $0x40] sm:$0xff]
    %v4184 = vld [vmem:[#allocation11 + $0x48] sm:$0xff]
    %v4185 = vld [vmem:[#allocation11 + $0x50] sm:$0xff]
    %v4186 = vld [vmem:[#allocation11 + $0x58] sm:$0xff]
    %v4187 = vld [vmem:[#allocation11 + $0x60] sm:$0xff]
    %v4188 = vld [vmem:[#allocation11 + $0x68] sm:$0xff]
    %v4189 = vld [vmem:[#allocation11 + $0x70] sm:$0xff]
    %v4190 = vld [vmem:[#allocation11 + $0x78] sm:$0xff]
    %v4191 = vld [vmem:[#allocation11 + $0x80] sm:$0xff]
    %v4192 = vld [vmem:[#allocation11 + $0x88] sm:$0xff]
    %v4193 = vld [vmem:[#allocation11 + $0x90] sm:$0xff]
    %v4194 = vld [vmem:[#allocation11 + $0x98] sm:$0xff]
    %v4195 = vld [vmem:[#allocation11 + $0xa0] sm:$0xff]
    %v4196 = vld [vmem:[#allocation11 + $0xa8] sm:$0xff]
    %v4197 = vld [vmem:[#allocation11 + $0xb0] sm:$0xff]
    %v4198 = vld [vmem:[#allocation11 + $0xb8] sm:$0xff]
    %v4199 = vld [vmem:[#allocation11 + $0xc0] sm:$0xff]
    %v4200 = vld [vmem:[#allocation11 + $0xc8] sm:$0xff]
    %v4201 = vld [vmem:[#allocation11 + $0xd0] sm:$0xff]
    %v4202 = vld [vmem:[#allocation11 + $0xd8] sm:$0xff]
    %v4203 = vld [vmem:[#allocation11 + $0xe0] sm:$0xff]
    %v4204 = vld [vmem:[#allocation11 + $0xe8] sm:$0xff]
    %v4205 = vld [vmem:[#allocation11 + $0xf0] sm:$0xff]
    %v4206 = vld [vmem:[#allocation11 + $0xf8] sm:$0xff]
    %v4239 = vunpack.c.l.b16 %v4175
    %v4240 = vunpack.c.h.b16 %v4175
    %v4241 = vunpack.c.l.b16 %v4176
    %v4242 = vunpack.c.h.b16 %v4176
    %v4243 = vunpack.c.l.b16 %v4177
    %v4244 = vunpack.c.h.b16 %v4177
    %v4245 = vunpack.c.l.b16 %v4178
    %v4246 = vunpack.c.h.b16 %v4178
    %v4247 = vunpack.c.l.b16 %v4179
    %v4248 = vunpack.c.h.b16 %v4179
    %v4249 = vunpack.c.l.b16 %v4180
    %v4250 = vunpack.c.h.b16 %v4180
    %v4251 = vunpack.c.l.b16 %v4181
    %v4252 = vunpack.c.h.b16 %v4181
    %v4253 = vunpack.c.l.b16 %v4182
    %v4254 = vunpack.c.h.b16 %v4182
    %v4255 = vunpack.c.l.b16 %v4183
    %v4256 = vunpack.c.h.b16 %v4183
    %v4257 = vunpack.c.l.b16 %v4184
    %v4258 = vunpack.c.h.b16 %v4184
    %v4259 = vunpack.c.l.b16 %v4185
    %v4260 = vunpack.c.h.b16 %v4185
    %v4261 = vunpack.c.l.b16 %v4186
    %v4262 = vunpack.c.h.b16 %v4186
    %v4263 = vunpack.c.l.b16 %v4187
    %v4264 = vunpack.c.h.b16 %v4187
    %v4265 = vunpack.c.l.b16 %v4188
    %v4266 = vunpack.c.h.b16 %v4188
    %v4267 = vunpack.c.l.b16 %v4189
    %v4268 = vunpack.c.h.b16 %v4189
    %v4269 = vunpack.c.l.b16 %v4190
    %v4270 = vunpack.c.h.b16 %v4190
    %v4271 = vunpack.c.l.b16 %v4191
    %v4272 = vunpack.c.h.b16 %v4191
    %v4273 = vunpack.c.l.b16 %v4192
    %v4274 = vunpack.c.h.b16 %v4192
    %v4275 = vunpack.c.l.b16 %v4193
    %v4276 = vunpack.c.h.b16 %v4193
    %v4277 = vunpack.c.l.b16 %v4194
    %v4278 = vunpack.c.h.b16 %v4194
    %v4279 = vunpack.c.l.b16 %v4195
    %v4280 = vunpack.c.h.b16 %v4195
    %v4281 = vunpack.c.l.b16 %v4196
    %v4282 = vunpack.c.h.b16 %v4196
    %v4283 = vunpack.c.l.b16 %v4197
    %v4284 = vunpack.c.h.b16 %v4197
    %v4285 = vunpack.c.l.b16 %v4198
    %v4286 = vunpack.c.h.b16 %v4198
    %v4287 = vunpack.c.l.b16 %v4199
    %v4288 = vunpack.c.h.b16 %v4199
    %v4289 = vunpack.c.l.b16 %v4200
    %v4290 = vunpack.c.h.b16 %v4200
    %v4291 = vunpack.c.l.b16 %v4201
    %v4292 = vunpack.c.h.b16 %v4201
    %v4293 = vunpack.c.l.b16 %v4202
    %v4294 = vunpack.c.h.b16 %v4202
    %v4295 = vunpack.c.l.b16 %v4203
    %v4296 = vunpack.c.h.b16 %v4203
    %v4297 = vunpack.c.l.b16 %v4204
    %v4298 = vunpack.c.h.b16 %v4204
    %v4299 = vunpack.c.l.b16 %v4205
    %v4300 = vunpack.c.h.b16 %v4205
    %v4301 = vunpack.c.l.b16 %v4206
    %v4302 = vunpack.c.h.b16 %v4206
    %v4303 = vpack.c.b16 %v4243, %v4239
    %v4304 = vpack.c.b16 %v4244, %v4240
    %v4305 = vpack.c.b16 %v4245, %v4241
    %v4306 = vpack.c.b16 %v4246, %v4242
    %v4307 = vpack.c.b16 %v4251, %v4247
    %v4308 = vpack.c.b16 %v4252, %v4248
    %v4309 = vpack.c.b16 %v4253, %v4249
    %v4310 = vpack.c.b16 %v4254, %v4250
    %v4311 = vpack.c.b16 %v4259, %v4255
    %v4312 = vpack.c.b16 %v4260, %v4256
    %v4313 = vpack.c.b16 %v4261, %v4257
    %v4314 = vpack.c.b16 %v4262, %v4258
    %v4315 = vpack.c.b16 %v4267, %v4263
    %v4316 = vpack.c.b16 %v4268, %v4264
    %v4317 = vpack.c.b16 %v4269, %v4265
    %v4318 = vpack.c.b16 %v4270, %v4266
    %v4319 = vpack.c.b16 %v4275, %v4271
    %v4320 = vpack.c.b16 %v4276, %v4272
    %v4321 = vpack.c.b16 %v4277, %v4273
    %v4322 = vpack.c.b16 %v4278, %v4274
    %v4323 = vpack.c.b16 %v4283, %v4279
    %v4324 = vpack.c.b16 %v4284, %v4280
    %v4325 = vpack.c.b16 %v4285, %v4281
    %v4326 = vpack.c.b16 %v4286, %v4282
    %v4327 = vpack.c.b16 %v4291, %v4287
    %v4328 = vpack.c.b16 %v4292, %v4288
    %v4329 = vpack.c.b16 %v4293, %v4289
    %v4330 = vpack.c.b16 %v4294, %v4290
    %v4331 = vpack.c.b16 %v4299, %v4295
    %v4332 = vpack.c.b16 %v4300, %v4296
    %v4333 = vpack.c.b16 %v4301, %v4297
    %v4334 = vpack.c.b16 %v4302, %v4298
    %4367 = vmatpush.bf16.msra.mxu0 %v4331
    %4368 = vmatpush.bf16.msra.mxu0 %v4327
    %4369 = vmatpush.bf16.msra.mxu0 %v4323
    %4370 = vmatpush.bf16.msra.mxu0 %v4319
    %4371 = vmatpush.bf16.msra.mxu0 %v4315
    %4372 = vmatpush.bf16.msra.mxu0 %v4311
    %4373 = vmatpush.bf16.msra.mxu0 %v4307
    %4374 = vmatpush.bf16.msra.mxu0 %v4303
    %4375 = vmatmul.bf16.gmra.mxu0 %v4174
    %v4376 = vpop.f32.mrf.mxu0
    %v4377 = vadd.f32 0.0, %v4376
    %v4378 = vpop.f32.mrf.mxu0
    %4379 = vdwg.mxu0
    %4380 = vmatpush.bf16.msra.mxu0 %v4332
    %4381 = vmatpush.bf16.msra.mxu0 %v4328
    %4382 = vmatpush.bf16.msra.mxu0 %v4324
    %4383 = vmatpush.bf16.msra.mxu0 %v4320
    %4384 = vmatpush.bf16.msra.mxu0 %v4316
    %4385 = vmatpush.bf16.msra.mxu0 %v4312
    %4386 = vmatpush.bf16.msra.mxu0 %v4308
    %4387 = vmatpush.bf16.msra.mxu0 %v4304
    %4388 = vmatmul.bf16.gmra.mxu0 %v4174
    %v4389 = vpop.f32.mrf.mxu0
    %v4390 = vadd.f32 0.0, %v4389
    %v4391 = vpop.f32.mrf.mxu0
    %4392 = vdwg.mxu0
    %4393 = vmatpush.bf16.msra.mxu0 %v4333
    %4394 = vmatpush.bf16.msra.mxu0 %v4329
    %4395 = vmatpush.bf16.msra.mxu0 %v4325
    %4396 = vmatpush.bf16.msra.mxu0 %v4321
    %4397 = vmatpush.bf16.msra.mxu0 %v4317
    %4398 = vmatpush.bf16.msra.mxu0 %v4313
    %4399 = vmatpush.bf16.msra.mxu0 %v4309
    %4400 = vmatpush.bf16.msra.mxu0 %v4305
    %4401 = vmatmul.bf16.gmra.mxu0 %v4174
    %v4402 = vpop.f32.mrf.mxu0
    %v4403 = vadd.f32 0.0, %v4402
    %v4404 = vpop.f32.mrf.mxu0
    %4405 = vdwg.mxu0
    %4406 = vmatpush.bf16.msra.mxu0 %v4334
    %4407 = vmatpush.bf16.msra.mxu0 %v4330
    %4408 = vmatpush.bf16.msra.mxu0 %v4326
    %4409 = vmatpush.bf16.msra.mxu0 %v4322
    %4410 = vmatpush.bf16.msra.mxu0 %v4318
    %4411 = vmatpush.bf16.msra.mxu0 %v4314
    %4412 = vmatpush.bf16.msra.mxu0 %v4310
    %4413 = vmatpush.bf16.msra.mxu0 %v4306
    %4414 = vmatmul.bf16.gmra.mxu0 %v4174
    %v4415 = vpop.f32.mrf.mxu0
    %v4416 = vadd.f32 0.0, %v4415
    %v4417 = vpop.f32.mrf.mxu0
    %4418 = vdwg.mxu0
    %v4419 = vadd.f32 %v4170, %v4377
    %v4420 = vadd.f32 %v4171, %v4390
    %v4421 = vadd.f32 %v4172, %v4403
    %v4422 = vadd.f32 %v4173, %v4416
    %v4423 = vmul.f32 %v4419, 0.5
    %v4424 = vtanh.pop %v4423
    %v4425 = vmul.f32 %v4424, 0.5
    %v4426 = vadd.f32 %v4425, 0.5
    %v4427 = vmul.f32 %v4420, 0.5
    %v4428 = vtanh.pop %v4427
    %v4429 = vmul.f32 %v4428, 0.5
    %v4430 = vadd.f32 %v4429, 0.5
    %v4431 = vtanh.pop %v4421
    %v4432 = vmul.f32 %v4422, 0.5
    %v4433 = vtanh.pop %v4432
    %v4434 = vmul.f32 %v4433, 0.5
    %v4435 = vadd.f32 %v4434, 0.5
    %v4436 = vmul.f32 %v4430, %v4166
    %v4437 = vmul.f32 %v4426, %v4431
    %v4438 = vadd.f32 %v4436, %v4437
    %v4439 = vtanh.pop %v4438
    %v4440 = vmul.f32 %v4435, %v4439
    %4441 = vst [vmem:[%s1890] sm:$0xff] %v4440
    %v4442 = vld [vmem:[%s1892] sm:$0xff]
    %v4443 = vld [vmem:[%s1892 + $0x8] sm:$0xff]
    %v4444 = vld [vmem:[%s1892 + $0x10] sm:$0xff]
    %v4445 = vld [vmem:[%s1892 + $0x18] sm:$0xff]
    %v4446 = vpack.c.bf16 %v4440, %v4440
    %v4447 = vld [vmem:[#allocation11] sm:$0xff]
    %v4448 = vld [vmem:[#allocation11 + $0x8] sm:$0xff]
    %v4449 = vld [vmem:[#allocation11 + $0x10] sm:$0xff]
    %v4450 = vld [vmem:[#allocation11 + $0x18] sm:$0xff]
    %v4451 = vld [vmem:[#allocation11 + $0x20] sm:$0xff]
    %v4452 = vld [vmem:[#allocation11 + $0x28] sm:$0xff]
    %v4453 = vld [vmem:[#allocation11 + $0x30] sm:$0xff]
    %v4454 = vld [vmem:[#allocation11 + $0x38] sm:$0xff]
    %v4455 = vld [vmem:[#allocation11 + $0x40] sm:$0xff]
    %v4456 = vld [vmem:[#allocation11 + $0x48] sm:$0xff]
    %v4457 = vld [vmem:[#allocation11 + $0x50] sm:$0xff]
    %v4458 = vld [vmem:[#allocation11 + $0x58] sm:$0xff]
    %v4459 = vld [vmem:[#allocation11 + $0x60] sm:$0xff]
    %v4460 = vld [vmem:[#allocation11 + $0x68] sm:$0xff]
    %v4461 = vld [vmem:[#allocation11 + $0x70] sm:$0xff]
    %v4462 = vld [vmem:[#allocation11 + $0x78] sm:$0xff]
    %v4463 = vld [vmem:[#allocation11 + $0x80] sm:$0xff]
    %v4464 = vld [vmem:[#allocation11 + $0x88] sm:$0xff]
    %v4465 = vld [vmem:[#allocation11 + $0x90] sm:$0xff]
    %v4466 = vld [vmem:[#allocation11 + $0x98] sm:$0xff]
    %v4467 = vld [vmem:[#allocation11 + $0xa0] sm:$0xff]
    %v4468 = vld [vmem:[#allocation11 + $0xa8] sm:$0xff]
    %v4469 = vld [vmem:[#allocation11 + $0xb0] sm:$0xff]
    %v4470 = vld [vmem:[#allocation11 + $0xb8] sm:$0xff]
    %v4471 = vld [vmem:[#allocation11 + $0xc0] sm:$0xff]
    %v4472 = vld [vmem:[#allocation11 + $0xc8] sm:$0xff]
    %v4473 = vld [vmem:[#allocation11 + $0xd0] sm:$0xff]
    %v4474 = vld [vmem:[#allocation11 + $0xd8] sm:$0xff]
    %v4475 = vld [vmem:[#allocation11 + $0xe0] sm:$0xff]
    %v4476 = vld [vmem:[#allocation11 + $0xe8] sm:$0xff]
    %v4477 = vld [vmem:[#allocation11 + $0xf0] sm:$0xff]
    %v4478 = vld [vmem:[#allocation11 + $0xf8] sm:$0xff]
    %v4511 = vunpack.c.l.b16 %v4447
    %v4512 = vunpack.c.h.b16 %v4447
    %v4513 = vunpack.c.l.b16 %v4448
    %v4514 = vunpack.c.h.b16 %v4448
    %v4515 = vunpack.c.l.b16 %v4449
    %v4516 = vunpack.c.h.b16 %v4449
    %v4517 = vunpack.c.l.b16 %v4450
    %v4518 = vunpack.c.h.b16 %v4450
    %v4519 = vunpack.c.l.b16 %v4451
    %v4520 = vunpack.c.h.b16 %v4451
    %v4521 = vunpack.c.l.b16 %v4452
    %v4522 = vunpack.c.h.b16 %v4452
    %v4523 = vunpack.c.l.b16 %v4453
    %v4524 = vunpack.c.h.b16 %v4453
    %v4525 = vunpack.c.l.b16 %v4454
    %v4526 = vunpack.c.h.b16 %v4454
    %v4527 = vunpack.c.l.b16 %v4455
    %v4528 = vunpack.c.h.b16 %v4455
    %v4529 = vunpack.c.l.b16 %v4456
    %v4530 = vunpack.c.h.b16 %v4456
    %v4531 = vunpack.c.l.b16 %v4457
    %v4532 = vunpack.c.h.b16 %v4457
    %v4533 = vunpack.c.l.b16 %v4458
    %v4534 = vunpack.c.h.b16 %v4458
    %v4535 = vunpack.c.l.b16 %v4459
    %v4536 = vunpack.c.h.b16 %v4459
    %v4537 = vunpack.c.l.b16 %v4460
    %v4538 = vunpack.c.h.b16 %v4460
    %v4539 = vunpack.c.l.b16 %v4461
    %v4540 = vunpack.c.h.b16 %v4461
    %v4541 = vunpack.c.l.b16 %v4462
    %v4542 = vunpack.c.h.b16 %v4462
    %v4543 = vunpack.c.l.b16 %v4463
    %v4544 = vunpack.c.h.b16 %v4463
    %v4545 = vunpack.c.l.b16 %v4464
    %v4546 = vunpack.c.h.b16 %v4464
    %v4547 = vunpack.c.l.b16 %v4465
    %v4548 = vunpack.c.h.b16 %v4465
    %v4549 = vunpack.c.l.b16 %v4466
    %v4550 = vunpack.c.h.b16 %v4466
    %v4551 = vunpack.c.l.b16 %v4467
    %v4552 = vunpack.c.h.b16 %v4467
    %v4553 = vunpack.c.l.b16 %v4468
    %v4554 = vunpack.c.h.b16 %v4468
    %v4555 = vunpack.c.l.b16 %v4469
    %v4556 = vunpack.c.h.b16 %v4469
    %v4557 = vunpack.c.l.b16 %v4470
    %v4558 = vunpack.c.h.b16 %v4470
    %v4559 = vunpack.c.l.b16 %v4471
    %v4560 = vunpack.c.h.b16 %v4471
    %v4561 = vunpack.c.l.b16 %v4472
    %v4562 = vunpack.c.h.b16 %v4472
    %v4563 = vunpack.c.l.b16 %v4473
    %v4564 = vunpack.c.h.b16 %v4473
    %v4565 = vunpack.c.l.b16 %v4474
    %v4566 = vunpack.c.h.b16 %v4474
    %v4567 = vunpack.c.l.b16 %v4475
    %v4568 = vunpack.c.h.b16 %v4475
    %v4569 = vunpack.c.l.b16 %v4476
    %v4570 = vunpack.c.h.b16 %v4476
    %v4571 = vunpack.c.l.b16 %v4477
    %v4572 = vunpack.c.h.b16 %v4477
    %v4573 = vunpack.c.l.b16 %v4478
    %v4574 = vunpack.c.h.b16 %v4478
    %v4575 = vpack.c.b16 %v4515, %v4511
    %v4576 = vpack.c.b16 %v4516, %v4512
    %v4577 = vpack.c.b16 %v4517, %v4513
    %v4578 = vpack.c.b16 %v4518, %v4514
    %v4579 = vpack.c.b16 %v4523, %v4519
    %v4580 = vpack.c.b16 %v4524, %v4520
    %v4581 = vpack.c.b16 %v4525, %v4521
    %v4582 = vpack.c.b16 %v4526, %v4522
    %v4583 = vpack.c.b16 %v4531, %v4527
    %v4584 = vpack.c.b16 %v4532, %v4528
    %v4585 = vpack.c.b16 %v4533, %v4529
    %v4586 = vpack.c.b16 %v4534, %v4530
    %v4587 = vpack.c.b16 %v4539, %v4535
    %v4588 = vpack.c.b16 %v4540, %v4536
    %v4589 = vpack.c.b16 %v4541, %v4537
    %v4590 = vpack.c.b16 %v4542, %v4538
    %v4591 = vpack.c.b16 %v4547, %v4543
    %v4592 = vpack.c.b16 %v4548, %v4544
    %v4593 = vpack.c.b16 %v4549, %v4545
    %v4594 = vpack.c.b16 %v4550, %v4546
    %v4595 = vpack.c.b16 %v4555, %v4551
    %v4596 = vpack.c.b16 %v4556, %v4552
    %v4597 = vpack.c.b16 %v4557, %v4553
    %v4598 = vpack.c.b16 %v4558, %v4554
    %v4599 = vpack.c.b16 %v4563, %v4559
    %v4600 = vpack.c.b16 %v4564, %v4560
    %v4601 = vpack.c.b16 %v4565, %v4561
    %v4602 = vpack.c.b16 %v4566, %v4562
    %v4603 = vpack.c.b16 %v4571, %v4567
    %v4604 = vpack.c.b16 %v4572, %v4568
    %v4605 = vpack.c.b16 %v4573, %v4569
    %v4606 = vpack.c.b16 %v4574, %v4570
    %4639 = vmatpush.bf16.msra.mxu0 %v4603
    %4640 = vmatpush.bf16.msra.mxu0 %v4599
    %4641 = vmatpush.bf16.msra.mxu0 %v4595
    %4642 = vmatpush.bf16.msra.mxu0 %v4591
    %4643 = vmatpush.bf16.msra.mxu0 %v4587
    %4644 = vmatpush.bf16.msra.mxu0 %v4583
    %4645 = vmatpush.bf16.msra.mxu0 %v4579
    %4646 = vmatpush.bf16.msra.mxu0 %v4575
    %4647 = vmatmul.bf16.gmra.mxu0 %v4446
    %v4648 = vpop.f32.mrf.mxu0
    %v4649 = vadd.f32 0.0, %v4648
    %v4650 = vpop.f32.mrf.mxu0
    %4651 = vdwg.mxu0
    %4652 = vmatpush.bf16.msra.mxu0 %v4604
    %4653 = vmatpush.bf16.msra.mxu0 %v4600
    %4654 = vmatpush.bf16.msra.mxu0 %v4596
    %4655 = vmatpush.bf16.msra.mxu0 %v4592
    %4656 = vmatpush.bf16.msra.mxu0 %v4588
    %4657 = vmatpush.bf16.msra.mxu0 %v4584
    %4658 = vmatpush.bf16.msra.mxu0 %v4580
    %4659 = vmatpush.bf16.msra.mxu0 %v4576
    %4660 = vmatmul.bf16.gmra.mxu0 %v4446
    %v4661 = vpop.f32.mrf.mxu0
    %v4662 = vadd.f32 0.0, %v4661
    %v4663 = vpop.f32.mrf.mxu0
    %4664 = vdwg.mxu0
    %4665 = vmatpush.bf16.msra.mxu0 %v4605
    %4666 = vmatpush.bf16.msra.mxu0 %v4601
    %4667 = vmatpush.bf16.msra.mxu0 %v4597
    %4668 = vmatpush.bf16.msra.mxu0 %v4593
    %4669 = vmatpush.bf16.msra.mxu0 %v4589
    %4670 = vmatpush.bf16.msra.mxu0 %v4585
    %4671 = vmatpush.bf16.msra.mxu0 %v4581
    %4672 = vmatpush.bf16.msra.mxu0 %v4577
    %4673 = vmatmul.bf16.gmra.mxu0 %v4446
    %v4674 = vpop.f32.mrf.mxu0
    %v4675 = vadd.f32 0.0, %v4674
    %v4676 = vpop.f32.mrf.mxu0
    %4677 = vdwg.mxu0
    %4678 = vmatpush.bf16.msra.mxu0 %v4606
    %4679 = vmatpush.bf16.msra.mxu0 %v4602
    %4680 = vmatpush.bf16.msra.mxu0 %v4598
    %4681 = vmatpush.bf16.msra.mxu0 %v4594
    %4682 = vmatpush.bf16.msra.mxu0 %v4590
    %4683 = vmatpush.bf16.msra.mxu0 %v4586
    %4684 = vmatpush.bf16.msra.mxu0 %v4582
    %4685 = vmatpush.bf16.msra.mxu0 %v4578
    %4686 = vmatmul.bf16.gmra.mxu0 %v4446
    %v4687 = vpop.f32.mrf.mxu0
    %v4688 = vadd.f32 0.0, %v4687
    %v4689 = vpop.f32.mrf.mxu0
    %4690 = vdwg.mxu0
    %v4691 = vadd.f32 %v4442, %v4649
    %v4692 = vadd.f32 %v4443, %v4662
    %v4693 = vadd.f32 %v4444, %v4675
    %v4694 = vadd.f32 %v4445, %v4688
    %v4695 = vmul.f32 %v4691, 0.5
    %v4696 = vtanh.pop %v4695
    %v4697 = vmul.f32 %v4696, 0.5
    %v4698 = vadd.f32 %v4697, 0.5
    %v4699 = vmul.f32 %v4692, 0.5
    %v4700 = vtanh.pop %v4699
    %v4701 = vmul.f32 %v4700, 0.5
    %v4702 = vadd.f32 %v4701, 0.5
    %v4703 = vtanh.pop %v4693
    %v4704 = vmul.f32 %v4694, 0.5
    %v4705 = vtanh.pop %v4704
    %v4706 = vmul.f32 %v4705, 0.5
    %v4707 = vadd.f32 %v4706, 0.5
    %v4708 = vmul.f32 %v4702, %v4438
    %v4709 = vmul.f32 %v4698, %v4703
    %v4710 = vadd.f32 %v4708, %v4709
    %v4711 = vtanh.pop %v4710
    %v4712 = vmul.f32 %v4707, %v4711
    %4713 = vst [vmem:[%s2164] sm:$0xff] %v4712
    %v4714 = vld [vmem:[%s2166] sm:$0xff]
    %v4715 = vld [vmem:[%s2166 + $0x8] sm:$0xff]
    %v4716 = vld [vmem:[%s2166 + $0x10] sm:$0xff]
    %v4717 = vld [vmem:[%s2166 + $0x18] sm:$0xff]
    %v4718 = vpack.c.bf16 %v4712, %v4712
    %v4719 = vld [vmem:[#allocation11] sm:$0xff]
    %v4720 = vld [vmem:[#allocation11 + $0x8] sm:$0xff]
    %v4721 = vld [vmem:[#allocation11 + $0x10] sm:$0xff]
    %v4722 = vld [vmem:[#allocation11 + $0x18] sm:$0xff]
    %v4723 = vld [vmem:[#allocation11 + $0x20] sm:$0xff]
    %v4724 = vld [vmem:[#allocation11 + $0x28] sm:$0xff]
    %v4725 = vld [vmem:[#allocation11 + $0x30] sm:$0xff]
    %v4726 = vld [vmem:[#allocation11 + $0x38] sm:$0xff]
    %v4727 = vld [vmem:[#allocation11 + $0x40] sm:$0xff]
    %v4728 = vld [vmem:[#allocation11 + $0x48] sm:$0xff]
    %v4729 = vld [vmem:[#allocation11 + $0x50] sm:$0xff]
    %v4730 = vld [vmem:[#allocation11 + $0x58] sm:$0xff]
    %v4731 = vld [vmem:[#allocation11 + $0x60] sm:$0xff]
    %v4732 = vld [vmem:[#allocation11 + $0x68] sm:$0xff]
    %v4733 = vld [vmem:[#allocation11 + $0x70] sm:$0xff]
    %v4734 = vld [vmem:[#allocation11 + $0x78] sm:$0xff]
    %v4735 = vld [vmem:[#allocation11 + $0x80] sm:$0xff]
    %v4736 = vld [vmem:[#allocation11 + $0x88] sm:$0xff]
    %v4737 = vld [vmem:[#allocation11 + $0x90] sm:$0xff]
    %v4738 = vld [vmem:[#allocation11 + $0x98] sm:$0xff]
    %v4739 = vld [vmem:[#allocation11 + $0xa0] sm:$0xff]
    %v4740 = vld [vmem:[#allocation11 + $0xa8] sm:$0xff]
    %v4741 = vld [vmem:[#allocation11 + $0xb0] sm:$0xff]
    %v4742 = vld [vmem:[#allocation11 + $0xb8] sm:$0xff]
    %v4743 = vld [vmem:[#allocation11 + $0xc0] sm:$0xff]
    %v4744 = vld [vmem:[#allocation11 + $0xc8] sm:$0xff]
    %v4745 = vld [vmem:[#allocation11 + $0xd0] sm:$0xff]
    %v4746 = vld [vmem:[#allocation11 + $0xd8] sm:$0xff]
    %v4747 = vld [vmem:[#allocation11 + $0xe0] sm:$0xff]
    %v4748 = vld [vmem:[#allocation11 + $0xe8] sm:$0xff]
    %v4749 = vld [vmem:[#allocation11 + $0xf0] sm:$0xff]
    %v4750 = vld [vmem:[#allocation11 + $0xf8] sm:$0xff]
    %v4783 = vunpack.c.l.b16 %v4719
    %v4784 = vunpack.c.h.b16 %v4719
    %v4785 = vunpack.c.l.b16 %v4720
    %v4786 = vunpack.c.h.b16 %v4720
    %v4787 = vunpack.c.l.b16 %v4721
    %v4788 = vunpack.c.h.b16 %v4721
    %v4789 = vunpack.c.l.b16 %v4722
    %v4790 = vunpack.c.h.b16 %v4722
    %v4791 = vunpack.c.l.b16 %v4723
    %v4792 = vunpack.c.h.b16 %v4723
    %v4793 = vunpack.c.l.b16 %v4724
    %v4794 = vunpack.c.h.b16 %v4724
    %v4795 = vunpack.c.l.b16 %v4725
    %v4796 = vunpack.c.h.b16 %v4725
    %v4797 = vunpack.c.l.b16 %v4726
    %v4798 = vunpack.c.h.b16 %v4726
    %v4799 = vunpack.c.l.b16 %v4727
    %v4800 = vunpack.c.h.b16 %v4727
    %v4801 = vunpack.c.l.b16 %v4728
    %v4802 = vunpack.c.h.b16 %v4728
    %v4803 = vunpack.c.l.b16 %v4729
    %v4804 = vunpack.c.h.b16 %v4729
    %v4805 = vunpack.c.l.b16 %v4730
    %v4806 = vunpack.c.h.b16 %v4730
    %v4807 = vunpack.c.l.b16 %v4731
    %v4808 = vunpack.c.h.b16 %v4731
    %v4809 = vunpack.c.l.b16 %v4732
    %v4810 = vunpack.c.h.b16 %v4732
    %v4811 = vunpack.c.l.b16 %v4733
    %v4812 = vunpack.c.h.b16 %v4733
    %v4813 = vunpack.c.l.b16 %v4734
    %v4814 = vunpack.c.h.b16 %v4734
    %v4815 = vunpack.c.l.b16 %v4735
    %v4816 = vunpack.c.h.b16 %v4735
    %v4817 = vunpack.c.l.b16 %v4736
    %v4818 = vunpack.c.h.b16 %v4736
    %v4819 = vunpack.c.l.b16 %v4737
    %v4820 = vunpack.c.h.b16 %v4737
    %v4821 = vunpack.c.l.b16 %v4738
    %v4822 = vunpack.c.h.b16 %v4738
    %v4823 = vunpack.c.l.b16 %v4739
    %v4824 = vunpack.c.h.b16 %v4739
    %v4825 = vunpack.c.l.b16 %v4740
    %v4826 = vunpack.c.h.b16 %v4740
    %v4827 = vunpack.c.l.b16 %v4741
    %v4828 = vunpack.c.h.b16 %v4741
    %v4829 = vunpack.c.l.b16 %v4742
    %v4830 = vunpack.c.h.b16 %v4742
    %v4831 = vunpack.c.l.b16 %v4743
    %v4832 = vunpack.c.h.b16 %v4743
    %v4833 = vunpack.c.l.b16 %v4744
    %v4834 = vunpack.c.h.b16 %v4744
    %v4835 = vunpack.c.l.b16 %v4745
    %v4836 = vunpack.c.h.b16 %v4745
    %v4837 = vunpack.c.l.b16 %v4746
    %v4838 = vunpack.c.h.b16 %v4746
    %v4839 = vunpack.c.l.b16 %v4747
    %v4840 = vunpack.c.h.b16 %v4747
    %v4841 = vunpack.c.l.b16 %v4748
    %v4842 = vunpack.c.h.b16 %v4748
    %v4843 = vunpack.c.l.b16 %v4749
    %v4844 = vunpack.c.h.b16 %v4749
    %v4845 = vunpack.c.l.b16 %v4750
    %v4846 = vunpack.c.h.b16 %v4750
    %v4847 = vpack.c.b16 %v4787, %v4783
    %v4848 = vpack.c.b16 %v4788, %v4784
    %v4849 = vpack.c.b16 %v4789, %v4785
    %v4850 = vpack.c.b16 %v4790, %v4786
    %v4851 = vpack.c.b16 %v4795, %v4791
    %v4852 = vpack.c.b16 %v4796, %v4792
    %v4853 = vpack.c.b16 %v4797, %v4793
    %v4854 = vpack.c.b16 %v4798, %v4794
    %v4855 = vpack.c.b16 %v4803, %v4799
    %v4856 = vpack.c.b16 %v4804, %v4800
    %v4857 = vpack.c.b16 %v4805, %v4801
    %v4858 = vpack.c.b16 %v4806, %v4802
    %v4859 = vpack.c.b16 %v4811, %v4807
    %v4860 = vpack.c.b16 %v4812, %v4808
    %v4861 = vpack.c.b16 %v4813, %v4809
    %v4862 = vpack.c.b16 %v4814, %v4810
    %v4863 = vpack.c.b16 %v4819, %v4815
    %v4864 = vpack.c.b16 %v4820, %v4816
    %v4865 = vpack.c.b16 %v4821, %v4817
    %v4866 = vpack.c.b16 %v4822, %v4818
    %v4867 = vpack.c.b16 %v4827, %v4823
    %v4868 = vpack.c.b16 %v4828, %v4824
    %v4869 = vpack.c.b16 %v4829, %v4825
    %v4870 = vpack.c.b16 %v4830, %v4826
    %v4871 = vpack.c.b16 %v4835, %v4831
    %v4872 = vpack.c.b16 %v4836, %v4832
    %v4873 = vpack.c.b16 %v4837, %v4833
    %v4874 = vpack.c.b16 %v4838, %v4834
    %v4875 = vpack.c.b16 %v4843, %v4839
    %v4876 = vpack.c.b16 %v4844, %v4840
    %v4877 = vpack.c.b16 %v4845, %v4841
    %v4878 = vpack.c.b16 %v4846, %v4842
    %4911 = vmatpush.bf16.msra.mxu0 %v4875
    %4912 = vmatpush.bf16.msra.mxu0 %v4871
    %4913 = vmatpush.bf16.msra.mxu0 %v4867
    %4914 = vmatpush.bf16.msra.mxu0 %v4863
    %4915 = vmatpush.bf16.msra.mxu0 %v4859
    %4916 = vmatpush.bf16.msra.mxu0 %v4855
    %4917 = vmatpush.bf16.msra.mxu0 %v4851
    %4918 = vmatpush.bf16.msra.mxu0 %v4847
    %4919 = vmatmul.bf16.gmra.mxu0 %v4718
    %v4920 = vpop.f32.mrf.mxu0
    %v4921 = vadd.f32 0.0, %v4920
    %v4922 = vpop.f32.mrf.mxu0
    %4923 = vdwg.mxu0
    %4924 = vmatpush.bf16.msra.mxu0 %v4876
    %4925 = vmatpush.bf16.msra.mxu0 %v4872
    %4926 = vmatpush.bf16.msra.mxu0 %v4868
    %4927 = vmatpush.bf16.msra.mxu0 %v4864
    %4928 = vmatpush.bf16.msra.mxu0 %v4860
    %4929 = vmatpush.bf16.msra.mxu0 %v4856
    %4930 = vmatpush.bf16.msra.mxu0 %v4852
    %4931 = vmatpush.bf16.msra.mxu0 %v4848
    %4932 = vmatmul.bf16.gmra.mxu0 %v4718
    %v4933 = vpop.f32.mrf.mxu0
    %v4934 = vadd.f32 0.0, %v4933
    %v4935 = vpop.f32.mrf.mxu0
    %4936 = vdwg.mxu0
    %4937 = vmatpush.bf16.msra.mxu0 %v4877
    %4938 = vmatpush.bf16.msra.mxu0 %v4873
    %4939 = vmatpush.bf16.msra.mxu0 %v4869
    %4940 = vmatpush.bf16.msra.mxu0 %v4865
    %4941 = vmatpush.bf16.msra.mxu0 %v4861
    %4942 = vmatpush.bf16.msra.mxu0 %v4857
    %4943 = vmatpush.bf16.msra.mxu0 %v4853
    %4944 = vmatpush.bf16.msra.mxu0 %v4849
    %4945 = vmatmul.bf16.gmra.mxu0 %v4718
    %v4946 = vpop.f32.mrf.mxu0
    %v4947 = vadd.f32 0.0, %v4946
    %v4948 = vpop.f32.mrf.mxu0
    %4949 = vdwg.mxu0
    %4950 = vmatpush.bf16.msra.mxu0 %v4878
    %4951 = vmatpush.bf16.msra.mxu0 %v4874
    %4952 = vmatpush.bf16.msra.mxu0 %v4870
    %4953 = vmatpush.bf16.msra.mxu0 %v4866
    %4954 = vmatpush.bf16.msra.mxu0 %v4862
    %4955 = vmatpush.bf16.msra.mxu0 %v4858
    %4956 = vmatpush.bf16.msra.mxu0 %v4854
    %4957 = vmatpush.bf16.msra.mxu0 %v4850
    %4958 = vmatmul.bf16.gmra.mxu0 %v4718
    %v4959 = vpop.f32.mrf.mxu0
    %v4960 = vadd.f32 0.0, %v4959
    %v4961 = vpop.f32.mrf.mxu0
    %4962 = vdwg.mxu0
    %v4963 = vadd.f32 %v4714, %v4921
    %v4964 = vadd.f32 %v4715, %v4934
    %v4965 = vadd.f32 %v4716, %v4947
    %v4966 = vadd.f32 %v4717, %v4960
    %v4967 = vmul.f32 %v4963, 0.5
    %v4968 = vtanh.pop %v4967
    %v4969 = vmul.f32 %v4968, 0.5
    %v4970 = vadd.f32 %v4969, 0.5
    %v4971 = vmul.f32 %v4964, 0.5
    %v4972 = vtanh.pop %v4971
    %v4973 = vmul.f32 %v4972, 0.5
    %v4974 = vadd.f32 %v4973, 0.5
    %v4975 = vtanh.pop %v4965
    %v4976 = vmul.f32 %v4966, 0.5
    %v4977 = vtanh.pop %v4976
    %v4978 = vmul.f32 %v4977, 0.5
    %v4979 = vadd.f32 %v4978, 0.5
    %v4980 = vmul.f32 %v4974, %v4710
    %v4981 = vmul.f32 %v4970, %v4975
    %v4982 = vadd.f32 %v4980, %v4981
    %v4983 = vtanh.pop %v4982
    %v4984 = vmul.f32 %v4979, %v4983
    %4985 = vst [vmem:[%s2438] sm:$0xff] %v4984
    %v4986 = vld [vmem:[%s2440] sm:$0xff]
    %v4987 = vld [vmem:[%s2440 + $0x8] sm:$0xff]
    %v4988 = vld [vmem:[%s2440 + $0x10] sm:$0xff]
    %v4989 = vld [vmem:[%s2440 + $0x18] sm:$0xff]
    %v4990 = vpack.c.bf16 %v4984, %v4984
    %v4991 = vld [vmem:[#allocation11] sm:$0xff]
    %v4992 = vld [vmem:[#allocation11 + $0x8] sm:$0xff]
    %v4993 = vld [vmem:[#allocation11 + $0x10] sm:$0xff]
    %v4994 = vld [vmem:[#allocation11 + $0x18] sm:$0xff]
    %v4995 = vld [vmem:[#allocation11 + $0x20] sm:$0xff]
    %v4996 = vld [vmem:[#allocation11 + $0x28] sm:$0xff]
    %v4997 = vld [vmem:[#allocation11 + $0x30] sm:$0xff]
    %v4998 = vld [vmem:[#allocation11 + $0x38] sm:$0xff]
    %v4999 = vld [vmem:[#allocation11 + $0x40] sm:$0xff]
    %v5000 = vld [vmem:[#allocation11 + $0x48] sm:$0xff]
    %v5001 = vld [vmem:[#allocation11 + $0x50] sm:$0xff]
    %v5002 = vld [vmem:[#allocation11 + $0x58] sm:$0xff]
    %v5003 = vld [vmem:[#allocation11 + $0x60] sm:$0xff]
    %v5004 = vld [vmem:[#allocation11 + $0x68] sm:$0xff]
    %v5005 = vld [vmem:[#allocation11 + $0x70] sm:$0xff]
    %v5006 = vld [vmem:[#allocation11 + $0x78] sm:$0xff]
    %v5007 = vld [vmem:[#allocation11 + $0x80] sm:$0xff]
    %v5008 = vld [vmem:[#allocation11 + $0x88] sm:$0xff]
    %v5009 = vld [vmem:[#allocation11 + $0x90] sm:$0xff]
    %v5010 = vld [vmem:[#allocation11 + $0x98] sm:$0xff]
    %v5011 = vld [vmem:[#allocation11 + $0xa0] sm:$0xff]
    %v5012 = vld [vmem:[#allocation11 + $0xa8] sm:$0xff]
    %v5013 = vld [vmem:[#allocation11 + $0xb0] sm:$0xff]
    %v5014 = vld [vmem:[#allocation11 + $0xb8] sm:$0xff]
    %v5015 = vld [vmem:[#allocation11 + $0xc0] sm:$0xff]
    %v5016 = vld [vmem:[#allocation11 + $0xc8] sm:$0xff]
    %v5017 = vld [vmem:[#allocation11 + $0xd0] sm:$0xff]
    %v5018 = vld [vmem:[#allocation11 + $0xd8] sm:$0xff]
    %v5019 = vld [vmem:[#allocation11 + $0xe0] sm:$0xff]
    %v5020 = vld [vmem:[#allocation11 + $0xe8] sm:$0xff]
    %v5021 = vld [vmem:[#allocation11 + $0xf0] sm:$0xff]
    %v5022 = vld [vmem:[#allocation11 + $0xf8] sm:$0xff]
    %v5055 = vunpack.c.l.b16 %v4991
    %v5056 = vunpack.c.h.b16 %v4991
    %v5057 = vunpack.c.l.b16 %v4992
    %v5058 = vunpack.c.h.b16 %v4992
    %v5059 = vunpack.c.l.b16 %v4993
    %v5060 = vunpack.c.h.b16 %v4993
    %v5061 = vunpack.c.l.b16 %v4994
    %v5062 = vunpack.c.h.b16 %v4994
    %v5063 = vunpack.c.l.b16 %v4995
    %v5064 = vunpack.c.h.b16 %v4995
    %v5065 = vunpack.c.l.b16 %v4996
    %v5066 = vunpack.c.h.b16 %v4996
    %v5067 = vunpack.c.l.b16 %v4997
    %v5068 = vunpack.c.h.b16 %v4997
    %v5069 = vunpack.c.l.b16 %v4998
    %v5070 = vunpack.c.h.b16 %v4998
    %v5071 = vunpack.c.l.b16 %v4999
    %v5072 = vunpack.c.h.b16 %v4999
    %v5073 = vunpack.c.l.b16 %v5000
    %v5074 = vunpack.c.h.b16 %v5000
    %v5075 = vunpack.c.l.b16 %v5001
    %v5076 = vunpack.c.h.b16 %v5001
    %v5077 = vunpack.c.l.b16 %v5002
    %v5078 = vunpack.c.h.b16 %v5002
    %v5079 = vunpack.c.l.b16 %v5003
    %v5080 = vunpack.c.h.b16 %v5003
    %v5081 = vunpack.c.l.b16 %v5004
    %v5082 = vunpack.c.h.b16 %v5004
    %v5083 = vunpack.c.l.b16 %v5005
    %v5084 = vunpack.c.h.b16 %v5005
    %v5085 = vunpack.c.l.b16 %v5006
    %v5086 = vunpack.c.h.b16 %v5006
    %v5087 = vunpack.c.l.b16 %v5007
    %v5088 = vunpack.c.h.b16 %v5007
    %v5089 = vunpack.c.l.b16 %v5008
    %v5090 = vunpack.c.h.b16 %v5008
    %v5091 = vunpack.c.l.b16 %v5009
    %v5092 = vunpack.c.h.b16 %v5009
    %v5093 = vunpack.c.l.b16 %v5010
    %v5094 = vunpack.c.h.b16 %v5010
    %v5095 = vunpack.c.l.b16 %v5011
    %v5096 = vunpack.c.h.b16 %v5011
    %v5097 = vunpack.c.l.b16 %v5012
    %v5098 = vunpack.c.h.b16 %v5012
    %v5099 = vunpack.c.l.b16 %v5013
    %v5100 = vunpack.c.h.b16 %v5013
    %v5101 = vunpack.c.l.b16 %v5014
    %v5102 = vunpack.c.h.b16 %v5014
    %v5103 = vunpack.c.l.b16 %v5015
    %v5104 = vunpack.c.h.b16 %v5015
    %v5105 = vunpack.c.l.b16 %v5016
    %v5106 = vunpack.c.h.b16 %v5016
    %v5107 = vunpack.c.l.b16 %v5017
    %v5108 = vunpack.c.h.b16 %v5017
    %v5109 = vunpack.c.l.b16 %v5018
    %v5110 = vunpack.c.h.b16 %v5018
    %v5111 = vunpack.c.l.b16 %v5019
    %v5112 = vunpack.c.h.b16 %v5019
    %v5113 = vunpack.c.l.b16 %v5020
    %v5114 = vunpack.c.h.b16 %v5020
    %v5115 = vunpack.c.l.b16 %v5021
    %v5116 = vunpack.c.h.b16 %v5021
    %v5117 = vunpack.c.l.b16 %v5022
    %v5118 = vunpack.c.h.b16 %v5022
    %v5119 = vpack.c.b16 %v5059, %v5055
    %v5120 = vpack.c.b16 %v5060, %v5056
    %v5121 = vpack.c.b16 %v5061, %v5057
    %v5122 = vpack.c.b16 %v5062, %v5058
    %v5123 = vpack.c.b16 %v5067, %v5063
    %v5124 = vpack.c.b16 %v5068, %v5064
    %v5125 = vpack.c.b16 %v5069, %v5065
    %v5126 = vpack.c.b16 %v5070, %v5066
    %v5127 = vpack.c.b16 %v5075, %v5071
    %v5128 = vpack.c.b16 %v5076, %v5072
    %v5129 = vpack.c.b16 %v5077, %v5073
    %v5130 = vpack.c.b16 %v5078, %v5074
    %v5131 = vpack.c.b16 %v5083, %v5079
    %v5132 = vpack.c.b16 %v5084, %v5080
    %v5133 = vpack.c.b16 %v5085, %v5081
    %v5134 = vpack.c.b16 %v5086, %v5082
    %v5135 = vpack.c.b16 %v5091, %v5087
    %v5136 = vpack.c.b16 %v5092, %v5088
    %v5137 = vpack.c.b16 %v5093, %v5089
    %v5138 = vpack.c.b16 %v5094, %v5090
    %v5139 = vpack.c.b16 %v5099, %v5095
    %v5140 = vpack.c.b16 %v5100, %v5096
    %v5141 = vpack.c.b16 %v5101, %v5097
    %v5142 = vpack.c.b16 %v5102, %v5098
    %v5143 = vpack.c.b16 %v5107, %v5103
    %v5144 = vpack.c.b16 %v5108, %v5104
    %v5145 = vpack.c.b16 %v5109, %v5105
    %v5146 = vpack.c.b16 %v5110, %v5106
    %v5147 = vpack.c.b16 %v5115, %v5111
    %v5148 = vpack.c.b16 %v5116, %v5112
    %v5149 = vpack.c.b16 %v5117, %v5113
    %v5150 = vpack.c.b16 %v5118, %v5114
    %5183 = vmatpush.bf16.msra.mxu0 %v5147
    %5184 = vmatpush.bf16.msra.mxu0 %v5143
    %5185 = vmatpush.bf16.msra.mxu0 %v5139
    %5186 = vmatpush.bf16.msra.mxu0 %v5135
    %5187 = vmatpush.bf16.msra.mxu0 %v5131
    %5188 = vmatpush.bf16.msra.mxu0 %v5127
    %5189 = vmatpush.bf16.msra.mxu0 %v5123
    %5190 = vmatpush.bf16.msra.mxu0 %v5119
    %5191 = vmatmul.bf16.gmra.mxu0 %v4990
    %v5192 = vpop.f32.mrf.mxu0
    %v5193 = vadd.f32 0.0, %v5192
    %v5194 = vpop.f32.mrf.mxu0
    %5195 = vdwg.mxu0
    %5196 = vmatpush.bf16.msra.mxu0 %v5148
    %5197 = vmatpush.bf16.msra.mxu0 %v5144
    %5198 = vmatpush.bf16.msra.mxu0 %v5140
    %5199 = vmatpush.bf16.msra.mxu0 %v5136
    %5200 = vmatpush.bf16.msra.mxu0 %v5132
    %5201 = vmatpush.bf16.msra.mxu0 %v5128
    %5202 = vmatpush.bf16.msra.mxu0 %v5124
    %5203 = vmatpush.bf16.msra.mxu0 %v5120
    %5204 = vmatmul.bf16.gmra.mxu0 %v4990
    %v5205 = vpop.f32.mrf.mxu0
    %v5206 = vadd.f32 0.0, %v5205
    %v5207 = vpop.f32.mrf.mxu0
    %5208 = vdwg.mxu0
    %5209 = vmatpush.bf16.msra.mxu0 %v5149
    %5210 = vmatpush.bf16.msra.mxu0 %v5145
    %5211 = vmatpush.bf16.msra.mxu0 %v5141
    %5212 = vmatpush.bf16.msra.mxu0 %v5137
    %5213 = vmatpush.bf16.msra.mxu0 %v5133
    %5214 = vmatpush.bf16.msra.mxu0 %v5129
    %5215 = vmatpush.bf16.msra.mxu0 %v5125
    %5216 = vmatpush.bf16.msra.mxu0 %v5121
    %5217 = vmatmul.bf16.gmra.mxu0 %v4990
    %v5218 = vpop.f32.mrf.mxu0
    %v5219 = vadd.f32 0.0, %v5218
    %v5220 = vpop.f32.mrf.mxu0
    %5221 = vdwg.mxu0
    %5222 = vmatpush.bf16.msra.mxu0 %v5150
    %5223 = vmatpush.bf16.msra.mxu0 %v5146
    %5224 = vmatpush.bf16.msra.mxu0 %v5142
    %5225 = vmatpush.bf16.msra.mxu0 %v5138
    %5226 = vmatpush.bf16.msra.mxu0 %v5134
    %5227 = vmatpush.bf16.msra.mxu0 %v5130
    %5228 = vmatpush.bf16.msra.mxu0 %v5126
    %5229 = vmatpush.bf16.msra.mxu0 %v5122
    %5230 = vmatmul.bf16.gmra.mxu0 %v4990
    %v5231 = vpop.f32.mrf.mxu0
    %v5232 = vadd.f32 0.0, %v5231
    %v5233 = vpop.f32.mrf.mxu0
    %5234 = vdwg.mxu0
    %v5235 = vadd.f32 %v4986, %v5193
    %v5236 = vadd.f32 %v4987, %v5206
    %v5237 = vadd.f32 %v4988, %v5219
    %v5238 = vadd.f32 %v4989, %v5232
    %v5239 = vmul.f32 %v5235, 0.5
    %v5240 = vtanh.pop %v5239
    %v5241 = vmul.f32 %v5240, 0.5
    %v5242 = vadd.f32 %v5241, 0.5
    %v5243 = vmul.f32 %v5236, 0.5
    %v5244 = vtanh.pop %v5243
    %v5245 = vmul.f32 %v5244, 0.5
    %v5246 = vadd.f32 %v5245, 0.5
    %v5247 = vtanh.pop %v5237
    %v5248 = vmul.f32 %v5238, 0.5
    %v5249 = vtanh.pop %v5248
    %v5250 = vmul.f32 %v5249, 0.5
    %v5251 = vadd.f32 %v5250, 0.5
    %v5252 = vmul.f32 %v5246, %v4982
    %v5253 = vmul.f32 %v5242, %v5247
    %v5254 = vadd.f32 %v5252, %v5253
    %v5255 = vtanh.pop %v5254
    %v5256 = vmul.f32 %v5251, %v5255
    %5257 = vst [vmem:[%s2712] sm:$0xff] %v5256
    %s5258 = scalar_lea.vmem [#allocation18], 8
    %5259 = vst [vmem:[%s5258] sm:$0xff] %v5256
    %s5260 = scalar_lea.vmem [#allocation20], 8
    %5261 = vst [vmem:[%s5260] sm:$0xff] %v5254
    // Predicated region
    $region70: #{tpu_custom_call.1} parent=1 // pred_check
      _
    $region71: #{tpu_custom_call.1} parent=1 // pred_check_branch
      %5263 = sbr.rel (0) target = $region73
    $region72: #{tpu_custom_call.1} parent=1 // pred_region
      %5265 = vsyncadd [#allocation5], 0
      %s5266 = sshll.u32 [#allocation17], 4
      %s5267 = int_to_ptr.vmem [resolvable:$true] %s5266
      %s5268 = sshll.u32 %s9, 4
      %s5269 = int_to_ptr.hbm [resolvable:$true] %s5268
      %5274 = dma.vmem_to_hbm [thread:$0]  %s5267, 1024, %s5269, [#allocation5], 128, 128, 8
    $region73: #{tpu_custom_call.1} parent=1 // pred_fallthru
      _
    // Predicated region
    $region74: #{tpu_custom_call.1} parent=1 // pred_check
      _
    $region75: #{tpu_custom_call.1} parent=1 // pred_check_branch
      %5276 = sbr.rel (0) target = $region77
    $region76: #{tpu_custom_call.1} parent=1 // pred_region
      %5278 = vsyncadd [#allocation19], 0
      %s5279 = sshll.u32 [#allocation18], 4
      %s5280 = int_to_ptr.vmem [resolvable:$true] %s5279
      %s5281 = sshll.u32 %s10, 4
      %s5282 = int_to_ptr.hbm [resolvable:$true] %s5281
      %5287 = dma.vmem_to_hbm [thread:$0]  %s5280, 256, %s5282, [#allocation19], 128, 128, 8
    $region77: #{tpu_custom_call.1} parent=1 // pred_fallthru
      _
    // Predicated region
    $region78: #{tpu_custom_call.1} parent=1 // pred_check
      _
    $region79: #{tpu_custom_call.1} parent=1 // pred_check_branch
      %5289 = sbr.rel (0) target = $region81
    $region80: #{tpu_custom_call.1} parent=1 // pred_region
      %5291 = vsyncadd [#allocation19], 0
      %s5292 = sshll.u32 [#allocation20], 4
      %s5293 = int_to_ptr.vmem [resolvable:$true] %s5292
      %s5294 = sshll.u32 %s11, 4
      %s5295 = int_to_ptr.hbm [resolvable:$true] %s5294
      %5300 = dma.vmem_to_hbm [thread:$0]  %s5293, 256, %s5295, [#allocation19], 128, 128, 8
    $region81: #{tpu_custom_call.1} parent=1 // pred_fallthru
      _
    // Predicated region
    $region82: #{tpu_custom_call.1} parent=1 // pred_check
      _
    $region83: #{tpu_custom_call.1} parent=1 // pred_check_branch
      %5302 = sbr.rel (0) target = $region85
    $region84: #{tpu_custom_call.1} parent=1 // pred_region
      %5304 = dma.done [#allocation5], 1024
    $region85: #{tpu_custom_call.1} parent=1 // pred_fallthru
      _
    // Predicated region
    $region86: #{tpu_custom_call.1} parent=1 // pred_check
      _
    $region87: #{tpu_custom_call.1} parent=1 // pred_check_branch
      %5306 = sbr.rel (0) target = $region89
    $region88: #{tpu_custom_call.1} parent=1 // pred_region
      %5308 = dma.done [#allocation19], 256
    $region89: #{tpu_custom_call.1} parent=1 // pred_fallthru
      _
    // Predicated region
    $region90: #{tpu_custom_call.1} parent=1 // pred_check
      _
    $region91: #{tpu_custom_call.1} parent=1 // pred_check_branch
      %5310 = sbr.rel (0) target = $region93
    $region92: #{tpu_custom_call.1} parent=1 // pred_region
      %5312 = dma.done [#allocation19], 256
    $region93: #{tpu_custom_call.1} parent=1 // pred_fallthru
      _
    %5313 = vsyncpa [#allocation4], 1
    %5314 = vsyncpa [#allocation7], 1
    %5315 = vsyncpa [#allocation10], 1
    %5316 = vsyncpa [#allocation13], 1
    %5317 = vsyncpa [#allocation16], 1
    %5318 = vsyncpa [#allocation5], 1
    %5319 = vsyncpa [#allocation19], 1

</llo_original>
